<compile_context>
chip_gen: v5e
topology: v5e:2x2
jax: 0.10.0
libtpu: 0.0.40
codegen_flags: <defaults>
</compile_context>

<pallas_src>
import functools
import math

import jax
import jax.numpy as jnp
from jax.experimental import pallas as pl
from jax.experimental.pallas import tpu as pltpu


# ----------------------------------------------------------------------------
# Kernel
# ----------------------------------------------------------------------------
def _layernorm(y, w, b, eps=1e-5):
    mu = jnp.mean(y, axis=-1, keepdims=True)
    var = jnp.mean((y - mu) ** 2, axis=-1, keepdims=True)
    return (y - mu) * jax.lax.rsqrt(var + eps) * w + b


def fused_encoder_kernel(num_layers, num_heads,
                         x_ref,
                         wqkv_ref, bqkv_ref, wo_ref, bo_ref,
                         w1_ref, b1_ref, w2_ref, b2_ref,
                         ln1w_ref, ln1b_ref, ln2w_ref, ln2b_ref,
                         lnfw_ref, lnfb_ref,
                         o_ref):
    SB, T, D = x_ref.shape
    H = num_heads
    hd = D // H
    scale = 1.0 / math.sqrt(hd)

    # All activations for this sequence block stay in registers/VMEM across every layer.
    x2 = x_ref[...].reshape(SB * T, D)                              # (rows, D) f32

    for l in range(num_layers):
        xb = x2.astype(jnp.bfloat16)

        # --- fused Q|K|V projection: one (rows, D) x (D, 3D) MXU matmul ---------------
        qkv = (jnp.dot(xb, wqkv_ref[l], preferred_element_type=jnp.float32)
               + bqkv_ref[l]).reshape(SB, T, 3 * D)                 # (SB, T, 3D) f32

        # --- per-head attention, batched over all SB sequences of the block -----------
        ctx_heads = []
        for h in range(H):
            qh = qkv[:, :, h * hd:(h + 1) * hd] * scale
            kh = qkv[:, :, D + h * hd:D + (h + 1) * hd]
            vh = qkv[:, :, 2 * D + h * hd:2 * D + (h + 1) * hd]
            s = jnp.einsum('btd,bsd->bts',
                           qh.astype(jnp.bfloat16), kh.astype(jnp.bfloat16),
                           preferred_element_type=jnp.float32)      # (SB, T, T)
            m = jnp.max(s, axis=-1, keepdims=True)
            e = jnp.exp(s - m)
            p = e * pl.reciprocal(jnp.sum(e, axis=-1, keepdims=True), approx=True)
            ctx_heads.append(
                jnp.einsum('bts,bsd->btd',
                           p.astype(jnp.bfloat16), vh.astype(jnp.bfloat16),
                           preferred_element_type=jnp.float32))     # (SB, T, hd)
        ctx = jnp.concatenate(ctx_heads, axis=-1).reshape(SB * T, D)  # (rows, D) f32

        # --- output projection + post-norm residual 1 (f32 statistics) ----------------
        attn = (jnp.dot(ctx.astype(jnp.bfloat16), wo_ref[l],
                        preferred_element_type=jnp.float32) + bo_ref[l])
        h1 = _layernorm(x2 + attn, ln1w_ref[l], ln1b_ref[l])

        # --- feed-forward (relu), bf16 matmuls with f32 accumulation ------------------
        f = jnp.dot(h1.astype(jnp.bfloat16), w1_ref[l],
                    preferred_element_type=jnp.float32) + b1_ref[l]
        f = jnp.maximum(f, 0.0)
        f = jnp.dot(f.astype(jnp.bfloat16), w2_ref[l],
                    preferred_element_type=jnp.float32) + b2_ref[l]

        # --- post-norm residual 2 ------------------------------------------------------
        x2 = _layernorm(h1 + f, ln2w_ref[l], ln2b_ref[l])

    # encoder's final LayerNorm
    o_ref[...] = _layernorm(x2, lnfw_ref[...], lnfb_ref[...]).reshape(SB, T, D)


# ----------------------------------------------------------------------------
# Wrapper
# ----------------------------------------------------------------------------
WEIGHT_KEYS = ["wqkv", "bqkv", "wo", "bo", "w1", "b1", "w2", "b2",
               "ln1w", "ln1b", "ln2w", "ln2b", "lnfw", "lnfb"]


def _const_spec(shape):
    # whole-array block, constant index map (weights shared across the grid)
    return pl.BlockSpec(shape, lambda i, _n=len(shape): (0,) * _n)


def run_fused_encoder(xs, prepared, num_layers, num_heads):
    """xs: (S, T, D) float32; prepared: dict of stacked/pre-transposed weights."""
    S, T, D = xs.shape
    num_blocks = 2 if (S % 2 == 0 and S >= 2) else 1      # 2 blocks -> both v7x TCs busy
    sb = S // num_blocks
    seq_spec = pl.BlockSpec((sb, T, D), lambda i: (i, 0, 0))
    in_specs = [seq_spec] + [_const_spec(prepared[k].shape) for k in WEIGHT_KEYS]

    # advisory cost estimate for XLA scheduling around the custom call
    rows, ffd = S * T, 4 * D
    flops_layer = (2 * rows * D * 3 * D            # fused qkv projection
                   + 4 * S * T * T * D             # scores + PV (all heads)
                   + 2 * rows * D * D              # output projection
                   + 4 * rows * D * ffd)           # FFN
    weight_bytes = sum(int(prepared[k].size) * prepared[k].dtype.itemsize
                       for k in WEIGHT_KEYS)
    cost = pl.CostEstimate(
        flops=int(num_layers * flops_layer),
        transcendentals=int(num_layers * (S * num_heads * T * T + 3 * rows) + rows),
        bytes_accessed=int(2 * xs.size * 4 + weight_bytes))

    return pl.pallas_call(
        functools.partial(fused_encoder_kernel, num_layers, num_heads),
        out_shape=jax.ShapeDtypeStruct((S, T, D), jnp.float32),
        grid=(num_blocks,),
        in_specs=in_specs,
        out_specs=seq_spec,
        compiler_params=pltpu.CompilerParams(dimension_semantics=("parallel",)),
        cost_estimate=cost,
    )(xs, *[prepared[k] for k in WEIGHT_KEYS])


def transformer_layer_forward(x, prepared, num_layers, num_heads=4):
    """x: (batch, channels, nodes, time) -> same shape, matching the PyTorch forward."""
    batch, channels, nodes, time = x.shape
    xs = jnp.transpose(x, (0, 2, 3, 1)).reshape(batch * nodes, time, channels)
    xs = run_fused_encoder(xs.astype(jnp.float32), prepared, num_layers, num_heads)
    out = xs.reshape(batch, nodes, time, channels)
    return jnp.transpose(out, (0, 3, 1, 2))


# ----------------------------------------------------------------------------
# Parameters: torch-layout init + host-side preparation (transpose / concat / stack / bf16)
# ----------------------------------------------------------------------------
def init_params(key, hidden_dim, num_layers=2):
    D = hidden_dim
    ff = 4 * D
    layers = []
    for _ in range(num_layers):
        key, *ks = jax.random.split(key, 6)
        layers.append({
            "in_proj_w": 0.02 * jax.random.normal(ks[0], (3 * D, D), jnp.float32),
            "in_proj_b": jnp.zeros((1, 3 * D), jnp.float32),
            "out_proj_w": 0.02 * jax.random.normal(ks[1], (D, D), jnp.float32),
            "out_proj_b": jnp.zeros((1, D), jnp.float32),
            "lin1_w": 0.02 * jax.random.normal(ks[2], (ff, D), jnp.float32),
            "lin1_b": jnp.zeros((1, ff), jnp.float32),
            "lin2_w": 0.02 * jax.random.normal(ks[3], (D, ff), jnp.float32),
            "lin2_b": jnp.zeros((1, D), jnp.float32),
            "ln1_w": jnp.ones((1, D), jnp.float32),
            "ln1_b": jnp.zeros((1, D), jnp.float32),
            "ln2_w": jnp.ones((1, D), jnp.float32),
            "ln2_b": jnp.zeros((1, D), jnp.float32),
        })
    return {"layers": layers,
            "final_ln_w": jnp.ones((1, D), jnp.float32),
            "final_ln_b": jnp.zeros((1, D), jnp.float32)}


def prepare_params(params, num_heads):
    """One-time host-side layout plumbing: x @ W form, fused qkv weight, bf16 matmul weights."""
    layers = params["layers"]
    D = layers[0]["ln1_w"].shape[-1]
    assert D % num_heads == 0

    def stack(fn):
        return jnp.stack([fn(lp) for lp in layers], axis=0)

    return {
        # torch in_proj_w is (3D, D) with rows [q; k; v]; x @ in_proj_w.T gives [q|k|v] cols
        "wqkv": stack(lambda p: p["in_proj_w"].T).astype(jnp.bfloat16),     # (L, D, 3D)
        "bqkv": stack(lambda p: p["in_proj_b"]),                            # (L, 1, 3D)
        "wo": stack(lambda p: p["out_proj_w"].T).astype(jnp.bfloat16),      # (L, D, D)
        "bo": stack(lambda p: p["out_proj_b"]),                             # (L, 1, D)
        "w1": stack(lambda p: p["lin1_w"].T).astype(jnp.bfloat16),          # (L, D, 4D)
        "b1": stack(lambda p: p["lin1_b"]),                                 # (L, 1, 4D)
        "w2": stack(lambda p: p["lin2_w"].T).astype(jnp.bfloat16),          # (L, 4D, D)
        "b2": stack(lambda p: p["lin2_b"]),                                 # (L, 1, D)
        "ln1w": stack(lambda p: p["ln1_w"]),
        "ln1b": stack(lambda p: p["ln1_b"]),
        "ln2w": stack(lambda p: p["ln2_w"]),
        "ln2b": stack(lambda p: p["ln2_b"]),
        "lnfw": params["final_ln_w"],
        "lnfb": params["final_ln_b"],
    }


# ----------------------------------------------------------------------------
if __name__ == "__main__":
    # small shapes: batch=2, channels=hidden_dim=32 (divisible by 4 heads), nodes=4, time=8
    batch, channels, nodes, time = 2, 32, 4, 8
    num_heads, num_layers = 4, 2

    key = jax.random.PRNGKey(0)
    kx, kp = jax.random.split(key)
    x = jax.random.normal(kx, (batch, channels, nodes, time), jnp.float32)
    params = init_params(kp, hidden_dim=channels, num_layers=num_layers)
    prepared = prepare_params(params, num_heads)

    # TODO(synk): dropout is a no-op in eval mode, so it is intentionally omitted.
    fwd = jax.jit(functools.partial(transformer_layer_forward,
                                    num_layers=num_layers, num_heads=num_heads))
    out = jax.block_until_ready(fwd(x, prepared))
    assert out.shape == (batch, channels, nodes, time)
    print("KERNEL_OK")
</pallas_src>

<mosaic_0001>
module attributes {stable_mosaic.version = 11 : i64} {
  func.func @fused_encoder_kernel(%arg0: i32, %arg1: memref<4x8x32xf32, #tpu.memory_space<vmem>>, %arg2: memref<2x32x96xbf16, #tpu.memory_space<vmem>>, %arg3: memref<2x1x96xf32, #tpu.memory_space<vmem>>, %arg4: memref<2x32x32xbf16, #tpu.memory_space<vmem>>, %arg5: memref<2x1x32xf32, #tpu.memory_space<vmem>>, %arg6: memref<2x32x128xbf16, #tpu.memory_space<vmem>>, %arg7: memref<2x1x128xf32, #tpu.memory_space<vmem>>, %arg8: memref<2x128x32xbf16, #tpu.memory_space<vmem>>, %arg9: memref<2x1x32xf32, #tpu.memory_space<vmem>>, %arg10: memref<2x1x32xf32, #tpu.memory_space<vmem>>, %arg11: memref<2x1x32xf32, #tpu.memory_space<vmem>>, %arg12: memref<2x1x32xf32, #tpu.memory_space<vmem>>, %arg13: memref<2x1x32xf32, #tpu.memory_space<vmem>>, %arg14: memref<1x32xf32, #tpu.memory_space<vmem>>, %arg15: memref<1x32xf32, #tpu.memory_space<vmem>>, %arg16: memref<4x8x32xf32, #tpu.memory_space<vmem>>) attributes {dimension_semantics = [#tpu.dimension_semantics<parallel>], iteration_bounds = array<i64: 2>, scalar_prefetch = 0 : i64, scratch_operands = 0 : i64, tpu.core_type = #tpu.core_type<tc>, window_params = [{transform_indices = @transform_0, window_bounds = array<i64: 4, 8, 32>}, {pipeline_mode = #tpu.pipeline_mode<synchronous>, transform_indices = @transform_1, window_bounds = array<i64: 2, 32, 96>}, {pipeline_mode = #tpu.pipeline_mode<synchronous>, transform_indices = @transform_2, window_bounds = array<i64: 2, 1, 96>}, {pipeline_mode = #tpu.pipeline_mode<synchronous>, transform_indices = @transform_3, window_bounds = array<i64: 2, 32, 32>}, {pipeline_mode = #tpu.pipeline_mode<synchronous>, transform_indices = @transform_4, window_bounds = array<i64: 2, 1, 32>}, {pipeline_mode = #tpu.pipeline_mode<synchronous>, transform_indices = @transform_5, window_bounds = array<i64: 2, 32, 128>}, {pipeline_mode = #tpu.pipeline_mode<synchronous>, transform_indices = @transform_6, window_bounds = array<i64: 2, 1, 128>}, {pipeline_mode = #tpu.pipeline_mode<synchronous>, transform_indices = @transform_7, window_bounds = array<i64: 2, 128, 32>}, {pipeline_mode = #tpu.pipeline_mode<synchronous>, transform_indices = @transform_8, window_bounds = array<i64: 2, 1, 32>}, {pipeline_mode = #tpu.pipeline_mode<synchronous>, transform_indices = @transform_9, window_bounds = array<i64: 2, 1, 32>}, {pipeline_mode = #tpu.pipeline_mode<synchronous>, transform_indices = @transform_10, window_bounds = array<i64: 2, 1, 32>}, {pipeline_mode = #tpu.pipeline_mode<synchronous>, transform_indices = @transform_11, window_bounds = array<i64: 2, 1, 32>}, {pipeline_mode = #tpu.pipeline_mode<synchronous>, transform_indices = @transform_12, window_bounds = array<i64: 2, 1, 32>}, {pipeline_mode = #tpu.pipeline_mode<synchronous>, transform_indices = @transform_13, window_bounds = array<i64: 1, 32>}, {pipeline_mode = #tpu.pipeline_mode<synchronous>, transform_indices = @transform_14, window_bounds = array<i64: 1, 32>}, {transform_indices = @transform_15, window_bounds = array<i64: 4, 8, 32>}]} {
    %c0 = arith.constant 0 : index
    %c0_0 = arith.constant 0 : index
    %c0_1 = arith.constant 0 : index
    %0 = vector.load %arg1[%c0, %c0_0, %c0_1] : memref<4x8x32xf32, #tpu.memory_space<vmem>>, vector<4x8x32xf32>
    %1 = vector.shape_cast %0 : vector<4x8x32xf32> to vector<32x32xf32>
    %2 = arith.truncf %1 : vector<32x32xf32> to vector<32x32xbf16>
    %c0_2 = arith.constant 0 : index
    %c0_3 = arith.constant 0 : index
    %c0_4 = arith.constant 0 : index
    %3 = vector.load %arg2[%c0_2, %c0_3, %c0_4] : memref<2x32x96xbf16, #tpu.memory_space<vmem>>, vector<1x32x96xbf16>
    %4 = vector.shape_cast %3 : vector<1x32x96xbf16> to vector<32x96xbf16>
    %cst = arith.constant dense<0.000000e+00> : vector<32x96xf32>
    %5 = tpu.matmul %2, %4, %cst {dimension_numbers = #tpu.dot_dimension_numbers<[1], [0], [0], [1], [0, 0, 1, 1], [], []>} : vector<32x32xbf16>, vector<32x96xbf16>, vector<32x96xf32> -> vector<32x96xf32>
    %c0_5 = arith.constant 0 : index
    %c0_6 = arith.constant 0 : index
    %c0_7 = arith.constant 0 : index
    %6 = vector.load %arg3[%c0_5, %c0_6, %c0_7] : memref<2x1x96xf32, #tpu.memory_space<vmem>>, vector<1x1x96xf32>
    %7 = vector.shape_cast %6 : vector<1x1x96xf32> to vector<1x96xf32>
    %8 = vector.broadcast %7 : vector<1x96xf32> to vector<32x96xf32>
    %9 = arith.addf %5, %8 : vector<32x96xf32>
    %10 = vector.shape_cast %9 : vector<32x96xf32> to vector<4x8x96xf32>
    %11 = vector.extract_strided_slice %10 {offsets = [0, 0, 0], sizes = [4, 8, 8], strides = [1, 1, 1]} : vector<4x8x96xf32> to vector<4x8x8xf32>
    %cst_8 = arith.constant 0.353553385 : f32
    %12 = vector.broadcast %cst_8 : f32 to vector<4x8x8xf32>
    %13 = arith.mulf %11, %12 : vector<4x8x8xf32>
    %14 = vector.extract_strided_slice %10 {offsets = [0, 0, 32], sizes = [4, 8, 8], strides = [1, 1, 1]} : vector<4x8x96xf32> to vector<4x8x8xf32>
    %15 = vector.extract_strided_slice %10 {offsets = [0, 0, 64], sizes = [4, 8, 8], strides = [1, 1, 1]} : vector<4x8x96xf32> to vector<4x8x8xf32>
    %16 = arith.truncf %13 : vector<4x8x8xf32> to vector<4x8x8xbf16>
    %17 = arith.truncf %14 : vector<4x8x8xf32> to vector<4x8x8xbf16>
    "tpu.trace_start"() <{level = 10 : i32, message = "btd,bsd->bts"}> : () -> ()
    %cst_9 = arith.constant dense<0.000000e+00> : vector<4x8x8xf32>
    %18 = tpu.matmul %16, %17, %cst_9 {dimension_numbers = #tpu.dot_dimension_numbers<[2], [2], [1], [1], [0, 0, 0, 1, 1, 1], [0], [0]>} : vector<4x8x8xbf16>, vector<4x8x8xbf16>, vector<4x8x8xf32> -> vector<4x8x8xf32>
    "tpu.trace_stop"() : () -> ()
    %cst_10 = arith.constant dense<0xFF800000> : vector<4x8xf32>
    %19 = vector.multi_reduction <maximumf>, %18, %cst_10 [2] : vector<4x8x8xf32> to vector<4x8xf32>
    %20 = vector.shape_cast %19 : vector<4x8xf32> to vector<4x8x1xf32>
    %21 = vector.broadcast %20 : vector<4x8x1xf32> to vector<4x8x8xf32>
    %22 = arith.subf %18, %21 : vector<4x8x8xf32>
    %23 = math.exp %22 : vector<4x8x8xf32>
    %cst_11 = arith.constant dense<0.000000e+00> : vector<4x8xf32>
    %24 = vector.multi_reduction <add>, %23, %cst_11 [2] : vector<4x8x8xf32> to vector<4x8xf32>
    %25 = vector.shape_cast %24 : vector<4x8xf32> to vector<4x8x1xf32>
    %26 = tpu.reciprocal %25 {approx = true} : vector<4x8x1xf32> -> vector<4x8x1xf32>
    %27 = vector.broadcast %26 : vector<4x8x1xf32> to vector<4x8x8xf32>
    %28 = arith.mulf %23, %27 : vector<4x8x8xf32>
    %29 = arith.truncf %28 : vector<4x8x8xf32> to vector<4x8x8xbf16>
    %30 = arith.truncf %15 : vector<4x8x8xf32> to vector<4x8x8xbf16>
    "tpu.trace_start"() <{level = 10 : i32, message = "bts,bsd->btd"}> : () -> ()
    %cst_12 = arith.constant dense<0.000000e+00> : vector<4x8x8xf32>
    %31 = tpu.matmul %29, %30, %cst_12 {dimension_numbers = #tpu.dot_dimension_numbers<[2], [1], [1], [2], [0, 0, 0, 1, 1, 2], [0], [0]>} : vector<4x8x8xbf16>, vector<4x8x8xbf16>, vector<4x8x8xf32> -> vector<4x8x8xf32>
    "tpu.trace_stop"() : () -> ()
    %32 = vector.extract_strided_slice %10 {offsets = [0, 0, 8], sizes = [4, 8, 8], strides = [1, 1, 1]} : vector<4x8x96xf32> to vector<4x8x8xf32>
    %cst_13 = arith.constant 0.353553385 : f32
    %33 = vector.broadcast %cst_13 : f32 to vector<4x8x8xf32>
    %34 = arith.mulf %32, %33 : vector<4x8x8xf32>
    %35 = vector.extract_strided_slice %10 {offsets = [0, 0, 40], sizes = [4, 8, 8], strides = [1, 1, 1]} : vector<4x8x96xf32> to vector<4x8x8xf32>
    %36 = vector.extract_strided_slice %10 {offsets = [0, 0, 72], sizes = [4, 8, 8], strides = [1, 1, 1]} : vector<4x8x96xf32> to vector<4x8x8xf32>
    %37 = arith.truncf %34 : vector<4x8x8xf32> to vector<4x8x8xbf16>
    %38 = arith.truncf %35 : vector<4x8x8xf32> to vector<4x8x8xbf16>
    "tpu.trace_start"() <{level = 10 : i32, message = "btd,bsd->bts"}> : () -> ()
    %cst_14 = arith.constant dense<0.000000e+00> : vector<4x8x8xf32>
    %39 = tpu.matmul %37, %38, %cst_14 {dimension_numbers = #tpu.dot_dimension_numbers<[2], [2], [1], [1], [0, 0, 0, 1, 1, 1], [0], [0]>} : vector<4x8x8xbf16>, vector<4x8x8xbf16>, vector<4x8x8xf32> -> vector<4x8x8xf32>
    "tpu.trace_stop"() : () -> ()
    %cst_15 = arith.constant dense<0xFF800000> : vector<4x8xf32>
    %40 = vector.multi_reduction <maximumf>, %39, %cst_15 [2] : vector<4x8x8xf32> to vector<4x8xf32>
    %41 = vector.shape_cast %40 : vector<4x8xf32> to vector<4x8x1xf32>
    %42 = vector.broadcast %41 : vector<4x8x1xf32> to vector<4x8x8xf32>
    %43 = arith.subf %39, %42 : vector<4x8x8xf32>
    %44 = math.exp %43 : vector<4x8x8xf32>
    %cst_16 = arith.constant dense<0.000000e+00> : vector<4x8xf32>
    %45 = vector.multi_reduction <add>, %44, %cst_16 [2] : vector<4x8x8xf32> to vector<4x8xf32>
    %46 = vector.shape_cast %45 : vector<4x8xf32> to vector<4x8x1xf32>
    %47 = tpu.reciprocal %46 {approx = true} : vector<4x8x1xf32> -> vector<4x8x1xf32>
    %48 = vector.broadcast %47 : vector<4x8x1xf32> to vector<4x8x8xf32>
    %49 = arith.mulf %44, %48 : vector<4x8x8xf32>
    %50 = arith.truncf %49 : vector<4x8x8xf32> to vector<4x8x8xbf16>
    %51 = arith.truncf %36 : vector<4x8x8xf32> to vector<4x8x8xbf16>
    "tpu.trace_start"() <{level = 10 : i32, message = "bts,bsd->btd"}> : () -> ()
    %cst_17 = arith.constant dense<0.000000e+00> : vector<4x8x8xf32>
    %52 = tpu.matmul %50, %51, %cst_17 {dimension_numbers = #tpu.dot_dimension_numbers<[2], [1], [1], [2], [0, 0, 0, 1, 1, 2], [0], [0]>} : vector<4x8x8xbf16>, vector<4x8x8xbf16>, vector<4x8x8xf32> -> vector<4x8x8xf32>
    "tpu.trace_stop"() : () -> ()
    %53 = vector.extract_strided_slice %10 {offsets = [0, 0, 16], sizes = [4, 8, 8], strides = [1, 1, 1]} : vector<4x8x96xf32> to vector<4x8x8xf32>
    %cst_18 = arith.constant 0.353553385 : f32
    %54 = vector.broadcast %cst_18 : f32 to vector<4x8x8xf32>
    %55 = arith.mulf %53, %54 : vector<4x8x8xf32>
    %56 = vector.extract_strided_slice %10 {offsets = [0, 0, 48], sizes = [4, 8, 8], strides = [1, 1, 1]} : vector<4x8x96xf32> to vector<4x8x8xf32>
    %57 = vector.extract_strided_slice %10 {offsets = [0, 0, 80], sizes = [4, 8, 8], strides = [1, 1, 1]} : vector<4x8x96xf32> to vector<4x8x8xf32>
    %58 = arith.truncf %55 : vector<4x8x8xf32> to vector<4x8x8xbf16>
    %59 = arith.truncf %56 : vector<4x8x8xf32> to vector<4x8x8xbf16>
    "tpu.trace_start"() <{level = 10 : i32, message = "btd,bsd->bts"}> : () -> ()
    %cst_19 = arith.constant dense<0.000000e+00> : vector<4x8x8xf32>
    %60 = tpu.matmul %58, %59, %cst_19 {dimension_numbers = #tpu.dot_dimension_numbers<[2], [2], [1], [1], [0, 0, 0, 1, 1, 1], [0], [0]>} : vector<4x8x8xbf16>, vector<4x8x8xbf16>, vector<4x8x8xf32> -> vector<4x8x8xf32>
    "tpu.trace_stop"() : () -> ()
    %cst_20 = arith.constant dense<0xFF800000> : vector<4x8xf32>
    %61 = vector.multi_reduction <maximumf>, %60, %cst_20 [2] : vector<4x8x8xf32> to vector<4x8xf32>
    %62 = vector.shape_cast %61 : vector<4x8xf32> to vector<4x8x1xf32>
    %63 = vector.broadcast %62 : vector<4x8x1xf32> to vector<4x8x8xf32>
    %64 = arith.subf %60, %63 : vector<4x8x8xf32>
    %65 = math.exp %64 : vector<4x8x8xf32>
    %cst_21 = arith.constant dense<0.000000e+00> : vector<4x8xf32>
    %66 = vector.multi_reduction <add>, %65, %cst_21 [2] : vector<4x8x8xf32> to vector<4x8xf32>
    %67 = vector.shape_cast %66 : vector<4x8xf32> to vector<4x8x1xf32>
    %68 = tpu.reciprocal %67 {approx = true} : vector<4x8x1xf32> -> vector<4x8x1xf32>
    %69 = vector.broadcast %68 : vector<4x8x1xf32> to vector<4x8x8xf32>
    %70 = arith.mulf %65, %69 : vector<4x8x8xf32>
    %71 = arith.truncf %70 : vector<4x8x8xf32> to vector<4x8x8xbf16>
    %72 = arith.truncf %57 : vector<4x8x8xf32> to vector<4x8x8xbf16>
    "tpu.trace_start"() <{level = 10 : i32, message = "bts,bsd->btd"}> : () -> ()
    %cst_22 = arith.constant dense<0.000000e+00> : vector<4x8x8xf32>
    %73 = tpu.matmul %71, %72, %cst_22 {dimension_numbers = #tpu.dot_dimension_numbers<[2], [1], [1], [2], [0, 0, 0, 1, 1, 2], [0], [0]>} : vector<4x8x8xbf16>, vector<4x8x8xbf16>, vector<4x8x8xf32> -> vector<4x8x8xf32>
    "tpu.trace_stop"() : () -> ()
    %74 = vector.extract_strided_slice %10 {offsets = [0, 0, 24], sizes = [4, 8, 8], strides = [1, 1, 1]} : vector<4x8x96xf32> to vector<4x8x8xf32>
    %cst_23 = arith.constant 0.353553385 : f32
    %75 = vector.broadcast %cst_23 : f32 to vector<4x8x8xf32>
    %76 = arith.mulf %74, %75 : vector<4x8x8xf32>
    %77 = vector.extract_strided_slice %10 {offsets = [0, 0, 56], sizes = [4, 8, 8], strides = [1, 1, 1]} : vector<4x8x96xf32> to vector<4x8x8xf32>
    %78 = vector.extract_strided_slice %10 {offsets = [0, 0, 88], sizes = [4, 8, 8], strides = [1, 1, 1]} : vector<4x8x96xf32> to vector<4x8x8xf32>
    %79 = arith.truncf %76 : vector<4x8x8xf32> to vector<4x8x8xbf16>
    %80 = arith.truncf %77 : vector<4x8x8xf32> to vector<4x8x8xbf16>
    "tpu.trace_start"() <{level = 10 : i32, message = "btd,bsd->bts"}> : () -> ()
    %cst_24 = arith.constant dense<0.000000e+00> : vector<4x8x8xf32>
    %81 = tpu.matmul %79, %80, %cst_24 {dimension_numbers = #tpu.dot_dimension_numbers<[2], [2], [1], [1], [0, 0, 0, 1, 1, 1], [0], [0]>} : vector<4x8x8xbf16>, vector<4x8x8xbf16>, vector<4x8x8xf32> -> vector<4x8x8xf32>
    "tpu.trace_stop"() : () -> ()
    %cst_25 = arith.constant dense<0xFF800000> : vector<4x8xf32>
    %82 = vector.multi_reduction <maximumf>, %81, %cst_25 [2] : vector<4x8x8xf32> to vector<4x8xf32>
    %83 = vector.shape_cast %82 : vector<4x8xf32> to vector<4x8x1xf32>
    %84 = vector.broadcast %83 : vector<4x8x1xf32> to vector<4x8x8xf32>
    %85 = arith.subf %81, %84 : vector<4x8x8xf32>
    %86 = math.exp %85 : vector<4x8x8xf32>
    %cst_26 = arith.constant dense<0.000000e+00> : vector<4x8xf32>
    %87 = vector.multi_reduction <add>, %86, %cst_26 [2] : vector<4x8x8xf32> to vector<4x8xf32>
    %88 = vector.shape_cast %87 : vector<4x8xf32> to vector<4x8x1xf32>
    %89 = tpu.reciprocal %88 {approx = true} : vector<4x8x1xf32> -> vector<4x8x1xf32>
    %90 = vector.broadcast %89 : vector<4x8x1xf32> to vector<4x8x8xf32>
    %91 = arith.mulf %86, %90 : vector<4x8x8xf32>
    %92 = arith.truncf %91 : vector<4x8x8xf32> to vector<4x8x8xbf16>
    %93 = arith.truncf %78 : vector<4x8x8xf32> to vector<4x8x8xbf16>
    "tpu.trace_start"() <{level = 10 : i32, message = "bts,bsd->btd"}> : () -> ()
    %cst_27 = arith.constant dense<0.000000e+00> : vector<4x8x8xf32>
    %94 = tpu.matmul %92, %93, %cst_27 {dimension_numbers = #tpu.dot_dimension_numbers<[2], [1], [1], [2], [0, 0, 0, 1, 1, 2], [0], [0]>} : vector<4x8x8xbf16>, vector<4x8x8xbf16>, vector<4x8x8xf32> -> vector<4x8x8xf32>
    "tpu.trace_stop"() : () -> ()
    %95 = tpu.concatenate %31, %52, %73, %94 in 2 : vector<4x8x8xf32>, vector<4x8x8xf32>, vector<4x8x8xf32>, vector<4x8x8xf32> -> vector<4x8x32xf32>
    %96 = vector.shape_cast %95 : vector<4x8x32xf32> to vector<32x32xf32>
    %97 = arith.truncf %96 : vector<32x32xf32> to vector<32x32xbf16>
    %c0_28 = arith.constant 0 : index
    %c0_29 = arith.constant 0 : index
    %c0_30 = arith.constant 0 : index
    %98 = vector.load %arg4[%c0_28, %c0_29, %c0_30] : memref<2x32x32xbf16, #tpu.memory_space<vmem>>, vector<1x32x32xbf16>
    %99 = vector.shape_cast %98 : vector<1x32x32xbf16> to vector<32x32xbf16>
    %cst_31 = arith.constant dense<0.000000e+00> : vector<32x32xf32>
    %100 = tpu.matmul %97, %99, %cst_31 {dimension_numbers = #tpu.dot_dimension_numbers<[1], [0], [0], [1], [0, 0, 1, 1], [], []>} : vector<32x32xbf16>, vector<32x32xbf16>, vector<32x32xf32> -> vector<32x32xf32>
    %c0_32 = arith.constant 0 : index
    %c0_33 = arith.constant 0 : index
    %c0_34 = arith.constant 0 : index
    %101 = vector.load %arg5[%c0_32, %c0_33, %c0_34] : memref<2x1x32xf32, #tpu.memory_space<vmem>>, vector<1x1x32xf32>
    %102 = vector.shape_cast %101 : vector<1x1x32xf32> to vector<1x32xf32>
    %103 = vector.broadcast %102 : vector<1x32xf32> to vector<32x32xf32>
    %104 = arith.addf %100, %103 : vector<32x32xf32>
    %105 = arith.addf %1, %104 : vector<32x32xf32>
    %c0_35 = arith.constant 0 : index
    %c0_36 = arith.constant 0 : index
    %c0_37 = arith.constant 0 : index
    %106 = vector.load %arg10[%c0_35, %c0_36, %c0_37] : memref<2x1x32xf32, #tpu.memory_space<vmem>>, vector<1x1x32xf32>
    %107 = vector.shape_cast %106 : vector<1x1x32xf32> to vector<1x32xf32>
    %c0_38 = arith.constant 0 : index
    %c0_39 = arith.constant 0 : index
    %c0_40 = arith.constant 0 : index
    %108 = vector.load %arg11[%c0_38, %c0_39, %c0_40] : memref<2x1x32xf32, #tpu.memory_space<vmem>>, vector<1x1x32xf32>
    %109 = vector.shape_cast %108 : vector<1x1x32xf32> to vector<1x32xf32>
    %cst_41 = arith.constant dense<0.000000e+00> : vector<32xf32>
    %110 = vector.multi_reduction <add>, %105, %cst_41 [1] : vector<32x32xf32> to vector<32xf32>
    %111 = vector.shape_cast %110 : vector<32xf32> to vector<32x1xf32>
    %cst_42 = arith.constant 3.200000e+01 : f32
    %112 = vector.broadcast %cst_42 : f32 to vector<32x1xf32>
    %113 = arith.divf %111, %112 : vector<32x1xf32>
    %114 = vector.broadcast %113 : vector<32x1xf32> to vector<32x32xf32>
    %115 = arith.subf %105, %114 : vector<32x32xf32>
    %116 = arith.mulf %115, %115 : vector<32x32xf32>
    %cst_43 = arith.constant dense<0.000000e+00> : vector<32xf32>
    %117 = vector.multi_reduction <add>, %116, %cst_43 [1] : vector<32x32xf32> to vector<32xf32>
    %118 = vector.shape_cast %117 : vector<32xf32> to vector<32x1xf32>
    %cst_44 = arith.constant 3.200000e+01 : f32
    %119 = vector.broadcast %cst_44 : f32 to vector<32x1xf32>
    %120 = arith.divf %118, %119 : vector<32x1xf32>
    %121 = vector.broadcast %113 : vector<32x1xf32> to vector<32x32xf32>
    %122 = arith.subf %105, %121 : vector<32x32xf32>
    %cst_45 = arith.constant 9.99999974E-6 : f32
    %123 = vector.broadcast %cst_45 : f32 to vector<32x1xf32>
    %124 = arith.addf %120, %123 : vector<32x1xf32>
    %125 = math.rsqrt %124 : vector<32x1xf32>
    %126 = vector.broadcast %125 : vector<32x1xf32> to vector<32x32xf32>
    %127 = arith.mulf %122, %126 : vector<32x32xf32>
    %128 = vector.broadcast %107 : vector<1x32xf32> to vector<32x32xf32>
    %129 = arith.mulf %127, %128 : vector<32x32xf32>
    %130 = vector.broadcast %109 : vector<1x32xf32> to vector<32x32xf32>
    %131 = arith.addf %129, %130 : vector<32x32xf32>
    %132 = arith.truncf %131 : vector<32x32xf32> to vector<32x32xbf16>
    %c0_46 = arith.constant 0 : index
    %c0_47 = arith.constant 0 : index
    %c0_48 = arith.constant 0 : index
    %133 = vector.load %arg6[%c0_46, %c0_47, %c0_48] : memref<2x32x128xbf16, #tpu.memory_space<vmem>>, vector<1x32x128xbf16>
    %134 = vector.shape_cast %133 : vector<1x32x128xbf16> to vector<32x128xbf16>
    %cst_49 = arith.constant dense<0.000000e+00> : vector<32x128xf32>
    %135 = tpu.matmul %132, %134, %cst_49 {dimension_numbers = #tpu.dot_dimension_numbers<[1], [0], [0], [1], [0, 0, 1, 1], [], []>} : vector<32x32xbf16>, vector<32x128xbf16>, vector<32x128xf32> -> vector<32x128xf32>
    %c0_50 = arith.constant 0 : index
    %c0_51 = arith.constant 0 : index
    %c0_52 = arith.constant 0 : index
    %136 = vector.load %arg7[%c0_50, %c0_51, %c0_52] : memref<2x1x128xf32, #tpu.memory_space<vmem>>, vector<1x1x128xf32>
    %137 = vector.shape_cast %136 : vector<1x1x128xf32> to vector<1x128xf32>
    %138 = vector.broadcast %137 : vector<1x128xf32> to vector<32x128xf32>
    %139 = arith.addf %135, %138 : vector<32x128xf32>
    %cst_53 = arith.constant 0.000000e+00 : f32
    %140 = vector.broadcast %cst_53 : f32 to vector<32x128xf32>
    %141 = arith.maximumf %139, %140 : vector<32x128xf32>
    %142 = arith.truncf %141 : vector<32x128xf32> to vector<32x128xbf16>
    %c0_54 = arith.constant 0 : index
    %c0_55 = arith.constant 0 : index
    %c0_56 = arith.constant 0 : index
    %143 = vector.load %arg8[%c0_54, %c0_55, %c0_56] : memref<2x128x32xbf16, #tpu.memory_space<vmem>>, vector<1x128x32xbf16>
    %144 = vector.shape_cast %143 : vector<1x128x32xbf16> to vector<128x32xbf16>
    %cst_57 = arith.constant dense<0.000000e+00> : vector<32x32xf32>
    %145 = tpu.matmul %142, %144, %cst_57 {dimension_numbers = #tpu.dot_dimension_numbers<[1], [0], [0], [1], [0, 0, 1, 1], [], []>} : vector<32x128xbf16>, vector<128x32xbf16>, vector<32x32xf32> -> vector<32x32xf32>
    %c0_58 = arith.constant 0 : index
    %c0_59 = arith.constant 0 : index
    %c0_60 = arith.constant 0 : index
    %146 = vector.load %arg9[%c0_58, %c0_59, %c0_60] : memref<2x1x32xf32, #tpu.memory_space<vmem>>, vector<1x1x32xf32>
    %147 = vector.shape_cast %146 : vector<1x1x32xf32> to vector<1x32xf32>
    %148 = vector.broadcast %147 : vector<1x32xf32> to vector<32x32xf32>
    %149 = arith.addf %145, %148 : vector<32x32xf32>
    %150 = arith.addf %131, %149 : vector<32x32xf32>
    %c0_61 = arith.constant 0 : index
    %c0_62 = arith.constant 0 : index
    %c0_63 = arith.constant 0 : index
    %151 = vector.load %arg12[%c0_61, %c0_62, %c0_63] : memref<2x1x32xf32, #tpu.memory_space<vmem>>, vector<1x1x32xf32>
    %152 = vector.shape_cast %151 : vector<1x1x32xf32> to vector<1x32xf32>
    %c0_64 = arith.constant 0 : index
    %c0_65 = arith.constant 0 : index
    %c0_66 = arith.constant 0 : index
    %153 = vector.load %arg13[%c0_64, %c0_65, %c0_66] : memref<2x1x32xf32, #tpu.memory_space<vmem>>, vector<1x1x32xf32>
    %154 = vector.shape_cast %153 : vector<1x1x32xf32> to vector<1x32xf32>
    %cst_67 = arith.constant dense<0.000000e+00> : vector<32xf32>
    %155 = vector.multi_reduction <add>, %150, %cst_67 [1] : vector<32x32xf32> to vector<32xf32>
    %156 = vector.shape_cast %155 : vector<32xf32> to vector<32x1xf32>
    %cst_68 = arith.constant 3.200000e+01 : f32
    %157 = vector.broadcast %cst_68 : f32 to vector<32x1xf32>
    %158 = arith.divf %156, %157 : vector<32x1xf32>
    %159 = vector.broadcast %158 : vector<32x1xf32> to vector<32x32xf32>
    %160 = arith.subf %150, %159 : vector<32x32xf32>
    %161 = arith.mulf %160, %160 : vector<32x32xf32>
    %cst_69 = arith.constant dense<0.000000e+00> : vector<32xf32>
    %162 = vector.multi_reduction <add>, %161, %cst_69 [1] : vector<32x32xf32> to vector<32xf32>
    %163 = vector.shape_cast %162 : vector<32xf32> to vector<32x1xf32>
    %cst_70 = arith.constant 3.200000e+01 : f32
    %164 = vector.broadcast %cst_70 : f32 to vector<32x1xf32>
    %165 = arith.divf %163, %164 : vector<32x1xf32>
    %166 = vector.broadcast %158 : vector<32x1xf32> to vector<32x32xf32>
    %167 = arith.subf %150, %166 : vector<32x32xf32>
    %cst_71 = arith.constant 9.99999974E-6 : f32
    %168 = vector.broadcast %cst_71 : f32 to vector<32x1xf32>
    %169 = arith.addf %165, %168 : vector<32x1xf32>
    %170 = math.rsqrt %169 : vector<32x1xf32>
    %171 = vector.broadcast %170 : vector<32x1xf32> to vector<32x32xf32>
    %172 = arith.mulf %167, %171 : vector<32x32xf32>
    %173 = vector.broadcast %152 : vector<1x32xf32> to vector<32x32xf32>
    %174 = arith.mulf %172, %173 : vector<32x32xf32>
    %175 = vector.broadcast %154 : vector<1x32xf32> to vector<32x32xf32>
    %176 = arith.addf %174, %175 : vector<32x32xf32>
    %177 = arith.truncf %176 : vector<32x32xf32> to vector<32x32xbf16>
    %c1 = arith.constant 1 : index
    %c0_72 = arith.constant 0 : index
    %c0_73 = arith.constant 0 : index
    %178 = vector.load %arg2[%c1, %c0_72, %c0_73] : memref<2x32x96xbf16, #tpu.memory_space<vmem>>, vector<1x32x96xbf16>
    %179 = vector.shape_cast %178 : vector<1x32x96xbf16> to vector<32x96xbf16>
    %cst_74 = arith.constant dense<0.000000e+00> : vector<32x96xf32>
    %180 = tpu.matmul %177, %179, %cst_74 {dimension_numbers = #tpu.dot_dimension_numbers<[1], [0], [0], [1], [0, 0, 1, 1], [], []>} : vector<32x32xbf16>, vector<32x96xbf16>, vector<32x96xf32> -> vector<32x96xf32>
    %c1_75 = arith.constant 1 : index
    %c0_76 = arith.constant 0 : index
    %c0_77 = arith.constant 0 : index
    %181 = vector.load %arg3[%c1_75, %c0_76, %c0_77] : memref<2x1x96xf32, #tpu.memory_space<vmem>>, vector<1x1x96xf32>
    %182 = vector.shape_cast %181 : vector<1x1x96xf32> to vector<1x96xf32>
    %183 = vector.broadcast %182 : vector<1x96xf32> to vector<32x96xf32>
    %184 = arith.addf %180, %183 : vector<32x96xf32>
    %185 = vector.shape_cast %184 : vector<32x96xf32> to vector<4x8x96xf32>
    %186 = vector.extract_strided_slice %185 {offsets = [0, 0, 0], sizes = [4, 8, 8], strides = [1, 1, 1]} : vector<4x8x96xf32> to vector<4x8x8xf32>
    %cst_78 = arith.constant 0.353553385 : f32
    %187 = vector.broadcast %cst_78 : f32 to vector<4x8x8xf32>
    %188 = arith.mulf %186, %187 : vector<4x8x8xf32>
    %189 = vector.extract_strided_slice %185 {offsets = [0, 0, 32], sizes = [4, 8, 8], strides = [1, 1, 1]} : vector<4x8x96xf32> to vector<4x8x8xf32>
    %190 = vector.extract_strided_slice %185 {offsets = [0, 0, 64], sizes = [4, 8, 8], strides = [1, 1, 1]} : vector<4x8x96xf32> to vector<4x8x8xf32>
    %191 = arith.truncf %188 : vector<4x8x8xf32> to vector<4x8x8xbf16>
    %192 = arith.truncf %189 : vector<4x8x8xf32> to vector<4x8x8xbf16>
    "tpu.trace_start"() <{level = 10 : i32, message = "btd,bsd->bts"}> : () -> ()
    %cst_79 = arith.constant dense<0.000000e+00> : vector<4x8x8xf32>
    %193 = tpu.matmul %191, %192, %cst_79 {dimension_numbers = #tpu.dot_dimension_numbers<[2], [2], [1], [1], [0, 0, 0, 1, 1, 1], [0], [0]>} : vector<4x8x8xbf16>, vector<4x8x8xbf16>, vector<4x8x8xf32> -> vector<4x8x8xf32>
    "tpu.trace_stop"() : () -> ()
    %cst_80 = arith.constant dense<0xFF800000> : vector<4x8xf32>
    %194 = vector.multi_reduction <maximumf>, %193, %cst_80 [2] : vector<4x8x8xf32> to vector<4x8xf32>
    %195 = vector.shape_cast %194 : vector<4x8xf32> to vector<4x8x1xf32>
    %196 = vector.broadcast %195 : vector<4x8x1xf32> to vector<4x8x8xf32>
    %197 = arith.subf %193, %196 : vector<4x8x8xf32>
    %198 = math.exp %197 : vector<4x8x8xf32>
    %cst_81 = arith.constant dense<0.000000e+00> : vector<4x8xf32>
    %199 = vector.multi_reduction <add>, %198, %cst_81 [2] : vector<4x8x8xf32> to vector<4x8xf32>
    %200 = vector.shape_cast %199 : vector<4x8xf32> to vector<4x8x1xf32>
    %201 = tpu.reciprocal %200 {approx = true} : vector<4x8x1xf32> -> vector<4x8x1xf32>
    %202 = vector.broadcast %201 : vector<4x8x1xf32> to vector<4x8x8xf32>
    %203 = arith.mulf %198, %202 : vector<4x8x8xf32>
    %204 = arith.truncf %203 : vector<4x8x8xf32> to vector<4x8x8xbf16>
    %205 = arith.truncf %190 : vector<4x8x8xf32> to vector<4x8x8xbf16>
    "tpu.trace_start"() <{level = 10 : i32, message = "bts,bsd->btd"}> : () -> ()
    %cst_82 = arith.constant dense<0.000000e+00> : vector<4x8x8xf32>
    %206 = tpu.matmul %204, %205, %cst_82 {dimension_numbers = #tpu.dot_dimension_numbers<[2], [1], [1], [2], [0, 0, 0, 1, 1, 2], [0], [0]>} : vector<4x8x8xbf16>, vector<4x8x8xbf16>, vector<4x8x8xf32> -> vector<4x8x8xf32>
    "tpu.trace_stop"() : () -> ()
    %207 = vector.extract_strided_slice %185 {offsets = [0, 0, 8], sizes = [4, 8, 8], strides = [1, 1, 1]} : vector<4x8x96xf32> to vector<4x8x8xf32>
    %cst_83 = arith.constant 0.353553385 : f32
    %208 = vector.broadcast %cst_83 : f32 to vector<4x8x8xf32>
    %209 = arith.mulf %207, %208 : vector<4x8x8xf32>
    %210 = vector.extract_strided_slice %185 {offsets = [0, 0, 40], sizes = [4, 8, 8], strides = [1, 1, 1]} : vector<4x8x96xf32> to vector<4x8x8xf32>
    %211 = vector.extract_strided_slice %185 {offsets = [0, 0, 72], sizes = [4, 8, 8], strides = [1, 1, 1]} : vector<4x8x96xf32> to vector<4x8x8xf32>
    %212 = arith.truncf %209 : vector<4x8x8xf32> to vector<4x8x8xbf16>
    %213 = arith.truncf %210 : vector<4x8x8xf32> to vector<4x8x8xbf16>
    "tpu.trace_start"() <{level = 10 : i32, message = "btd,bsd->bts"}> : () -> ()
    %cst_84 = arith.constant dense<0.000000e+00> : vector<4x8x8xf32>
    %214 = tpu.matmul %212, %213, %cst_84 {dimension_numbers = #tpu.dot_dimension_numbers<[2], [2], [1], [1], [0, 0, 0, 1, 1, 1], [0], [0]>} : vector<4x8x8xbf16>, vector<4x8x8xbf16>, vector<4x8x8xf32> -> vector<4x8x8xf32>
    "tpu.trace_stop"() : () -> ()
    %cst_85 = arith.constant dense<0xFF800000> : vector<4x8xf32>
    %215 = vector.multi_reduction <maximumf>, %214, %cst_85 [2] : vector<4x8x8xf32> to vector<4x8xf32>
    %216 = vector.shape_cast %215 : vector<4x8xf32> to vector<4x8x1xf32>
    %217 = vector.broadcast %216 : vector<4x8x1xf32> to vector<4x8x8xf32>
    %218 = arith.subf %214, %217 : vector<4x8x8xf32>
    %219 = math.exp %218 : vector<4x8x8xf32>
    %cst_86 = arith.constant dense<0.000000e+00> : vector<4x8xf32>
    %220 = vector.multi_reduction <add>, %219, %cst_86 [2] : vector<4x8x8xf32> to vector<4x8xf32>
    %221 = vector.shape_cast %220 : vector<4x8xf32> to vector<4x8x1xf32>
    %222 = tpu.reciprocal %221 {approx = true} : vector<4x8x1xf32> -> vector<4x8x1xf32>
    %223 = vector.broadcast %222 : vector<4x8x1xf32> to vector<4x8x8xf32>
    %224 = arith.mulf %219, %223 : vector<4x8x8xf32>
    %225 = arith.truncf %224 : vector<4x8x8xf32> to vector<4x8x8xbf16>
    %226 = arith.truncf %211 : vector<4x8x8xf32> to vector<4x8x8xbf16>
    "tpu.trace_start"() <{level = 10 : i32, message = "bts,bsd->btd"}> : () -> ()
    %cst_87 = arith.constant dense<0.000000e+00> : vector<4x8x8xf32>
    %227 = tpu.matmul %225, %226, %cst_87 {dimension_numbers = #tpu.dot_dimension_numbers<[2], [1], [1], [2], [0, 0, 0, 1, 1, 2], [0], [0]>} : vector<4x8x8xbf16>, vector<4x8x8xbf16>, vector<4x8x8xf32> -> vector<4x8x8xf32>
    "tpu.trace_stop"() : () -> ()
    %228 = vector.extract_strided_slice %185 {offsets = [0, 0, 16], sizes = [4, 8, 8], strides = [1, 1, 1]} : vector<4x8x96xf32> to vector<4x8x8xf32>
    %cst_88 = arith.constant 0.353553385 : f32
    %229 = vector.broadcast %cst_88 : f32 to vector<4x8x8xf32>
    %230 = arith.mulf %228, %229 : vector<4x8x8xf32>
    %231 = vector.extract_strided_slice %185 {offsets = [0, 0, 48], sizes = [4, 8, 8], strides = [1, 1, 1]} : vector<4x8x96xf32> to vector<4x8x8xf32>
    %232 = vector.extract_strided_slice %185 {offsets = [0, 0, 80], sizes = [4, 8, 8], strides = [1, 1, 1]} : vector<4x8x96xf32> to vector<4x8x8xf32>
    %233 = arith.truncf %230 : vector<4x8x8xf32> to vector<4x8x8xbf16>
    %234 = arith.truncf %231 : vector<4x8x8xf32> to vector<4x8x8xbf16>
    "tpu.trace_start"() <{level = 10 : i32, message = "btd,bsd->bts"}> : () -> ()
    %cst_89 = arith.constant dense<0.000000e+00> : vector<4x8x8xf32>
    %235 = tpu.matmul %233, %234, %cst_89 {dimension_numbers = #tpu.dot_dimension_numbers<[2], [2], [1], [1], [0, 0, 0, 1, 1, 1], [0], [0]>} : vector<4x8x8xbf16>, vector<4x8x8xbf16>, vector<4x8x8xf32> -> vector<4x8x8xf32>
    "tpu.trace_stop"() : () -> ()
    %cst_90 = arith.constant dense<0xFF800000> : vector<4x8xf32>
    %236 = vector.multi_reduction <maximumf>, %235, %cst_90 [2] : vector<4x8x8xf32> to vector<4x8xf32>
    %237 = vector.shape_cast %236 : vector<4x8xf32> to vector<4x8x1xf32>
    %238 = vector.broadcast %237 : vector<4x8x1xf32> to vector<4x8x8xf32>
    %239 = arith.subf %235, %238 : vector<4x8x8xf32>
    %240 = math.exp %239 : vector<4x8x8xf32>
    %cst_91 = arith.constant dense<0.000000e+00> : vector<4x8xf32>
    %241 = vector.multi_reduction <add>, %240, %cst_91 [2] : vector<4x8x8xf32> to vector<4x8xf32>
    %242 = vector.shape_cast %241 : vector<4x8xf32> to vector<4x8x1xf32>
    %243 = tpu.reciprocal %242 {approx = true} : vector<4x8x1xf32> -> vector<4x8x1xf32>
    %244 = vector.broadcast %243 : vector<4x8x1xf32> to vector<4x8x8xf32>
    %245 = arith.mulf %240, %244 : vector<4x8x8xf32>
    %246 = arith.truncf %245 : vector<4x8x8xf32> to vector<4x8x8xbf16>
    %247 = arith.truncf %232 : vector<4x8x8xf32> to vector<4x8x8xbf16>
    "tpu.trace_start"() <{level = 10 : i32, message = "bts,bsd->btd"}> : () -> ()
    %cst_92 = arith.constant dense<0.000000e+00> : vector<4x8x8xf32>
    %248 = tpu.matmul %246, %247, %cst_92 {dimension_numbers = #tpu.dot_dimension_numbers<[2], [1], [1], [2], [0, 0, 0, 1, 1, 2], [0], [0]>} : vector<4x8x8xbf16>, vector<4x8x8xbf16>, vector<4x8x8xf32> -> vector<4x8x8xf32>
    "tpu.trace_stop"() : () -> ()
    %249 = vector.extract_strided_slice %185 {offsets = [0, 0, 24], sizes = [4, 8, 8], strides = [1, 1, 1]} : vector<4x8x96xf32> to vector<4x8x8xf32>
    %cst_93 = arith.constant 0.353553385 : f32
    %250 = vector.broadcast %cst_93 : f32 to vector<4x8x8xf32>
    %251 = arith.mulf %249, %250 : vector<4x8x8xf32>
    %252 = vector.extract_strided_slice %185 {offsets = [0, 0, 56], sizes = [4, 8, 8], strides = [1, 1, 1]} : vector<4x8x96xf32> to vector<4x8x8xf32>
    %253 = vector.extract_strided_slice %185 {offsets = [0, 0, 88], sizes = [4, 8, 8], strides = [1, 1, 1]} : vector<4x8x96xf32> to vector<4x8x8xf32>
    %254 = arith.truncf %251 : vector<4x8x8xf32> to vector<4x8x8xbf16>
    %255 = arith.truncf %252 : vector<4x8x8xf32> to vector<4x8x8xbf16>
    "tpu.trace_start"() <{level = 10 : i32, message = "btd,bsd->bts"}> : () -> ()
    %cst_94 = arith.constant dense<0.000000e+00> : vector<4x8x8xf32>
    %256 = tpu.matmul %254, %255, %cst_94 {dimension_numbers = #tpu.dot_dimension_numbers<[2], [2], [1], [1], [0, 0, 0, 1, 1, 1], [0], [0]>} : vector<4x8x8xbf16>, vector<4x8x8xbf16>, vector<4x8x8xf32> -> vector<4x8x8xf32>
    "tpu.trace_stop"() : () -> ()
    %cst_95 = arith.constant dense<0xFF800000> : vector<4x8xf32>
    %257 = vector.multi_reduction <maximumf>, %256, %cst_95 [2] : vector<4x8x8xf32> to vector<4x8xf32>
    %258 = vector.shape_cast %257 : vector<4x8xf32> to vector<4x8x1xf32>
    %259 = vector.broadcast %258 : vector<4x8x1xf32> to vector<4x8x8xf32>
    %260 = arith.subf %256, %259 : vector<4x8x8xf32>
    %261 = math.exp %260 : vector<4x8x8xf32>
    %cst_96 = arith.constant dense<0.000000e+00> : vector<4x8xf32>
    %262 = vector.multi_reduction <add>, %261, %cst_96 [2] : vector<4x8x8xf32> to vector<4x8xf32>
    %263 = vector.shape_cast %262 : vector<4x8xf32> to vector<4x8x1xf32>
    %264 = tpu.reciprocal %263 {approx = true} : vector<4x8x1xf32> -> vector<4x8x1xf32>
    %265 = vector.broadcast %264 : vector<4x8x1xf32> to vector<4x8x8xf32>
    %266 = arith.mulf %261, %265 : vector<4x8x8xf32>
    %267 = arith.truncf %266 : vector<4x8x8xf32> to vector<4x8x8xbf16>
    %268 = arith.truncf %253 : vector<4x8x8xf32> to vector<4x8x8xbf16>
    "tpu.trace_start"() <{level = 10 : i32, message = "bts,bsd->btd"}> : () -> ()
    %cst_97 = arith.constant dense<0.000000e+00> : vector<4x8x8xf32>
    %269 = tpu.matmul %267, %268, %cst_97 {dimension_numbers = #tpu.dot_dimension_numbers<[2], [1], [1], [2], [0, 0, 0, 1, 1, 2], [0], [0]>} : vector<4x8x8xbf16>, vector<4x8x8xbf16>, vector<4x8x8xf32> -> vector<4x8x8xf32>
    "tpu.trace_stop"() : () -> ()
    %270 = tpu.concatenate %206, %227, %248, %269 in 2 : vector<4x8x8xf32>, vector<4x8x8xf32>, vector<4x8x8xf32>, vector<4x8x8xf32> -> vector<4x8x32xf32>
    %271 = vector.shape_cast %270 : vector<4x8x32xf32> to vector<32x32xf32>
    %272 = arith.truncf %271 : vector<32x32xf32> to vector<32x32xbf16>
    %c1_98 = arith.constant 1 : index
    %c0_99 = arith.constant 0 : index
    %c0_100 = arith.constant 0 : index
    %273 = vector.load %arg4[%c1_98, %c0_99, %c0_100] : memref<2x32x32xbf16, #tpu.memory_space<vmem>>, vector<1x32x32xbf16>
    %274 = vector.shape_cast %273 : vector<1x32x32xbf16> to vector<32x32xbf16>
    %cst_101 = arith.constant dense<0.000000e+00> : vector<32x32xf32>
    %275 = tpu.matmul %272, %274, %cst_101 {dimension_numbers = #tpu.dot_dimension_numbers<[1], [0], [0], [1], [0, 0, 1, 1], [], []>} : vector<32x32xbf16>, vector<32x32xbf16>, vector<32x32xf32> -> vector<32x32xf32>
    %c1_102 = arith.constant 1 : index
    %c0_103 = arith.constant 0 : index
    %c0_104 = arith.constant 0 : index
    %276 = vector.load %arg5[%c1_102, %c0_103, %c0_104] : memref<2x1x32xf32, #tpu.memory_space<vmem>>, vector<1x1x32xf32>
    %277 = vector.shape_cast %276 : vector<1x1x32xf32> to vector<1x32xf32>
    %278 = vector.broadcast %277 : vector<1x32xf32> to vector<32x32xf32>
    %279 = arith.addf %275, %278 : vector<32x32xf32>
    %280 = arith.addf %176, %279 : vector<32x32xf32>
    %c1_105 = arith.constant 1 : index
    %c0_106 = arith.constant 0 : index
    %c0_107 = arith.constant 0 : index
    %281 = vector.load %arg10[%c1_105, %c0_106, %c0_107] : memref<2x1x32xf32, #tpu.memory_space<vmem>>, vector<1x1x32xf32>
    %282 = vector.shape_cast %281 : vector<1x1x32xf32> to vector<1x32xf32>
    %c1_108 = arith.constant 1 : index
    %c0_109 = arith.constant 0 : index
    %c0_110 = arith.constant 0 : index
    %283 = vector.load %arg11[%c1_108, %c0_109, %c0_110] : memref<2x1x32xf32, #tpu.memory_space<vmem>>, vector<1x1x32xf32>
    %284 = vector.shape_cast %283 : vector<1x1x32xf32> to vector<1x32xf32>
    %cst_111 = arith.constant dense<0.000000e+00> : vector<32xf32>
    %285 = vector.multi_reduction <add>, %280, %cst_111 [1] : vector<32x32xf32> to vector<32xf32>
    %286 = vector.shape_cast %285 : vector<32xf32> to vector<32x1xf32>
    %cst_112 = arith.constant 3.200000e+01 : f32
    %287 = vector.broadcast %cst_112 : f32 to vector<32x1xf32>
    %288 = arith.divf %286, %287 : vector<32x1xf32>
    %289 = vector.broadcast %288 : vector<32x1xf32> to vector<32x32xf32>
    %290 = arith.subf %280, %289 : vector<32x32xf32>
    %291 = arith.mulf %290, %290 : vector<32x32xf32>
    %cst_113 = arith.constant dense<0.000000e+00> : vector<32xf32>
    %292 = vector.multi_reduction <add>, %291, %cst_113 [1] : vector<32x32xf32> to vector<32xf32>
    %293 = vector.shape_cast %292 : vector<32xf32> to vector<32x1xf32>
    %cst_114 = arith.constant 3.200000e+01 : f32
    %294 = vector.broadcast %cst_114 : f32 to vector<32x1xf32>
    %295 = arith.divf %293, %294 : vector<32x1xf32>
    %296 = vector.broadcast %288 : vector<32x1xf32> to vector<32x32xf32>
    %297 = arith.subf %280, %296 : vector<32x32xf32>
    %cst_115 = arith.constant 9.99999974E-6 : f32
    %298 = vector.broadcast %cst_115 : f32 to vector<32x1xf32>
    %299 = arith.addf %295, %298 : vector<32x1xf32>
    %300 = math.rsqrt %299 : vector<32x1xf32>
    %301 = vector.broadcast %300 : vector<32x1xf32> to vector<32x32xf32>
    %302 = arith.mulf %297, %301 : vector<32x32xf32>
    %303 = vector.broadcast %282 : vector<1x32xf32> to vector<32x32xf32>
    %304 = arith.mulf %302, %303 : vector<32x32xf32>
    %305 = vector.broadcast %284 : vector<1x32xf32> to vector<32x32xf32>
    %306 = arith.addf %304, %305 : vector<32x32xf32>
    %307 = arith.truncf %306 : vector<32x32xf32> to vector<32x32xbf16>
    %c1_116 = arith.constant 1 : index
    %c0_117 = arith.constant 0 : index
    %c0_118 = arith.constant 0 : index
    %308 = vector.load %arg6[%c1_116, %c0_117, %c0_118] : memref<2x32x128xbf16, #tpu.memory_space<vmem>>, vector<1x32x128xbf16>
    %309 = vector.shape_cast %308 : vector<1x32x128xbf16> to vector<32x128xbf16>
    %cst_119 = arith.constant dense<0.000000e+00> : vector<32x128xf32>
    %310 = tpu.matmul %307, %309, %cst_119 {dimension_numbers = #tpu.dot_dimension_numbers<[1], [0], [0], [1], [0, 0, 1, 1], [], []>} : vector<32x32xbf16>, vector<32x128xbf16>, vector<32x128xf32> -> vector<32x128xf32>
    %c1_120 = arith.constant 1 : index
    %c0_121 = arith.constant 0 : index
    %c0_122 = arith.constant 0 : index
    %311 = vector.load %arg7[%c1_120, %c0_121, %c0_122] : memref<2x1x128xf32, #tpu.memory_space<vmem>>, vector<1x1x128xf32>
    %312 = vector.shape_cast %311 : vector<1x1x128xf32> to vector<1x128xf32>
    %313 = vector.broadcast %312 : vector<1x128xf32> to vector<32x128xf32>
    %314 = arith.addf %310, %313 : vector<32x128xf32>
    %cst_123 = arith.constant 0.000000e+00 : f32
    %315 = vector.broadcast %cst_123 : f32 to vector<32x128xf32>
    %316 = arith.maximumf %314, %315 : vector<32x128xf32>
    %317 = arith.truncf %316 : vector<32x128xf32> to vector<32x128xbf16>
    %c1_124 = arith.constant 1 : index
    %c0_125 = arith.constant 0 : index
    %c0_126 = arith.constant 0 : index
    %318 = vector.load %arg8[%c1_124, %c0_125, %c0_126] : memref<2x128x32xbf16, #tpu.memory_space<vmem>>, vector<1x128x32xbf16>
    %319 = vector.shape_cast %318 : vector<1x128x32xbf16> to vector<128x32xbf16>
    %cst_127 = arith.constant dense<0.000000e+00> : vector<32x32xf32>
    %320 = tpu.matmul %317, %319, %cst_127 {dimension_numbers = #tpu.dot_dimension_numbers<[1], [0], [0], [1], [0, 0, 1, 1], [], []>} : vector<32x128xbf16>, vector<128x32xbf16>, vector<32x32xf32> -> vector<32x32xf32>
    %c1_128 = arith.constant 1 : index
    %c0_129 = arith.constant 0 : index
    %c0_130 = arith.constant 0 : index
    %321 = vector.load %arg9[%c1_128, %c0_129, %c0_130] : memref<2x1x32xf32, #tpu.memory_space<vmem>>, vector<1x1x32xf32>
    %322 = vector.shape_cast %321 : vector<1x1x32xf32> to vector<1x32xf32>
    %323 = vector.broadcast %322 : vector<1x32xf32> to vector<32x32xf32>
    %324 = arith.addf %320, %323 : vector<32x32xf32>
    %325 = arith.addf %306, %324 : vector<32x32xf32>
    %c1_131 = arith.constant 1 : index
    %c0_132 = arith.constant 0 : index
    %c0_133 = arith.constant 0 : index
    %326 = vector.load %arg12[%c1_131, %c0_132, %c0_133] : memref<2x1x32xf32, #tpu.memory_space<vmem>>, vector<1x1x32xf32>
    %327 = vector.shape_cast %326 : vector<1x1x32xf32> to vector<1x32xf32>
    %c1_134 = arith.constant 1 : index
    %c0_135 = arith.constant 0 : index
    %c0_136 = arith.constant 0 : index
    %328 = vector.load %arg13[%c1_134, %c0_135, %c0_136] : memref<2x1x32xf32, #tpu.memory_space<vmem>>, vector<1x1x32xf32>
    %329 = vector.shape_cast %328 : vector<1x1x32xf32> to vector<1x32xf32>
    %cst_137 = arith.constant dense<0.000000e+00> : vector<32xf32>
    %330 = vector.multi_reduction <add>, %325, %cst_137 [1] : vector<32x32xf32> to vector<32xf32>
    %331 = vector.shape_cast %330 : vector<32xf32> to vector<32x1xf32>
    %cst_138 = arith.constant 3.200000e+01 : f32
    %332 = vector.broadcast %cst_138 : f32 to vector<32x1xf32>
    %333 = arith.divf %331, %332 : vector<32x1xf32>
    %334 = vector.broadcast %333 : vector<32x1xf32> to vector<32x32xf32>
    %335 = arith.subf %325, %334 : vector<32x32xf32>
    %336 = arith.mulf %335, %335 : vector<32x32xf32>
    %cst_139 = arith.constant dense<0.000000e+00> : vector<32xf32>
    %337 = vector.multi_reduction <add>, %336, %cst_139 [1] : vector<32x32xf32> to vector<32xf32>
    %338 = vector.shape_cast %337 : vector<32xf32> to vector<32x1xf32>
    %cst_140 = arith.constant 3.200000e+01 : f32
    %339 = vector.broadcast %cst_140 : f32 to vector<32x1xf32>
    %340 = arith.divf %338, %339 : vector<32x1xf32>
    %341 = vector.broadcast %333 : vector<32x1xf32> to vector<32x32xf32>
    %342 = arith.subf %325, %341 : vector<32x32xf32>
    %cst_141 = arith.constant 9.99999974E-6 : f32
    %343 = vector.broadcast %cst_141 : f32 to vector<32x1xf32>
    %344 = arith.addf %340, %343 : vector<32x1xf32>
    %345 = math.rsqrt %344 : vector<32x1xf32>
    %346 = vector.broadcast %345 : vector<32x1xf32> to vector<32x32xf32>
    %347 = arith.mulf %342, %346 : vector<32x32xf32>
    %348 = vector.broadcast %327 : vector<1x32xf32> to vector<32x32xf32>
    %349 = arith.mulf %347, %348 : vector<32x32xf32>
    %350 = vector.broadcast %329 : vector<1x32xf32> to vector<32x32xf32>
    %351 = arith.addf %349, %350 : vector<32x32xf32>
    %c0_142 = arith.constant 0 : index
    %c0_143 = arith.constant 0 : index
    %352 = vector.load %arg14[%c0_142, %c0_143] : memref<1x32xf32, #tpu.memory_space<vmem>>, vector<1x32xf32>
    %c0_144 = arith.constant 0 : index
    %c0_145 = arith.constant 0 : index
    %353 = vector.load %arg15[%c0_144, %c0_145] : memref<1x32xf32, #tpu.memory_space<vmem>>, vector<1x32xf32>
    %cst_146 = arith.constant dense<0.000000e+00> : vector<32xf32>
    %354 = vector.multi_reduction <add>, %351, %cst_146 [1] : vector<32x32xf32> to vector<32xf32>
    %355 = vector.shape_cast %354 : vector<32xf32> to vector<32x1xf32>
    %cst_147 = arith.constant 3.200000e+01 : f32
    %356 = vector.broadcast %cst_147 : f32 to vector<32x1xf32>
    %357 = arith.divf %355, %356 : vector<32x1xf32>
    %358 = vector.broadcast %357 : vector<32x1xf32> to vector<32x32xf32>
    %359 = arith.subf %351, %358 : vector<32x32xf32>
    %360 = arith.mulf %359, %359 : vector<32x32xf32>
    %cst_148 = arith.constant dense<0.000000e+00> : vector<32xf32>
    %361 = vector.multi_reduction <add>, %360, %cst_148 [1] : vector<32x32xf32> to vector<32xf32>
    %362 = vector.shape_cast %361 : vector<32xf32> to vector<32x1xf32>
    %cst_149 = arith.constant 3.200000e+01 : f32
    %363 = vector.broadcast %cst_149 : f32 to vector<32x1xf32>
    %364 = arith.divf %362, %363 : vector<32x1xf32>
    %365 = vector.broadcast %357 : vector<32x1xf32> to vector<32x32xf32>
    %366 = arith.subf %351, %365 : vector<32x32xf32>
    %cst_150 = arith.constant 9.99999974E-6 : f32
    %367 = vector.broadcast %cst_150 : f32 to vector<32x1xf32>
    %368 = arith.addf %364, %367 : vector<32x1xf32>
    %369 = math.rsqrt %368 : vector<32x1xf32>
    %370 = vector.broadcast %369 : vector<32x1xf32> to vector<32x32xf32>
    %371 = arith.mulf %366, %370 : vector<32x32xf32>
    %372 = vector.broadcast %352 : vector<1x32xf32> to vector<32x32xf32>
    %373 = arith.mulf %371, %372 : vector<32x32xf32>
    %374 = vector.broadcast %353 : vector<1x32xf32> to vector<32x32xf32>
    %375 = arith.addf %373, %374 : vector<32x32xf32>
    %376 = vector.shape_cast %375 : vector<32x32xf32> to vector<4x8x32xf32>
    %c0_151 = arith.constant 0 : index
    %c0_152 = arith.constant 0 : index
    %c0_153 = arith.constant 0 : index
    %377 = vector.load %arg16[%c0_151, %c0_152, %c0_153] : memref<4x8x32xf32, #tpu.memory_space<vmem>>, vector<4x8x32xf32>
    tpu.vector_store %arg16[%c0_151, %c0_152, %c0_153], %376 {strides = array<i32>} : memref<4x8x32xf32, #tpu.memory_space<vmem>>, vector<4x8x32xf32>,
    return
  }
  func.func @transform_0(%arg0: i32) -> (i32, i32, i32) {
    %c0_i32 = arith.constant 0 : i32
    %c0_i32_0 = arith.constant 0 : i32
    %c0_i32_1 = arith.constant 0 : i32
    return %arg0, %c0_i32, %c0_i32_0 : i32, i32, i32
  }
  func.func @transform_1(%arg0: i32) -> (i32, i32, i32) {
    %c0_i32 = arith.constant 0 : i32
    %c0_i32_0 = arith.constant 0 : i32
    %c0_i32_1 = arith.constant 0 : i32
    %c0_i32_2 = arith.constant 0 : i32
    return %c0_i32, %c0_i32_0, %c0_i32_1 : i32, i32, i32
  }
  func.func @transform_2(%arg0: i32) -> (i32, i32, i32) {
    %c0_i32 = arith.constant 0 : i32
    %c0_i32_0 = arith.constant 0 : i32
    %c0_i32_1 = arith.constant 0 : i32
    %c0_i32_2 = arith.constant 0 : i32
    return %c0_i32, %c0_i32_0, %c0_i32_1 : i32, i32, i32
  }
  func.func @transform_3(%arg0: i32) -> (i32, i32, i32) {
    %c0_i32 = arith.constant 0 : i32
    %c0_i32_0 = arith.constant 0 : i32
    %c0_i32_1 = arith.constant 0 : i32
    %c0_i32_2 = arith.constant 0 : i32
    return %c0_i32, %c0_i32_0, %c0_i32_1 : i32, i32, i32
  }
  func.func @transform_4(%arg0: i32) -> (i32, i32, i32) {
    %c0_i32 = arith.constant 0 : i32
    %c0_i32_0 = arith.constant 0 : i32
    %c0_i32_1 = arith.constant 0 : i32
    %c0_i32_2 = arith.constant 0 : i32
    return %c0_i32, %c0_i32_0, %c0_i32_1 : i32, i32, i32
  }
  func.func @transform_5(%arg0: i32) -> (i32, i32, i32) {
    %c0_i32 = arith.constant 0 : i32
    %c0_i32_0 = arith.constant 0 : i32
    %c0_i32_1 = arith.constant 0 : i32
    %c0_i32_2 = arith.constant 0 : i32
    return %c0_i32, %c0_i32_0, %c0_i32_1 : i32, i32, i32
  }
  func.func @transform_6(%arg0: i32) -> (i32, i32, i32) {
    %c0_i32 = arith.constant 0 : i32
    %c0_i32_0 = arith.constant 0 : i32
    %c0_i32_1 = arith.constant 0 : i32
    %c0_i32_2 = arith.constant 0 : i32
    return %c0_i32, %c0_i32_0, %c0_i32_1 : i32, i32, i32
  }
  func.func @transform_7(%arg0: i32) -> (i32, i32, i32) {
    %c0_i32 = arith.constant 0 : i32
    %c0_i32_0 = arith.constant 0 : i32
    %c0_i32_1 = arith.constant 0 : i32
    %c0_i32_2 = arith.constant 0 : i32
    return %c0_i32, %c0_i32_0, %c0_i32_1 : i32, i32, i32
  }
  func.func @transform_8(%arg0: i32) -> (i32, i32, i32) {
    %c0_i32 = arith.constant 0 : i32
    %c0_i32_0 = arith.constant 0 : i32
    %c0_i32_1 = arith.constant 0 : i32
    %c0_i32_2 = arith.constant 0 : i32
    return %c0_i32, %c0_i32_0, %c0_i32_1 : i32, i32, i32
  }
  func.func @transform_9(%arg0: i32) -> (i32, i32, i32) {
    %c0_i32 = arith.constant 0 : i32
    %c0_i32_0 = arith.constant 0 : i32
    %c0_i32_1 = arith.constant 0 : i32
    %c0_i32_2 = arith.constant 0 : i32
    return %c0_i32, %c0_i32_0, %c0_i32_1 : i32, i32, i32
  }
  func.func @transform_10(%arg0: i32) -> (i32, i32, i32) {
    %c0_i32 = arith.constant 0 : i32
    %c0_i32_0 = arith.constant 0 : i32
    %c0_i32_1 = arith.constant 0 : i32
    %c0_i32_2 = arith.constant 0 : i32
    return %c0_i32, %c0_i32_0, %c0_i32_1 : i32, i32, i32
  }
  func.func @transform_11(%arg0: i32) -> (i32, i32, i32) {
    %c0_i32 = arith.constant 0 : i32
    %c0_i32_0 = arith.constant 0 : i32
    %c0_i32_1 = arith.constant 0 : i32
    %c0_i32_2 = arith.constant 0 : i32
    return %c0_i32, %c0_i32_0, %c0_i32_1 : i32, i32, i32
  }
  func.func @transform_12(%arg0: i32) -> (i32, i32, i32) {
    %c0_i32 = arith.constant 0 : i32
    %c0_i32_0 = arith.constant 0 : i32
    %c0_i32_1 = arith.constant 0 : i32
    %c0_i32_2 = arith.constant 0 : i32
    return %c0_i32, %c0_i32_0, %c0_i32_1 : i32, i32, i32
  }
  func.func @transform_13(%arg0: i32) -> (i32, i32) {
    %c0_i32 = arith.constant 0 : i32
    %c0_i32_0 = arith.constant 0 : i32
    %c0_i32_1 = arith.constant 0 : i32
    return %c0_i32, %c0_i32_0 : i32, i32
  }
  func.func @transform_14(%arg0: i32) -> (i32, i32) {
    %c0_i32 = arith.constant 0 : i32
    %c0_i32_0 = arith.constant 0 : i32
    %c0_i32_1 = arith.constant 0 : i32
    return %c0_i32, %c0_i32_0 : i32, i32
  }
  func.func @transform_15(%arg0: i32) -> (i32, i32, i32) {
    %c0_i32 = arith.constant 0 : i32
    %c0_i32_0 = arith.constant 0 : i32
    %c0_i32_1 = arith.constant 0 : i32
    return %arg0, %c0_i32, %c0_i32_0 : i32, i32, i32
  }
}

</mosaic_0001>

<llo_original>
// kernel: transformer_layer_forward.1
$region0: #{transformer_layer_forward.1}
  #allocation0 [shape = 'u32[]', space=smem, size = 0x4, offset = 0x4, fixed_abs, tag = 'smem constant byte address 0x4 - core index']
  #allocation1 [shape = 'u32[72,128]{1,0:T(1,128)}', space=vmem, size = 0x9000, scoped, tag = 'internal scratch']
  %s0 = inlined_call_operand.vmem [shape: f32[8,8,32], index: 0, kind: input, shape index: {}]
  %s1 = inlined_call_operand.vmem [shape: bf16[2,32,96], index: 1, kind: input, shape index: {}]
  %s2 = inlined_call_operand.vmem [shape: f32[2,1,96], index: 2, kind: input, shape index: {}]
  %s3 = inlined_call_operand.vmem [shape: bf16[2,32,32], index: 3, kind: input, shape index: {}]
  %s4 = inlined_call_operand.hbm [shape: f32[2,1,32], index: 4, kind: input, shape index: {}]
  %s5 = inlined_call_operand.vmem [shape: bf16[2,32,128], index: 5, kind: input, shape index: {}]
  %s6 = inlined_call_operand.hbm [shape: f32[2,1,128], index: 6, kind: input, shape index: {}]
  %s7 = inlined_call_operand.vmem [shape: bf16[2,128,32], index: 7, kind: input, shape index: {}]
  %s8 = inlined_call_operand.hbm [shape: f32[2,1,32], index: 8, kind: input, shape index: {}]
  %s9 = inlined_call_operand.vmem [shape: f32[2,1,32], index: 9, kind: input, shape index: {}]
  %s10 = inlined_call_operand.hbm [shape: f32[2,1,32], index: 10, kind: input, shape index: {}]
  %s11 = inlined_call_operand.vmem [shape: f32[2,1,32], index: 11, kind: input, shape index: {}]
  %s12 = inlined_call_operand.hbm [shape: f32[2,1,32], index: 12, kind: input, shape index: {}]
  %s13 = inlined_call_operand.vmem [shape: f32[1,32], index: 13, kind: input, shape index: {}]
  %s14 = inlined_call_operand.vmem [shape: f32[1,32], index: 14, kind: input, shape index: {}]
  %s15 = inlined_call_operand.hbm [shape: f32[8,8,32], index: 15, kind: output, shape index: {}]
  %s16 = sld [smem:[#allocation0]]
  $region113: #{transformer_layer_forward.1} parent=0
    _
  %s18 = ssub.s32 1, %s16
  %s19 = scalar_select 0, %s18, %s16
  $region1: #{transformer_layer_forward.1} parent=0
    #allocation2 [shape = 'u8[1024]{0}', space=vmem, size = 0x400, scoped, tag = 'input window, operand 4, single buffered']
    #allocation3 [shape = 's32[2]{0}', space=sflag, size = 0x8, scoped, tag = 'scoped memory for transformer_layer_forward.1']
    #allocation4 [shape = 's32[2]{0}', space=sflag, size = 0x8, scoped, tag = 'scoped memory for transformer_layer_forward.1']
    #allocation5 [shape = 'u8[1024]{0}', space=vmem, size = 0x400, scoped, tag = 'input window, operand 6, single buffered']
    #allocation6 [shape = 's32[1]{0}', space=sflag, size = 0x4, scoped, tag = 'scoped memory for transformer_layer_forward.1']
    #allocation7 [shape = 'u8[1024]{0}', space=vmem, size = 0x400, scoped, tag = 'input window, operand 8, single buffered']
    #allocation8 [shape = 'u8[1024]{0}', space=vmem, size = 0x400, scoped, tag = 'input window, operand 10, single buffered']
    #allocation9 [shape = 's32[1]{0}', space=sflag, size = 0x4, scoped, tag = 'scoped memory for transformer_layer_forward.1']
    #allocation10 [shape = 'u8[1024]{0}', space=vmem, size = 0x400, scoped, tag = 'input window, operand 12, single buffered']
    #allocation11 [shape = 'u8[32768]{0}', space=vmem, size = 0x8000, scoped, tag = 'output window, operand 0']
    %20 = vsyncpa [#allocation3], 0
    %21 = vsyncpa [#allocation6], 0
    %22 = vsyncpa [#allocation9], 0
    %23 = vsyncpa [#allocation4], 0
    %s24 = scalar_lea.sflag [#allocation4], 1
    %25 = vsyncpa %s24, 0
    loop: start=0, step=1, limit=4
    $region2: #{transformer_layer_forward.1} parent=1 // loop_pre_header
      _
    $region3: #{transformer_layer_forward.1} parent=1 // loop_header
      %s27 = sphi 0, %s31
      %p28 = scmp.ge.s32.totalorder %s27, 4
      %s37 = sphi 0, %s39
      %s40 = sphi 0, %s37
      %s41 = sphi 0, %s40
      %s57 = sphi 0, %s41
      %s61 = sphi 0, %s61
      %s63 = sphi 0, %s61
      %s64 = sphi 0, %s63
      %s78 = sphi 0, %s64
      %s82 = sphi 0, %s82
      %s84 = sphi 0, %s82
      %s85 = sphi 0, %s84
      %s99 = sphi 0, %s85
      %s103 = sphi 0, %s103
      %s105 = sphi 0, %s103
      %s106 = sphi 0, %s105
      %s120 = sphi 0, %s106
      %s124 = sphi 0, %s124
      %s126 = sphi 0, %s124
      %s127 = sphi 0, %s126
      %s141 = sphi 0, %s127
      %s145 = sphi 0, %s145
      %s147 = sphi 0, %s145
      %s148 = sphi 0, %s147
      %s162 = sphi 0, %s148
      %s166 = sphi 0, %s166
      %s168 = sphi 0, %s166
      %s169 = sphi 0, %s168
      %s183 = sphi 0, %s169
      %s187 = sphi 0, %s187
      %s189 = sphi 0, %s187
      %s190 = sphi 0, %s189
      %s204 = sphi 0, %s190
      %s208 = sphi 0, %s208
      %s210 = sphi 0, %s208
      %s211 = sphi 0, %s210
      %s225 = sphi 0, %s211
      %s229 = sphi 0, %s229
      %s231 = sphi 0, %s229
      %s232 = sphi 0, %s231
      %s246 = sphi 0, %s232
      %s250 = sphi 0, %s250
      %s252 = sphi 0, %s250
      %s253 = sphi 0, %s252
      %s267 = sphi 0, %s253
      %s271 = sphi 0, %s271
      %s273 = sphi 0, %s271
      %s274 = sphi 0, %s273
      %s288 = sphi 0, %s274
      %s292 = sphi 0, %s292
      %s294 = sphi 0, %s292
      %s295 = sphi 0, %s294
      %s309 = sphi 0, %s295
      %s313 = sphi 0, %s313
      %s315 = sphi 0, %s313
      %s316 = sphi 0, %s315
      %s330 = sphi 0, %s316
      %s334 = sphi 0, %s334
      %s336 = sphi 0, %s334
      %s337 = sphi 0, %s336
      %s351 = sphi 0, %s337
      %s357 = sphi 0, %s359
      %s360 = sphi 0, %s357
      %s361 = sphi 0, %s360
      %s377 = sphi 0, %s361
    $region4: #{transformer_layer_forward.1} parent=1 // loop_header_branch
      %30 = sbr.rel (%p28) target = $region8
    $region5: #{transformer_layer_forward.1} parent=1 // loop_body
      %s32 = ssub.s32 %s27, 1
      %s33 = ssub.s32 %s27, 2
      %s34 = sadd.s32 %s27, 1
      %s35 = ssub.s32 %s27, %s34
      %p36 = scmp.eq.s32.totalorder %s35, 0
      %s38 = sadd.s32 %s37, 1
      %s39 = scalar_select %p36, %s37, %s38
      %p42 = pneg %p36
      %p43 = scmp.eq.s32.totalorder %s27, 1
      %p44 = por %p42, %p43
      %p45 = scmp.ne.s32.totalorder %s37, %s40
      %p46 = scmp.eq.s32.totalorder %s27, 0
      %p47 = por %p45, %p46
      %p48 = scmp.ne.s32.totalorder %s37, %s40
      %p49 = scmp.eq.s32.totalorder %s32, 1
      %p50 = por %p48, %p49
      %p51 = scmp.ne.s32.totalorder %s40, %s41
      %p52 = scmp.eq.s32.totalorder %s32, 0
      %p53 = por %p51, %p52
      %p54 = scmp.ne.s32.totalorder %s40, %s41
      %p55 = scmp.eq.s32.totalorder %s33, 1
      %p56 = por %p54, %p55
      %p58 = scmp.ne.s32.totalorder %s41, %s57
      %p59 = scmp.eq.s32.totalorder %s33, 0
      %p60 = por %p58, %p59
      %s62 = sadd.s32 %s61, 1
      %p65 = scmp.eq.s32.totalorder %s27, 1
      %p66 = scmp.ne.s32.totalorder %s61, %s63
      %p67 = scmp.eq.s32.totalorder %s27, 0
      %p68 = por %p66, %p67
      %p69 = scmp.ne.s32.totalorder %s61, %s63
      %p70 = scmp.eq.s32.totalorder %s32, 1
      %p71 = por %p69, %p70
      %p72 = scmp.ne.s32.totalorder %s63, %s64
      %p73 = scmp.eq.s32.totalorder %s32, 0
      %p74 = por %p72, %p73
      %p75 = scmp.ne.s32.totalorder %s63, %s64
      %p76 = scmp.eq.s32.totalorder %s33, 1
      %p77 = por %p75, %p76
      %p79 = scmp.ne.s32.totalorder %s64, %s78
      %p80 = scmp.eq.s32.totalorder %s33, 0
      %p81 = por %p79, %p80
      %s83 = sadd.s32 %s82, 1
      %p86 = scmp.eq.s32.totalorder %s27, 1
      %p87 = scmp.ne.s32.totalorder %s82, %s84
      %p88 = scmp.eq.s32.totalorder %s27, 0
      %p89 = por %p87, %p88
      %p90 = scmp.ne.s32.totalorder %s82, %s84
      %p91 = scmp.eq.s32.totalorder %s32, 1
      %p92 = por %p90, %p91
      %p93 = scmp.ne.s32.totalorder %s84, %s85
      %p94 = scmp.eq.s32.totalorder %s32, 0
      %p95 = por %p93, %p94
      %p96 = scmp.ne.s32.totalorder %s84, %s85
      %p97 = scmp.eq.s32.totalorder %s33, 1
      %p98 = por %p96, %p97
      %p100 = scmp.ne.s32.totalorder %s85, %s99
      %p101 = scmp.eq.s32.totalorder %s33, 0
      %p102 = por %p100, %p101
      %s104 = sadd.s32 %s103, 1
      %p107 = scmp.eq.s32.totalorder %s27, 1
      %p108 = scmp.ne.s32.totalorder %s103, %s105
      %p109 = scmp.eq.s32.totalorder %s27, 0
      %p110 = por %p108, %p109
      %p111 = scmp.ne.s32.totalorder %s103, %s105
      %p112 = scmp.eq.s32.totalorder %s32, 1
      %p113 = por %p111, %p112
      %p114 = scmp.ne.s32.totalorder %s105, %s106
      %p115 = scmp.eq.s32.totalorder %s32, 0
      %p116 = por %p114, %p115
      %p117 = scmp.ne.s32.totalorder %s105, %s106
      %p118 = scmp.eq.s32.totalorder %s33, 1
      %p119 = por %p117, %p118
      %p121 = scmp.ne.s32.totalorder %s106, %s120
      %p122 = scmp.eq.s32.totalorder %s33, 0
      %p123 = por %p121, %p122
      %s125 = sadd.s32 %s124, 1
      %p128 = scmp.eq.s32.totalorder %s27, 1
      %p129 = scmp.ne.s32.totalorder %s124, %s126
      %p130 = scmp.eq.s32.totalorder %s27, 0
      %p131 = por %p129, %p130
      %p132 = scmp.ne.s32.totalorder %s124, %s126
      %p133 = scmp.eq.s32.totalorder %s32, 1
      %p134 = por %p132, %p133
      %p135 = scmp.ne.s32.totalorder %s126, %s127
      %p136 = scmp.eq.s32.totalorder %s32, 0
      %p137 = por %p135, %p136
      %p138 = scmp.ne.s32.totalorder %s126, %s127
      %p139 = scmp.eq.s32.totalorder %s33, 1
      %p140 = por %p138, %p139
      %p142 = scmp.ne.s32.totalorder %s127, %s141
      %p143 = scmp.eq.s32.totalorder %s33, 0
      %p144 = por %p142, %p143
      %s146 = sadd.s32 %s145, 1
      %p149 = scmp.eq.s32.totalorder %s27, 1
      %p150 = scmp.ne.s32.totalorder %s145, %s147
      %p151 = scmp.eq.s32.totalorder %s27, 0
      %p152 = por %p150, %p151
      %p153 = scmp.ne.s32.totalorder %s145, %s147
      %p154 = scmp.eq.s32.totalorder %s32, 1
      %p155 = por %p153, %p154
      %p156 = scmp.ne.s32.totalorder %s147, %s148
      %p157 = scmp.eq.s32.totalorder %s32, 0
      %p158 = por %p156, %p157
      %p159 = scmp.ne.s32.totalorder %s147, %s148
      %p160 = scmp.eq.s32.totalorder %s33, 1
      %p161 = por %p159, %p160
      %p163 = scmp.ne.s32.totalorder %s148, %s162
      %p164 = scmp.eq.s32.totalorder %s33, 0
      %p165 = por %p163, %p164
      %s167 = sadd.s32 %s166, 1
      %p170 = scmp.eq.s32.totalorder %s27, 1
      %p171 = scmp.ne.s32.totalorder %s166, %s168
      %p172 = scmp.eq.s32.totalorder %s27, 0
      %p173 = por %p171, %p172
      %p174 = scmp.ne.s32.totalorder %s166, %s168
      %p175 = scmp.eq.s32.totalorder %s32, 1
      %p176 = por %p174, %p175
      %p177 = scmp.ne.s32.totalorder %s168, %s169
      %p178 = scmp.eq.s32.totalorder %s32, 0
      %p179 = por %p177, %p178
      %p180 = scmp.ne.s32.totalorder %s168, %s169
      %p181 = scmp.eq.s32.totalorder %s33, 1
      %p182 = por %p180, %p181
      %p184 = scmp.ne.s32.totalorder %s169, %s183
      %p185 = scmp.eq.s32.totalorder %s33, 0
      %p186 = por %p184, %p185
      %s188 = sadd.s32 %s187, 1
      %p191 = scmp.eq.s32.totalorder %s27, 1
      %p192 = scmp.ne.s32.totalorder %s187, %s189
      %p193 = scmp.eq.s32.totalorder %s27, 0
      %p194 = por %p192, %p193
      %p195 = scmp.ne.s32.totalorder %s187, %s189
      %p196 = scmp.eq.s32.totalorder %s32, 1
      %p197 = por %p195, %p196
      %p198 = scmp.ne.s32.totalorder %s189, %s190
      %p199 = scmp.eq.s32.totalorder %s32, 0
      %p200 = por %p198, %p199
      %p201 = scmp.ne.s32.totalorder %s189, %s190
      %p202 = scmp.eq.s32.totalorder %s33, 1
      %p203 = por %p201, %p202
      %p205 = scmp.ne.s32.totalorder %s190, %s204
      %p206 = scmp.eq.s32.totalorder %s33, 0
      %p207 = por %p205, %p206
      %s209 = sadd.s32 %s208, 1
      %p212 = scmp.eq.s32.totalorder %s27, 1
      %p213 = scmp.ne.s32.totalorder %s208, %s210
      %p214 = scmp.eq.s32.totalorder %s27, 0
      %p215 = por %p213, %p214
      %p216 = scmp.ne.s32.totalorder %s208, %s210
      %p217 = scmp.eq.s32.totalorder %s32, 1
      %p218 = por %p216, %p217
      %p219 = scmp.ne.s32.totalorder %s210, %s211
      %p220 = scmp.eq.s32.totalorder %s32, 0
      %p221 = por %p219, %p220
      %p222 = scmp.ne.s32.totalorder %s210, %s211
      %p223 = scmp.eq.s32.totalorder %s33, 1
      %p224 = por %p222, %p223
      %p226 = scmp.ne.s32.totalorder %s211, %s225
      %p227 = scmp.eq.s32.totalorder %s33, 0
      %p228 = por %p226, %p227
      %s230 = sadd.s32 %s229, 1
      %p233 = scmp.eq.s32.totalorder %s27, 1
      %p234 = scmp.ne.s32.totalorder %s229, %s231
      %p235 = scmp.eq.s32.totalorder %s27, 0
      %p236 = por %p234, %p235
      %p237 = scmp.ne.s32.totalorder %s229, %s231
      %p238 = scmp.eq.s32.totalorder %s32, 1
      %p239 = por %p237, %p238
      %p240 = scmp.ne.s32.totalorder %s231, %s232
      %p241 = scmp.eq.s32.totalorder %s32, 0
      %p242 = por %p240, %p241
      %p243 = scmp.ne.s32.totalorder %s231, %s232
      %p244 = scmp.eq.s32.totalorder %s33, 1
      %p245 = por %p243, %p244
      %p247 = scmp.ne.s32.totalorder %s232, %s246
      %p248 = scmp.eq.s32.totalorder %s33, 0
      %p249 = por %p247, %p248
      %s251 = sadd.s32 %s250, 1
      %p254 = scmp.eq.s32.totalorder %s27, 1
      %p255 = scmp.ne.s32.totalorder %s250, %s252
      %p256 = scmp.eq.s32.totalorder %s27, 0
      %p257 = por %p255, %p256
      %p258 = scmp.ne.s32.totalorder %s250, %s252
      %p259 = scmp.eq.s32.totalorder %s32, 1
      %p260 = por %p258, %p259
      %p261 = scmp.ne.s32.totalorder %s252, %s253
      %p262 = scmp.eq.s32.totalorder %s32, 0
      %p263 = por %p261, %p262
      %p264 = scmp.ne.s32.totalorder %s252, %s253
      %p265 = scmp.eq.s32.totalorder %s33, 1
      %p266 = por %p264, %p265
      %p268 = scmp.ne.s32.totalorder %s253, %s267
      %p269 = scmp.eq.s32.totalorder %s33, 0
      %p270 = por %p268, %p269
      %s272 = sadd.s32 %s271, 1
      %p275 = scmp.eq.s32.totalorder %s27, 1
      %p276 = scmp.ne.s32.totalorder %s271, %s273
      %p277 = scmp.eq.s32.totalorder %s27, 0
      %p278 = por %p276, %p277
      %p279 = scmp.ne.s32.totalorder %s271, %s273
      %p280 = scmp.eq.s32.totalorder %s32, 1
      %p281 = por %p279, %p280
      %p282 = scmp.ne.s32.totalorder %s273, %s274
      %p283 = scmp.eq.s32.totalorder %s32, 0
      %p284 = por %p282, %p283
      %p285 = scmp.ne.s32.totalorder %s273, %s274
      %p286 = scmp.eq.s32.totalorder %s33, 1
      %p287 = por %p285, %p286
      %p289 = scmp.ne.s32.totalorder %s274, %s288
      %p290 = scmp.eq.s32.totalorder %s33, 0
      %p291 = por %p289, %p290
      %s293 = sadd.s32 %s292, 1
      %p296 = scmp.eq.s32.totalorder %s27, 1
      %p297 = scmp.ne.s32.totalorder %s292, %s294
      %p298 = scmp.eq.s32.totalorder %s27, 0
      %p299 = por %p297, %p298
      %p300 = scmp.ne.s32.totalorder %s292, %s294
      %p301 = scmp.eq.s32.totalorder %s32, 1
      %p302 = por %p300, %p301
      %p303 = scmp.ne.s32.totalorder %s294, %s295
      %p304 = scmp.eq.s32.totalorder %s32, 0
      %p305 = por %p303, %p304
      %p306 = scmp.ne.s32.totalorder %s294, %s295
      %p307 = scmp.eq.s32.totalorder %s33, 1
      %p308 = por %p306, %p307
      %p310 = scmp.ne.s32.totalorder %s295, %s309
      %p311 = scmp.eq.s32.totalorder %s33, 0
      %p312 = por %p310, %p311
      %s314 = sadd.s32 %s313, 1
      %p317 = scmp.eq.s32.totalorder %s27, 1
      %p318 = scmp.ne.s32.totalorder %s313, %s315
      %p319 = scmp.eq.s32.totalorder %s27, 0
      %p320 = por %p318, %p319
      %p321 = scmp.ne.s32.totalorder %s313, %s315
      %p322 = scmp.eq.s32.totalorder %s32, 1
      %p323 = por %p321, %p322
      %p324 = scmp.ne.s32.totalorder %s315, %s316
      %p325 = scmp.eq.s32.totalorder %s32, 0
      %p326 = por %p324, %p325
      %p327 = scmp.ne.s32.totalorder %s315, %s316
      %p328 = scmp.eq.s32.totalorder %s33, 1
      %p329 = por %p327, %p328
      %p331 = scmp.ne.s32.totalorder %s316, %s330
      %p332 = scmp.eq.s32.totalorder %s33, 0
      %p333 = por %p331, %p332
      %s335 = sadd.s32 %s334, 1
      %p338 = scmp.eq.s32.totalorder %s27, 1
      %p339 = scmp.ne.s32.totalorder %s334, %s336
      %p340 = scmp.eq.s32.totalorder %s27, 0
      %p341 = por %p339, %p340
      %p342 = scmp.ne.s32.totalorder %s334, %s336
      %p343 = scmp.eq.s32.totalorder %s32, 1
      %p344 = por %p342, %p343
      %p345 = scmp.ne.s32.totalorder %s336, %s337
      %p346 = scmp.eq.s32.totalorder %s32, 0
      %p347 = por %p345, %p346
      %p348 = scmp.ne.s32.totalorder %s336, %s337
      %p349 = scmp.eq.s32.totalorder %s33, 1
      %p350 = por %p348, %p349
      %p352 = scmp.ne.s32.totalorder %s337, %s351
      %p353 = scmp.eq.s32.totalorder %s33, 0
      %p354 = por %p352, %p353
      %s355 = ssub.s32 %s27, %s34
      %p356 = scmp.eq.s32.totalorder %s355, 0
      %s358 = sadd.s32 %s357, 1
      %s359 = scalar_select %p356, %s357, %s358
      %p362 = pneg %p356
      %p363 = scmp.eq.s32.totalorder %s27, 1
      %p364 = por %p362, %p363
      %p365 = scmp.ne.s32.totalorder %s357, %s360
      %p366 = scmp.eq.s32.totalorder %s27, 0
      %p367 = por %p365, %p366
      %p368 = scmp.ne.s32.totalorder %s357, %s360
      %p369 = scmp.eq.s32.totalorder %s32, 1
      %p370 = por %p368, %p369
      %p371 = scmp.ne.s32.totalorder %s360, %s361
      %p372 = scmp.eq.s32.totalorder %s32, 0
      %p373 = por %p371, %p372
      %p374 = scmp.ne.s32.totalorder %s360, %s361
      %p375 = scmp.eq.s32.totalorder %s33, 1
      %p376 = por %p374, %p375
      %p378 = scmp.ne.s32.totalorder %s361, %s377
      %p379 = scmp.eq.s32.totalorder %s33, 0
      %p380 = por %p378, %p379
      %p381 = scmp.le.s32.totalorder 1, %s27
      %p382 = scmp.lt.s32.totalorder %s27, 3
      %p383 = pnand %p381, %p382
      %p384 = pneg %p383
      // Predicated region
      $region9: #{transformer_layer_forward.1} parent=5 // pred_check
        _
      $region10: #{transformer_layer_forward.1} parent=5 // pred_check_branch
        %386 = sbr.rel (%p383) target = $region12
      $region11: #{transformer_layer_forward.1} parent=5 // pred_region
        %s387 = ssub.s32 %s27, 1
        // Predicated region
        $region13: #{transformer_layer_forward.1} parent=11 // pred_check
          %p388 = pneg %p74
        $region14: #{transformer_layer_forward.1} parent=11 // pred_check_branch
          %390 = sbr.rel (%p388) target = $region16
        $region15: #{transformer_layer_forward.1} parent=11 // pred_region
          _
        $region16: #{transformer_layer_forward.1} parent=11 // pred_fallthru
          _
        // Predicated region
        $region17: #{transformer_layer_forward.1} parent=11 // pred_check
          %p391 = pneg %p95
        $region18: #{transformer_layer_forward.1} parent=11 // pred_check_branch
          %393 = sbr.rel (%p391) target = $region20
        $region19: #{transformer_layer_forward.1} parent=11 // pred_region
          _
        $region20: #{transformer_layer_forward.1} parent=11 // pred_fallthru
          _
        // Predicated region
        $region21: #{transformer_layer_forward.1} parent=11 // pred_check
          %p394 = pneg %p116
        $region22: #{transformer_layer_forward.1} parent=11 // pred_check_branch
          %396 = sbr.rel (%p394) target = $region24
        $region23: #{transformer_layer_forward.1} parent=11 // pred_region
          _
        $region24: #{transformer_layer_forward.1} parent=11 // pred_fallthru
          _
        // Predicated region
        $region25: #{transformer_layer_forward.1} parent=11 // pred_check
          %p397 = pneg %p137
        $region26: #{transformer_layer_forward.1} parent=11 // pred_check_branch
          %399 = sbr.rel (%p397) target = $region28
        $region27: #{transformer_layer_forward.1} parent=11 // pred_region
          %401 = vsyncadd [#allocation3], 0
          %s402 = sshll.u32 %s4, 4
          %s403 = int_to_ptr.hbm [resolvable:$true] %s402
          %s404 = sshll.u32 [#allocation2], 4
          %s405 = int_to_ptr.vmem [resolvable:$true] %s404
          %410 = dma.hbm_to_vmem [thread:$0]  %s403, 32, %s405, [#allocation3], 16, 16, 1
        $region28: #{transformer_layer_forward.1} parent=11 // pred_fallthru
          _
        // Predicated region
        $region29: #{transformer_layer_forward.1} parent=11 // pred_check
          %p411 = pneg %p158
        $region30: #{transformer_layer_forward.1} parent=11 // pred_check_branch
          %413 = sbr.rel (%p411) target = $region32
        $region31: #{transformer_layer_forward.1} parent=11 // pred_region
          _
        $region32: #{transformer_layer_forward.1} parent=11 // pred_fallthru
          _
        // Predicated region
        $region33: #{transformer_layer_forward.1} parent=11 // pred_check
          %p414 = pneg %p179
        $region34: #{transformer_layer_forward.1} parent=11 // pred_check_branch
          %416 = sbr.rel (%p414) target = $region36
        $region35: #{transformer_layer_forward.1} parent=11 // pred_region
          %418 = vsyncadd [#allocation6], 0
          %s419 = sshll.u32 %s6, 4
          %s420 = int_to_ptr.hbm [resolvable:$true] %s419
          %s421 = sshll.u32 [#allocation5], 4
          %s422 = int_to_ptr.vmem [resolvable:$true] %s421
          %427 = dma.hbm_to_vmem [thread:$0]  %s420, 32, %s422, [#allocation6], 16, 16, 1
        $region36: #{transformer_layer_forward.1} parent=11 // pred_fallthru
          _
        // Predicated region
        $region37: #{transformer_layer_forward.1} parent=11 // pred_check
          %p428 = pneg %p200
        $region38: #{transformer_layer_forward.1} parent=11 // pred_check_branch
          %430 = sbr.rel (%p428) target = $region40
        $region39: #{transformer_layer_forward.1} parent=11 // pred_region
          _
        $region40: #{transformer_layer_forward.1} parent=11 // pred_fallthru
          _
        // Predicated region
        $region41: #{transformer_layer_forward.1} parent=11 // pred_check
          %p431 = pneg %p221
        $region42: #{transformer_layer_forward.1} parent=11 // pred_check_branch
          %433 = sbr.rel (%p431) target = $region44
        $region43: #{transformer_layer_forward.1} parent=11 // pred_region
          %435 = vsyncadd [#allocation6], 0
          %s436 = sshll.u32 %s8, 4
          %s437 = int_to_ptr.hbm [resolvable:$true] %s436
          %s438 = sshll.u32 [#allocation7], 4
          %s439 = int_to_ptr.vmem [resolvable:$true] %s438
          %444 = dma.hbm_to_vmem [thread:$0]  %s437, 32, %s439, [#allocation6], 16, 16, 1
        $region44: #{transformer_layer_forward.1} parent=11 // pred_fallthru
          _
        // Predicated region
        $region45: #{transformer_layer_forward.1} parent=11 // pred_check
          %p445 = pneg %p242
        $region46: #{transformer_layer_forward.1} parent=11 // pred_check_branch
          %447 = sbr.rel (%p445) target = $region48
        $region47: #{transformer_layer_forward.1} parent=11 // pred_region
          _
        $region48: #{transformer_layer_forward.1} parent=11 // pred_fallthru
          _
        // Predicated region
        $region49: #{transformer_layer_forward.1} parent=11 // pred_check
          %p448 = pneg %p263
        $region50: #{transformer_layer_forward.1} parent=11 // pred_check_branch
          %450 = sbr.rel (%p448) target = $region52
        $region51: #{transformer_layer_forward.1} parent=11 // pred_region
          %452 = vsyncadd [#allocation9], 0
          %s453 = sshll.u32 %s10, 4
          %s454 = int_to_ptr.hbm [resolvable:$true] %s453
          %s455 = sshll.u32 [#allocation8], 4
          %s456 = int_to_ptr.vmem [resolvable:$true] %s455
          %461 = dma.hbm_to_vmem [thread:$0]  %s454, 32, %s456, [#allocation9], 16, 16, 1
        $region52: #{transformer_layer_forward.1} parent=11 // pred_fallthru
          _
        // Predicated region
        $region53: #{transformer_layer_forward.1} parent=11 // pred_check
          %p462 = pneg %p284
        $region54: #{transformer_layer_forward.1} parent=11 // pred_check_branch
          %464 = sbr.rel (%p462) target = $region56
        $region55: #{transformer_layer_forward.1} parent=11 // pred_region
          _
        $region56: #{transformer_layer_forward.1} parent=11 // pred_fallthru
          _
        // Predicated region
        $region57: #{transformer_layer_forward.1} parent=11 // pred_check
          %p465 = pneg %p305
        $region58: #{transformer_layer_forward.1} parent=11 // pred_check_branch
          %467 = sbr.rel (%p465) target = $region60
        $region59: #{transformer_layer_forward.1} parent=11 // pred_region
          %469 = vsyncadd [#allocation9], 0
          %s470 = sshll.u32 %s12, 4
          %s471 = int_to_ptr.hbm [resolvable:$true] %s470
          %s472 = sshll.u32 [#allocation10], 4
          %s473 = int_to_ptr.vmem [resolvable:$true] %s472
          %478 = dma.hbm_to_vmem [thread:$0]  %s471, 32, %s473, [#allocation9], 16, 16, 1
        $region60: #{transformer_layer_forward.1} parent=11 // pred_fallthru
          _
        // Predicated region
        $region61: #{transformer_layer_forward.1} parent=11 // pred_check
          %p479 = pneg %p326
        $region62: #{transformer_layer_forward.1} parent=11 // pred_check_branch
          %481 = sbr.rel (%p479) target = $region64
        $region63: #{transformer_layer_forward.1} parent=11 // pred_region
          _
        $region64: #{transformer_layer_forward.1} parent=11 // pred_fallthru
          _
        // Predicated region
        $region65: #{transformer_layer_forward.1} parent=11 // pred_check
          %p482 = pneg %p347
        $region66: #{transformer_layer_forward.1} parent=11 // pred_check_branch
          %484 = sbr.rel (%p482) target = $region68
        $region67: #{transformer_layer_forward.1} parent=11 // pred_region
          _
        $region68: #{transformer_layer_forward.1} parent=11 // pred_fallthru
          _
      $region12: #{transformer_layer_forward.1} parent=5 // pred_fallthru
        _
      %p485 = scmp.lt.s32.totalorder %s27, 2
      // Predicated region
      $region69: #{transformer_layer_forward.1} parent=5 // pred_check
        %p486 = pneg %p485
      $region70: #{transformer_layer_forward.1} parent=5 // pred_check_branch
        %488 = sbr.rel (%p486) target = $region72
      $region71: #{transformer_layer_forward.1} parent=5 // pred_region
        // Predicated region
        $region73: #{transformer_layer_forward.1} parent=71 // pred_check
          %p489 = pneg %p47
        $region74: #{transformer_layer_forward.1} parent=71 // pred_check_branch
          %491 = sbr.rel (%p489) target = $region76
        $region75: #{transformer_layer_forward.1} parent=71 // pred_region
          %s492 = smul.u32 4, %s27
          %p493 = scmp.lt.s32.totalorder %s492, 7
          %s494 = scalar_select %p493, %s492, 7
          %s495 = smul.addr %s494, 8
          %s496 = scalar_lea.vmem %s0, %s495
          %s497 = smul.u32 4, %s27
        $region76: #{transformer_layer_forward.1} parent=71 // pred_fallthru
          _
      $region72: #{transformer_layer_forward.1} parent=5 // pred_fallthru
        _
      %p498 = scmp.le.s32.totalorder 1, %s27
      %p499 = scmp.lt.s32.totalorder %s27, 3
      %p500 = pnand %p498, %p499
      %p501 = pneg %p500
      // Predicated region
      $region77: #{transformer_layer_forward.1} parent=5 // pred_check
        _
      $region78: #{transformer_layer_forward.1} parent=5 // pred_check_branch
        %503 = sbr.rel (%p500) target = $region80
      $region79: #{transformer_layer_forward.1} parent=5 // pred_region
        %s504 = ssub.s32 %s27, 1
        // Predicated region
        $region81: #{transformer_layer_forward.1} parent=79 // pred_check
          %p505 = pneg %p137
        $region82: #{transformer_layer_forward.1} parent=79 // pred_check_branch
          %507 = sbr.rel (%p505) target = $region84
        $region83: #{transformer_layer_forward.1} parent=79 // pred_region
          %509 = dma.done [#allocation3], 32
        $region84: #{transformer_layer_forward.1} parent=79 // pred_fallthru
          _
        // Predicated region
        $region85: #{transformer_layer_forward.1} parent=79 // pred_check
          %p510 = pneg %p179
        $region86: #{transformer_layer_forward.1} parent=79 // pred_check_branch
          %512 = sbr.rel (%p510) target = $region88
        $region87: #{transformer_layer_forward.1} parent=79 // pred_region
          %514 = dma.done [#allocation6], 32
        $region88: #{transformer_layer_forward.1} parent=79 // pred_fallthru
          _
        // Predicated region
        $region89: #{transformer_layer_forward.1} parent=79 // pred_check
          %p515 = pneg %p221
        $region90: #{transformer_layer_forward.1} parent=79 // pred_check_branch
          %517 = sbr.rel (%p515) target = $region92
        $region91: #{transformer_layer_forward.1} parent=79 // pred_region
          %519 = dma.done [#allocation6], 32
        $region92: #{transformer_layer_forward.1} parent=79 // pred_fallthru
          _
        // Predicated region
        $region93: #{transformer_layer_forward.1} parent=79 // pred_check
          %p520 = pneg %p263
        $region94: #{transformer_layer_forward.1} parent=79 // pred_check_branch
          %522 = sbr.rel (%p520) target = $region96
        $region95: #{transformer_layer_forward.1} parent=79 // pred_region
          %524 = dma.done [#allocation9], 32
        $region96: #{transformer_layer_forward.1} parent=79 // pred_fallthru
          _
        // Predicated region
        $region97: #{transformer_layer_forward.1} parent=79 // pred_check
          %p525 = pneg %p305
        $region98: #{transformer_layer_forward.1} parent=79 // pred_check_branch
          %527 = sbr.rel (%p525) target = $region100
        $region99: #{transformer_layer_forward.1} parent=79 // pred_region
          %529 = dma.done [#allocation9], 32
        $region100: #{transformer_layer_forward.1} parent=79 // pred_fallthru
          _
        %s530 = smul.u32 4, %s32
        %p531 = scmp.lt.s32.totalorder %s530, 7
        %s532 = scalar_select %p531, %s530, 7
        %s533 = smul.addr %s532, 8
        %s534 = scalar_lea.vmem %s0, %s533
        %p535 = pneg %p53
        %p536 = pneg %p50
        %p537 = pneg %p74
        %p538 = pneg %p71
        %p539 = pneg %p95
        %p540 = pneg %p92
        %p541 = pneg %p116
        %p542 = pneg %p113
        %p543 = pneg %p137
        %p544 = pneg %p134
        %p545 = pneg %p158
        %p546 = pneg %p155
        %p547 = pneg %p179
        %p548 = pneg %p176
        %p549 = pneg %p200
        %p550 = pneg %p197
        %p551 = pneg %p221
        %p552 = pneg %p218
        %p553 = pneg %p242
        %p554 = pneg %p239
        %p555 = pneg %p263
        %p556 = pneg %p260
        %p557 = pneg %p284
        %p558 = pneg %p281
        %p559 = pneg %p305
        %p560 = pneg %p302
        %p561 = pneg %p326
        %p562 = pneg %p323
        %p563 = pneg %p347
        %p564 = pneg %p344
        %p565 = pneg %p373
        %p566 = pneg %p370
        %s567 = sand.u32 %s360, 1
        %s568 = scalar_lea.sflag [#allocation4], %s567
        %s569 = sand.u32 %s360, 1
        %s570 = smul.addr %s569, 32
        %s571 = scalar_lea.vmem [#allocation11], %s570
        %s572 = smul.u32 4, %s32
        %p573 = scmp.lt.s32.totalorder %s572, 7
        %s574 = scalar_select %p573, %s572, 7
        %s575 = smul.addr %s574, 8
        %s576 = scalar_lea.vmem %s0, %s575
        %s577 = smul.u32 4, %s32
        %s578 = smul.u32 4, %s32
        %v580 = vld [vmem:[%s576] sm:$0xff]
        %v581 = vld [vmem:[%s576 + $0x8] sm:$0xff]
        %v582 = vld [vmem:[%s576 + $0x10] sm:$0xff]
        %v583 = vld [vmem:[%s576 + $0x18] sm:$0xff]
        %v584 = vpack.c.bf16 %v581, %v580
        %v585 = vpack.c.bf16 %v583, %v582
        %v586 = vld [vmem:[%s1] sm:$0xf]
        %v587 = vld [vmem:[%s1 + $0x4] sm:$0xf]
        %v588 = vld [vmem:[%s1 + $0x8] sm:$0xf]
        %v589 = vld [vmem:[%s1 + $0xc] sm:$0xf]
        %v590 = vld [vmem:[%s2] sm:$0x1]
        %v592 = vperm.slane %v590, 0
        %v598 = vunpack.c.l.b16 %v586
        %v599 = vunpack.c.l.b16 %v587
        %v600 = vunpack.c.l.b16 %v588
        %v601 = vunpack.c.l.b16 %v589
        %v602 = vpack.c.b16 %v599, %v598
        %v603 = vpack.c.b16 %v601, %v600
        %vm606 = vcmask 261120
        %v608 = vsel %vm606, %v584, 0
        %v611 = vsel %vm606, %v585, 0
        %613 = vmatpush.bf16.msra.mxu0 0
        %614 = vmatpush.bf16.msra.mxu0 0
        %615 = vmatpush.bf16.msra.mxu0 0
        %616 = vmatpush.bf16.msra.mxu0 0
        %617 = vmatpush.bf16.msra.mxu0 0
        %618 = vmatpush.bf16.msra.mxu0 0
        %619 = vmatpush.bf16.msra.mxu0 %v603
        %620 = vmatpush.bf16.msra.mxu0 %v602
        %621 = vmatmul.bf16.gmra.mxu0 %v608
        %v622 = vpop.f32.mrf.mxu0
        %v623 = vadd.f32 %v592, %v622
        %v624 = vpop.f32.mrf.mxu0
        %v625 = vadd.f32 %v592, %v624
        %626 = vmatmul.bf16.gmra.mxu0 %v611
        %v627 = vpop.f32.mrf.mxu0
        %v628 = vadd.f32 %v592, %v627
        %v629 = vpop.f32.mrf.mxu0
        %v630 = vadd.f32 %v592, %v629
        %631 = vdwg.mxu0
        %v632 = vmul.f32 %v623, 0.35355338
        %v633 = vmul.f32 %v625, 0.35355338
        %v634 = vmul.f32 %v628, 0.35355338
        %v635 = vmul.f32 %v630, 0.35355338
        %v636 = vpack.c.bf16 %v632, %v632
        %v637 = vpack.c.bf16 %v633, %v633
        %v638 = vpack.c.bf16 %v634, %v634
        %v639 = vpack.c.bf16 %v635, %v635
        %v640 = vpack.c.bf16 %v623, %v623
        %v641 = vpack.c.bf16 %v625, %v625
        %v642 = vpack.c.bf16 %v628, %v628
        %v643 = vpack.c.bf16 %v630, %v630
        %v645 = vunpack.c.l.b16 %v640
        %v646 = vpack.c.b16 %v645, %v645
        %647 = vrot.lane.b32.xlu0 %v646, 96
        %v648 = vpop.permute.xlu0 %647
        %vm649 = vcmask 64512
        %v651 = vsel %vm649, %v636, 0
        %v654 = vsel %vm649, %v648, 0
        %656 = vmatpush.bf16.xpose.msra.mxu0 0
        %657 = vmatpush.bf16.xpose.msra.mxu0 0
        %658 = vmatpush.bf16.xpose.msra.mxu0 0
        %659 = vmatpush.bf16.xpose.msra.mxu0 0
        %660 = vmatpush.bf16.xpose.msra.mxu0 0
        %661 = vmatpush.bf16.xpose.msra.mxu0 0
        %662 = vmatpush.bf16.xpose.msra.mxu0 0
        %663 = vmatpush.bf16.xpose.msra.mxu0 %v654
        %664 = vmatmul.bf16.gmra.mxu0 %v651
        %v665 = vpop.f32.mrf.mxu0
        %v666 = vadd.f32 0.0, %v665
        %v667 = vpop.f32.mrf.mxu0
        %668 = vdwg.mxu0
        %v670 = vunpack.c.l.b16 %v641
        %v671 = vpack.c.b16 %v670, %v670
        %672 = vrot.lane.b32.xlu0 %v671, 96
        %v673 = vpop.permute.xlu0 %672
        %v675 = vsel %vm649, %v637, 0
        %v678 = vsel %vm649, %v673, 0
        %680 = vmatpush.bf16.xpose.msra.mxu0 0
        %681 = vmatpush.bf16.xpose.msra.mxu0 0
        %682 = vmatpush.bf16.xpose.msra.mxu0 0
        %683 = vmatpush.bf16.xpose.msra.mxu0 0
        %684 = vmatpush.bf16.xpose.msra.mxu0 0
        %685 = vmatpush.bf16.xpose.msra.mxu0 0
        %686 = vmatpush.bf16.xpose.msra.mxu0 0
        %687 = vmatpush.bf16.xpose.msra.mxu0 %v678
        %688 = vmatmul.bf16.gmra.mxu0 %v675
        %v689 = vpop.f32.mrf.mxu0
        %v690 = vadd.f32 0.0, %v689
        %v691 = vpop.f32.mrf.mxu0
        %692 = vdwg.mxu0
        %v694 = vunpack.c.l.b16 %v642
        %v695 = vpack.c.b16 %v694, %v694
        %696 = vrot.lane.b32.xlu0 %v695, 96
        %v697 = vpop.permute.xlu0 %696
        %v699 = vsel %vm649, %v638, 0
        %v702 = vsel %vm649, %v697, 0
        %704 = vmatpush.bf16.xpose.msra.mxu0 0
        %705 = vmatpush.bf16.xpose.msra.mxu0 0
        %706 = vmatpush.bf16.xpose.msra.mxu0 0
        %707 = vmatpush.bf16.xpose.msra.mxu0 0
        %708 = vmatpush.bf16.xpose.msra.mxu0 0
        %709 = vmatpush.bf16.xpose.msra.mxu0 0
        %710 = vmatpush.bf16.xpose.msra.mxu0 0
        %711 = vmatpush.bf16.xpose.msra.mxu0 %v702
        %712 = vmatmul.bf16.gmra.mxu0 %v699
        %v713 = vpop.f32.mrf.mxu0
        %v714 = vadd.f32 0.0, %v713
        %v715 = vpop.f32.mrf.mxu0
        %716 = vdwg.mxu0
        %v718 = vunpack.c.l.b16 %v643
        %v719 = vpack.c.b16 %v718, %v718
        %720 = vrot.lane.b32.xlu0 %v719, 96
        %v721 = vpop.permute.xlu0 %720
        %v723 = vsel %vm649, %v639, 0
        %v726 = vsel %vm649, %v721, 0
        %728 = vmatpush.bf16.xpose.msra.mxu0 0
        %729 = vmatpush.bf16.xpose.msra.mxu0 0
        %730 = vmatpush.bf16.xpose.msra.mxu0 0
        %731 = vmatpush.bf16.xpose.msra.mxu0 0
        %732 = vmatpush.bf16.xpose.msra.mxu0 0
        %733 = vmatpush.bf16.xpose.msra.mxu0 0
        %734 = vmatpush.bf16.xpose.msra.mxu0 0
        %735 = vmatpush.bf16.xpose.msra.mxu0 %v726
        %736 = vmatmul.bf16.gmra.mxu0 %v723
        %v737 = vpop.f32.mrf.mxu0
        %v738 = vadd.f32 0.0, %v737
        %v739 = vpop.f32.mrf.mxu0
        %740 = vdwg.mxu0
        %v741 = vsel %vm649, %v666, -inf
        %742 = vmax.xlane.f32.xlu0 %v741
        %v743 = vpop.xlane.xlu0 %742
        %v744 = vsel %vm649, %v690, -inf
        %745 = vmax.xlane.f32.xlu0 %v744
        %v746 = vpop.xlane.xlu0 %745
        %v747 = vsel %vm649, %v714, -inf
        %748 = vmax.xlane.f32.xlu0 %v747
        %v749 = vpop.xlane.xlu0 %748
        %v750 = vsel %vm649, %v738, -inf
        %751 = vmax.xlane.f32.xlu0 %v750
        %v752 = vpop.xlane.xlu0 %751
        %v753 = vsub.f32 %v666, %v743
        %v754 = vsub.f32 %v690, %v746
        %v755 = vsub.f32 %v714, %v749
        %v756 = vsub.f32 %v738, %v752
        %v757 = vmul.f32 %v753, 1.442695
        %v758 = vpow.pop %v757
        %v759 = vmul.f32 %v754, 1.442695
        %v760 = vpow.pop %v759
        %v761 = vmul.f32 %v755, 1.442695
        %v762 = vpow.pop %v761
        %v763 = vmul.f32 %v756, 1.442695
        %v764 = vpow.pop %v763
        %v765 = vsel %vm649, %v758, 0.0
        %766 = vadd.xlane.f32.xlu0 %v765
        %v767 = vpop.xlane.xlu0 %766
        %v768 = vsel %vm649, %v760, 0.0
        %769 = vadd.xlane.f32.xlu0 %v768
        %v770 = vpop.xlane.xlu0 %769
        %v771 = vsel %vm649, %v762, 0.0
        %772 = vadd.xlane.f32.xlu0 %v771
        %v773 = vpop.xlane.xlu0 %772
        %v774 = vsel %vm649, %v764, 0.0
        %775 = vadd.xlane.f32.xlu0 %v774
        %v776 = vpop.xlane.xlu0 %775
        %v777 = vrcp.pop %v767
        %v778 = vrcp.pop %v770
        %v779 = vrcp.pop %v773
        %v780 = vrcp.pop %v776
        %v781 = vmul.f32 %v758, %v777
        %v782 = vmul.f32 %v760, %v778
        %v783 = vmul.f32 %v762, %v779
        %v784 = vmul.f32 %v764, %v780
        %v785 = vpack.c.bf16 %v781, %v781
        %v786 = vpack.c.bf16 %v782, %v782
        %v787 = vpack.c.bf16 %v783, %v783
        %v788 = vpack.c.bf16 %v784, %v784
        %789 = vrot.lane.b32.xlu0 %v646, 64
        %v790 = vpop.permute.xlu0 %789
        %v792 = vsel %vm649, %v785, 0
        %vm794 = vcmask 1043456
        %v796 = vsel %vm794, %v790, 0
        %798 = vmatpush.bf16.msra.mxu0 0
        %799 = vmatpush.bf16.msra.mxu0 0
        %800 = vmatpush.bf16.msra.mxu0 0
        %801 = vmatpush.bf16.msra.mxu0 0
        %802 = vmatpush.bf16.msra.mxu0 0
        %803 = vmatpush.bf16.msra.mxu0 0
        %804 = vmatpush.bf16.msra.mxu0 0
        %805 = vmatpush.bf16.msra.mxu0 %v796
        %806 = vmatmul.bf16.gmra.mxu0 %v792
        %v807 = vpop.f32.mrf.mxu0
        %v808 = vadd.f32 0.0, %v807
        %v809 = vpop.f32.mrf.mxu0
        %810 = vdwg.mxu0
        %811 = vrot.lane.b32.xlu0 %v671, 64
        %v812 = vpop.permute.xlu0 %811
        %v814 = vsel %vm649, %v786, 0
        %v817 = vsel %vm794, %v812, 0
        %819 = vmatpush.bf16.msra.mxu0 0
        %820 = vmatpush.bf16.msra.mxu0 0
        %821 = vmatpush.bf16.msra.mxu0 0
        %822 = vmatpush.bf16.msra.mxu0 0
        %823 = vmatpush.bf16.msra.mxu0 0
        %824 = vmatpush.bf16.msra.mxu0 0
        %825 = vmatpush.bf16.msra.mxu0 0
        %826 = vmatpush.bf16.msra.mxu0 %v817
        %827 = vmatmul.bf16.gmra.mxu0 %v814
        %v828 = vpop.f32.mrf.mxu0
        %v829 = vadd.f32 0.0, %v828
        %v830 = vpop.f32.mrf.mxu0
        %831 = vdwg.mxu0
        %832 = vrot.lane.b32.xlu0 %v695, 64
        %v833 = vpop.permute.xlu0 %832
        %v835 = vsel %vm649, %v787, 0
        %v838 = vsel %vm794, %v833, 0
        %840 = vmatpush.bf16.msra.mxu0 0
        %841 = vmatpush.bf16.msra.mxu0 0
        %842 = vmatpush.bf16.msra.mxu0 0
        %843 = vmatpush.bf16.msra.mxu0 0
        %844 = vmatpush.bf16.msra.mxu0 0
        %845 = vmatpush.bf16.msra.mxu0 0
        %846 = vmatpush.bf16.msra.mxu0 0
        %847 = vmatpush.bf16.msra.mxu0 %v838
        %848 = vmatmul.bf16.gmra.mxu0 %v835
        %v849 = vpop.f32.mrf.mxu0
        %v850 = vadd.f32 0.0, %v849
        %v851 = vpop.f32.mrf.mxu0
        %852 = vdwg.mxu0
        %853 = vrot.lane.b32.xlu0 %v719, 64
        %v854 = vpop.permute.xlu0 %853
        %v856 = vsel %vm649, %v788, 0
        %v859 = vsel %vm794, %v854, 0
        %861 = vmatpush.bf16.msra.mxu0 0
        %862 = vmatpush.bf16.msra.mxu0 0
        %863 = vmatpush.bf16.msra.mxu0 0
        %864 = vmatpush.bf16.msra.mxu0 0
        %865 = vmatpush.bf16.msra.mxu0 0
        %866 = vmatpush.bf16.msra.mxu0 0
        %867 = vmatpush.bf16.msra.mxu0 0
        %868 = vmatpush.bf16.msra.mxu0 %v859
        %869 = vmatmul.bf16.gmra.mxu0 %v856
        %v870 = vpop.f32.mrf.mxu0
        %v871 = vadd.f32 0.0, %v870
        %v872 = vpop.f32.mrf.mxu0
        %873 = vdwg.mxu0
        %v875 = vunpack.c.l.b16 %v636
        %v876 = vpack.c.b16 %v875, %v875
        %877 = vrot.lane.b32.xlu0 %v876, 120
        %v878 = vpop.permute.xlu0 %877
        %879 = vrot.lane.b32.xlu0 %v646, 88
        %v880 = vpop.permute.xlu0 %879
        %v882 = vsel %vm649, %v878, 0
        %v885 = vsel %vm649, %v880, 0
        %887 = vmatpush.bf16.xpose.msra.mxu0 0
        %888 = vmatpush.bf16.xpose.msra.mxu0 0
        %889 = vmatpush.bf16.xpose.msra.mxu0 0
        %890 = vmatpush.bf16.xpose.msra.mxu0 0
        %891 = vmatpush.bf16.xpose.msra.mxu0 0
        %892 = vmatpush.bf16.xpose.msra.mxu0 0
        %893 = vmatpush.bf16.xpose.msra.mxu0 0
        %894 = vmatpush.bf16.xpose.msra.mxu0 %v885
        %895 = vmatmul.bf16.gmra.mxu0 %v882
        %v896 = vpop.f32.mrf.mxu0
        %v897 = vadd.f32 0.0, %v896
        %v898 = vpop.f32.mrf.mxu0
        %899 = vdwg.mxu0
        %v901 = vunpack.c.l.b16 %v637
        %v902 = vpack.c.b16 %v901, %v901
        %903 = vrot.lane.b32.xlu0 %v902, 120
        %v904 = vpop.permute.xlu0 %903
        %905 = vrot.lane.b32.xlu0 %v671, 88
        %v906 = vpop.permute.xlu0 %905
        %v908 = vsel %vm649, %v904, 0
        %v911 = vsel %vm649, %v906, 0
        %913 = vmatpush.bf16.xpose.msra.mxu0 0
        %914 = vmatpush.bf16.xpose.msra.mxu0 0
        %915 = vmatpush.bf16.xpose.msra.mxu0 0
        %916 = vmatpush.bf16.xpose.msra.mxu0 0
        %917 = vmatpush.bf16.xpose.msra.mxu0 0
        %918 = vmatpush.bf16.xpose.msra.mxu0 0
        %919 = vmatpush.bf16.xpose.msra.mxu0 0
        %920 = vmatpush.bf16.xpose.msra.mxu0 %v911
        %921 = vmatmul.bf16.gmra.mxu0 %v908
        %v922 = vpop.f32.mrf.mxu0
        %v923 = vadd.f32 0.0, %v922
        %v924 = vpop.f32.mrf.mxu0
        %925 = vdwg.mxu0
        %v927 = vunpack.c.l.b16 %v638
        %v928 = vpack.c.b16 %v927, %v927
        %929 = vrot.lane.b32.xlu0 %v928, 120
        %v930 = vpop.permute.xlu0 %929
        %931 = vrot.lane.b32.xlu0 %v695, 88
        %v932 = vpop.permute.xlu0 %931
        %v934 = vsel %vm649, %v930, 0
        %v937 = vsel %vm649, %v932, 0
        %939 = vmatpush.bf16.xpose.msra.mxu0 0
        %940 = vmatpush.bf16.xpose.msra.mxu0 0
        %941 = vmatpush.bf16.xpose.msra.mxu0 0
        %942 = vmatpush.bf16.xpose.msra.mxu0 0
        %943 = vmatpush.bf16.xpose.msra.mxu0 0
        %944 = vmatpush.bf16.xpose.msra.mxu0 0
        %945 = vmatpush.bf16.xpose.msra.mxu0 0
        %946 = vmatpush.bf16.xpose.msra.mxu0 %v937
        %947 = vmatmul.bf16.gmra.mxu0 %v934
        %v948 = vpop.f32.mrf.mxu0
        %v949 = vadd.f32 0.0, %v948
        %v950 = vpop.f32.mrf.mxu0
        %951 = vdwg.mxu0
        %v953 = vunpack.c.l.b16 %v639
        %v954 = vpack.c.b16 %v953, %v953
        %955 = vrot.lane.b32.xlu0 %v954, 120
        %v956 = vpop.permute.xlu0 %955
        %957 = vrot.lane.b32.xlu0 %v719, 88
        %v958 = vpop.permute.xlu0 %957
        %v960 = vsel %vm649, %v956, 0
        %v963 = vsel %vm649, %v958, 0
        %965 = vmatpush.bf16.xpose.msra.mxu0 0
        %966 = vmatpush.bf16.xpose.msra.mxu0 0
        %967 = vmatpush.bf16.xpose.msra.mxu0 0
        %968 = vmatpush.bf16.xpose.msra.mxu0 0
        %969 = vmatpush.bf16.xpose.msra.mxu0 0
        %970 = vmatpush.bf16.xpose.msra.mxu0 0
        %971 = vmatpush.bf16.xpose.msra.mxu0 0
        %972 = vmatpush.bf16.xpose.msra.mxu0 %v963
        %973 = vmatmul.bf16.gmra.mxu0 %v960
        %v974 = vpop.f32.mrf.mxu0
        %v975 = vadd.f32 0.0, %v974
        %v976 = vpop.f32.mrf.mxu0
        %977 = vdwg.mxu0
        %v978 = vsel %vm649, %v897, -inf
        %979 = vmax.xlane.f32.xlu0 %v978
        %v980 = vpop.xlane.xlu0 %979
        %v981 = vsel %vm649, %v923, -inf
        %982 = vmax.xlane.f32.xlu0 %v981
        %v983 = vpop.xlane.xlu0 %982
        %v984 = vsel %vm649, %v949, -inf
        %985 = vmax.xlane.f32.xlu0 %v984
        %v986 = vpop.xlane.xlu0 %985
        %v987 = vsel %vm649, %v975, -inf
        %988 = vmax.xlane.f32.xlu0 %v987
        %v989 = vpop.xlane.xlu0 %988
        %v990 = vsub.f32 %v897, %v980
        %v991 = vsub.f32 %v923, %v983
        %v992 = vsub.f32 %v949, %v986
        %v993 = vsub.f32 %v975, %v989
        %v994 = vmul.f32 %v990, 1.442695
        %v995 = vpow.pop %v994
        %v996 = vmul.f32 %v991, 1.442695
        %v997 = vpow.pop %v996
        %v998 = vmul.f32 %v992, 1.442695
        %v999 = vpow.pop %v998
        %v1000 = vmul.f32 %v993, 1.442695
        %v1001 = vpow.pop %v1000
        %v1002 = vsel %vm649, %v995, 0.0
        %1003 = vadd.xlane.f32.xlu0 %v1002
        %v1004 = vpop.xlane.xlu0 %1003
        %v1005 = vsel %vm649, %v997, 0.0
        %1006 = vadd.xlane.f32.xlu0 %v1005
        %v1007 = vpop.xlane.xlu0 %1006
        %v1008 = vsel %vm649, %v999, 0.0
        %1009 = vadd.xlane.f32.xlu0 %v1008
        %v1010 = vpop.xlane.xlu0 %1009
        %v1011 = vsel %vm649, %v1001, 0.0
        %1012 = vadd.xlane.f32.xlu0 %v1011
        %v1013 = vpop.xlane.xlu0 %1012
        %v1014 = vrcp.pop %v1004
        %v1015 = vrcp.pop %v1007
        %v1016 = vrcp.pop %v1010
        %v1017 = vrcp.pop %v1013
        %v1018 = vmul.f32 %v995, %v1014
        %v1019 = vmul.f32 %v997, %v1015
        %v1020 = vmul.f32 %v999, %v1016
        %v1021 = vmul.f32 %v1001, %v1017
        %v1022 = vpack.c.bf16 %v1018, %v1018
        %v1023 = vpack.c.bf16 %v1019, %v1019
        %v1024 = vpack.c.bf16 %v1020, %v1020
        %v1025 = vpack.c.bf16 %v1021, %v1021
        %1026 = vrot.lane.b32.xlu0 %v646, 56
        %v1027 = vpop.permute.xlu0 %1026
        %v1029 = vsel %vm649, %v1022, 0
        %v1032 = vsel %vm794, %v1027, 0
        %1034 = vmatpush.bf16.msra.mxu0 0
        %1035 = vmatpush.bf16.msra.mxu0 0
        %1036 = vmatpush.bf16.msra.mxu0 0
        %1037 = vmatpush.bf16.msra.mxu0 0
        %1038 = vmatpush.bf16.msra.mxu0 0
        %1039 = vmatpush.bf16.msra.mxu0 0
        %1040 = vmatpush.bf16.msra.mxu0 0
        %1041 = vmatpush.bf16.msra.mxu0 %v1032
        %1042 = vmatmul.bf16.gmra.mxu0 %v1029
        %v1043 = vpop.f32.mrf.mxu0
        %v1044 = vadd.f32 0.0, %v1043
        %v1045 = vpop.f32.mrf.mxu0
        %1046 = vdwg.mxu0
        %1047 = vrot.lane.b32.xlu0 %v671, 56
        %v1048 = vpop.permute.xlu0 %1047
        %v1050 = vsel %vm649, %v1023, 0
        %v1053 = vsel %vm794, %v1048, 0
        %1055 = vmatpush.bf16.msra.mxu0 0
        %1056 = vmatpush.bf16.msra.mxu0 0
        %1057 = vmatpush.bf16.msra.mxu0 0
        %1058 = vmatpush.bf16.msra.mxu0 0
        %1059 = vmatpush.bf16.msra.mxu0 0
        %1060 = vmatpush.bf16.msra.mxu0 0
        %1061 = vmatpush.bf16.msra.mxu0 0
        %1062 = vmatpush.bf16.msra.mxu0 %v1053
        %1063 = vmatmul.bf16.gmra.mxu0 %v1050
        %v1064 = vpop.f32.mrf.mxu0
        %v1065 = vadd.f32 0.0, %v1064
        %v1066 = vpop.f32.mrf.mxu0
        %1067 = vdwg.mxu0
        %1068 = vrot.lane.b32.xlu0 %v695, 56
        %v1069 = vpop.permute.xlu0 %1068
        %v1071 = vsel %vm649, %v1024, 0
        %v1074 = vsel %vm794, %v1069, 0
        %1076 = vmatpush.bf16.msra.mxu0 0
        %1077 = vmatpush.bf16.msra.mxu0 0
        %1078 = vmatpush.bf16.msra.mxu0 0
        %1079 = vmatpush.bf16.msra.mxu0 0
        %1080 = vmatpush.bf16.msra.mxu0 0
        %1081 = vmatpush.bf16.msra.mxu0 0
        %1082 = vmatpush.bf16.msra.mxu0 0
        %1083 = vmatpush.bf16.msra.mxu0 %v1074
        %1084 = vmatmul.bf16.gmra.mxu0 %v1071
        %v1085 = vpop.f32.mrf.mxu0
        %v1086 = vadd.f32 0.0, %v1085
        %v1087 = vpop.f32.mrf.mxu0
        %1088 = vdwg.mxu0
        %1089 = vrot.lane.b32.xlu0 %v719, 56
        %v1090 = vpop.permute.xlu0 %1089
        %v1092 = vsel %vm649, %v1025, 0
        %v1095 = vsel %vm794, %v1090, 0
        %1097 = vmatpush.bf16.msra.mxu0 0
        %1098 = vmatpush.bf16.msra.mxu0 0
        %1099 = vmatpush.bf16.msra.mxu0 0
        %1100 = vmatpush.bf16.msra.mxu0 0
        %1101 = vmatpush.bf16.msra.mxu0 0
        %1102 = vmatpush.bf16.msra.mxu0 0
        %1103 = vmatpush.bf16.msra.mxu0 0
        %1104 = vmatpush.bf16.msra.mxu0 %v1095
        %1105 = vmatmul.bf16.gmra.mxu0 %v1092
        %v1106 = vpop.f32.mrf.mxu0
        %v1107 = vadd.f32 0.0, %v1106
        %v1108 = vpop.f32.mrf.mxu0
        %1109 = vdwg.mxu0
        %1110 = vrot.lane.b32.xlu0 %v876, 112
        %v1111 = vpop.permute.xlu0 %1110
        %1112 = vrot.lane.b32.xlu0 %v646, 80
        %v1113 = vpop.permute.xlu0 %1112
        %v1115 = vsel %vm649, %v1111, 0
        %v1118 = vsel %vm649, %v1113, 0
        %1120 = vmatpush.bf16.xpose.msra.mxu0 0
        %1121 = vmatpush.bf16.xpose.msra.mxu0 0
        %1122 = vmatpush.bf16.xpose.msra.mxu0 0
        %1123 = vmatpush.bf16.xpose.msra.mxu0 0
        %1124 = vmatpush.bf16.xpose.msra.mxu0 0
        %1125 = vmatpush.bf16.xpose.msra.mxu0 0
        %1126 = vmatpush.bf16.xpose.msra.mxu0 0
        %1127 = vmatpush.bf16.xpose.msra.mxu0 %v1118
        %1128 = vmatmul.bf16.gmra.mxu0 %v1115
        %v1129 = vpop.f32.mrf.mxu0
        %v1130 = vadd.f32 0.0, %v1129
        %v1131 = vpop.f32.mrf.mxu0
        %1132 = vdwg.mxu0
        %1133 = vrot.lane.b32.xlu0 %v902, 112
        %v1134 = vpop.permute.xlu0 %1133
        %1135 = vrot.lane.b32.xlu0 %v671, 80
        %v1136 = vpop.permute.xlu0 %1135
        %v1138 = vsel %vm649, %v1134, 0
        %v1141 = vsel %vm649, %v1136, 0
        %1143 = vmatpush.bf16.xpose.msra.mxu0 0
        %1144 = vmatpush.bf16.xpose.msra.mxu0 0
        %1145 = vmatpush.bf16.xpose.msra.mxu0 0
        %1146 = vmatpush.bf16.xpose.msra.mxu0 0
        %1147 = vmatpush.bf16.xpose.msra.mxu0 0
        %1148 = vmatpush.bf16.xpose.msra.mxu0 0
        %1149 = vmatpush.bf16.xpose.msra.mxu0 0
        %1150 = vmatpush.bf16.xpose.msra.mxu0 %v1141
        %1151 = vmatmul.bf16.gmra.mxu0 %v1138
        %v1152 = vpop.f32.mrf.mxu0
        %v1153 = vadd.f32 0.0, %v1152
        %v1154 = vpop.f32.mrf.mxu0
        %1155 = vdwg.mxu0
        %1156 = vrot.lane.b32.xlu0 %v928, 112
        %v1157 = vpop.permute.xlu0 %1156
        %1158 = vrot.lane.b32.xlu0 %v695, 80
        %v1159 = vpop.permute.xlu0 %1158
        %v1161 = vsel %vm649, %v1157, 0
        %v1164 = vsel %vm649, %v1159, 0
        %1166 = vmatpush.bf16.xpose.msra.mxu0 0
        %1167 = vmatpush.bf16.xpose.msra.mxu0 0
        %1168 = vmatpush.bf16.xpose.msra.mxu0 0
        %1169 = vmatpush.bf16.xpose.msra.mxu0 0
        %1170 = vmatpush.bf16.xpose.msra.mxu0 0
        %1171 = vmatpush.bf16.xpose.msra.mxu0 0
        %1172 = vmatpush.bf16.xpose.msra.mxu0 0
        %1173 = vmatpush.bf16.xpose.msra.mxu0 %v1164
        %1174 = vmatmul.bf16.gmra.mxu0 %v1161
        %v1175 = vpop.f32.mrf.mxu0
        %v1176 = vadd.f32 0.0, %v1175
        %v1177 = vpop.f32.mrf.mxu0
        %1178 = vdwg.mxu0
        %1179 = vrot.lane.b32.xlu0 %v954, 112
        %v1180 = vpop.permute.xlu0 %1179
        %1181 = vrot.lane.b32.xlu0 %v719, 80
        %v1182 = vpop.permute.xlu0 %1181
        %v1184 = vsel %vm649, %v1180, 0
        %v1187 = vsel %vm649, %v1182, 0
        %1189 = vmatpush.bf16.xpose.msra.mxu0 0
        %1190 = vmatpush.bf16.xpose.msra.mxu0 0
        %1191 = vmatpush.bf16.xpose.msra.mxu0 0
        %1192 = vmatpush.bf16.xpose.msra.mxu0 0
        %1193 = vmatpush.bf16.xpose.msra.mxu0 0
        %1194 = vmatpush.bf16.xpose.msra.mxu0 0
        %1195 = vmatpush.bf16.xpose.msra.mxu0 0
        %1196 = vmatpush.bf16.xpose.msra.mxu0 %v1187
        %1197 = vmatmul.bf16.gmra.mxu0 %v1184
        %v1198 = vpop.f32.mrf.mxu0
        %v1199 = vadd.f32 0.0, %v1198
        %v1200 = vpop.f32.mrf.mxu0
        %1201 = vdwg.mxu0
        %v1202 = vsel %vm649, %v1130, -inf
        %1203 = vmax.xlane.f32.xlu0 %v1202
        %v1204 = vpop.xlane.xlu0 %1203
        %v1205 = vsel %vm649, %v1153, -inf
        %1206 = vmax.xlane.f32.xlu0 %v1205
        %v1207 = vpop.xlane.xlu0 %1206
        %v1208 = vsel %vm649, %v1176, -inf
        %1209 = vmax.xlane.f32.xlu0 %v1208
        %v1210 = vpop.xlane.xlu0 %1209
        %v1211 = vsel %vm649, %v1199, -inf
        %1212 = vmax.xlane.f32.xlu0 %v1211
        %v1213 = vpop.xlane.xlu0 %1212
        %v1214 = vsub.f32 %v1130, %v1204
        %v1215 = vsub.f32 %v1153, %v1207
        %v1216 = vsub.f32 %v1176, %v1210
        %v1217 = vsub.f32 %v1199, %v1213
        %v1218 = vmul.f32 %v1214, 1.442695
        %v1219 = vpow.pop %v1218
        %v1220 = vmul.f32 %v1215, 1.442695
        %v1221 = vpow.pop %v1220
        %v1222 = vmul.f32 %v1216, 1.442695
        %v1223 = vpow.pop %v1222
        %v1224 = vmul.f32 %v1217, 1.442695
        %v1225 = vpow.pop %v1224
        %v1226 = vsel %vm649, %v1219, 0.0
        %1227 = vadd.xlane.f32.xlu0 %v1226
        %v1228 = vpop.xlane.xlu0 %1227
        %v1229 = vsel %vm649, %v1221, 0.0
        %1230 = vadd.xlane.f32.xlu0 %v1229
        %v1231 = vpop.xlane.xlu0 %1230
        %v1232 = vsel %vm649, %v1223, 0.0
        %1233 = vadd.xlane.f32.xlu0 %v1232
        %v1234 = vpop.xlane.xlu0 %1233
        %v1235 = vsel %vm649, %v1225, 0.0
        %1236 = vadd.xlane.f32.xlu0 %v1235
        %v1237 = vpop.xlane.xlu0 %1236
        %v1238 = vrcp.pop %v1228
        %v1239 = vrcp.pop %v1231
        %v1240 = vrcp.pop %v1234
        %v1241 = vrcp.pop %v1237
        %v1242 = vmul.f32 %v1219, %v1238
        %v1243 = vmul.f32 %v1221, %v1239
        %v1244 = vmul.f32 %v1223, %v1240
        %v1245 = vmul.f32 %v1225, %v1241
        %v1246 = vpack.c.bf16 %v1242, %v1242
        %v1247 = vpack.c.bf16 %v1243, %v1243
        %v1248 = vpack.c.bf16 %v1244, %v1244
        %v1249 = vpack.c.bf16 %v1245, %v1245
        %1250 = vrot.lane.b32.xlu0 %v646, 48
        %v1251 = vpop.permute.xlu0 %1250
        %v1253 = vsel %vm649, %v1246, 0
        %v1256 = vsel %vm794, %v1251, 0
        %1258 = vmatpush.bf16.msra.mxu0 0
        %1259 = vmatpush.bf16.msra.mxu0 0
        %1260 = vmatpush.bf16.msra.mxu0 0
        %1261 = vmatpush.bf16.msra.mxu0 0
        %1262 = vmatpush.bf16.msra.mxu0 0
        %1263 = vmatpush.bf16.msra.mxu0 0
        %1264 = vmatpush.bf16.msra.mxu0 0
        %1265 = vmatpush.bf16.msra.mxu0 %v1256
        %1266 = vmatmul.bf16.gmra.mxu0 %v1253
        %v1267 = vpop.f32.mrf.mxu0
        %v1268 = vadd.f32 0.0, %v1267
        %v1269 = vpop.f32.mrf.mxu0
        %1270 = vdwg.mxu0
        %1271 = vrot.lane.b32.xlu0 %v671, 48
        %v1272 = vpop.permute.xlu0 %1271
        %v1274 = vsel %vm649, %v1247, 0
        %v1277 = vsel %vm794, %v1272, 0
        %1279 = vmatpush.bf16.msra.mxu0 0
        %1280 = vmatpush.bf16.msra.mxu0 0
        %1281 = vmatpush.bf16.msra.mxu0 0
        %1282 = vmatpush.bf16.msra.mxu0 0
        %1283 = vmatpush.bf16.msra.mxu0 0
        %1284 = vmatpush.bf16.msra.mxu0 0
        %1285 = vmatpush.bf16.msra.mxu0 0
        %1286 = vmatpush.bf16.msra.mxu0 %v1277
        %1287 = vmatmul.bf16.gmra.mxu0 %v1274
        %v1288 = vpop.f32.mrf.mxu0
        %v1289 = vadd.f32 0.0, %v1288
        %v1290 = vpop.f32.mrf.mxu0
        %1291 = vdwg.mxu0
        %1292 = vrot.lane.b32.xlu0 %v695, 48
        %v1293 = vpop.permute.xlu0 %1292
        %v1295 = vsel %vm649, %v1248, 0
        %v1298 = vsel %vm794, %v1293, 0
        %1300 = vmatpush.bf16.msra.mxu0 0
        %1301 = vmatpush.bf16.msra.mxu0 0
        %1302 = vmatpush.bf16.msra.mxu0 0
        %1303 = vmatpush.bf16.msra.mxu0 0
        %1304 = vmatpush.bf16.msra.mxu0 0
        %1305 = vmatpush.bf16.msra.mxu0 0
        %1306 = vmatpush.bf16.msra.mxu0 0
        %1307 = vmatpush.bf16.msra.mxu0 %v1298
        %1308 = vmatmul.bf16.gmra.mxu0 %v1295
        %v1309 = vpop.f32.mrf.mxu0
        %v1310 = vadd.f32 0.0, %v1309
        %v1311 = vpop.f32.mrf.mxu0
        %1312 = vdwg.mxu0
        %1313 = vrot.lane.b32.xlu0 %v719, 48
        %v1314 = vpop.permute.xlu0 %1313
        %v1316 = vsel %vm649, %v1249, 0
        %v1319 = vsel %vm794, %v1314, 0
        %1321 = vmatpush.bf16.msra.mxu0 0
        %1322 = vmatpush.bf16.msra.mxu0 0
        %1323 = vmatpush.bf16.msra.mxu0 0
        %1324 = vmatpush.bf16.msra.mxu0 0
        %1325 = vmatpush.bf16.msra.mxu0 0
        %1326 = vmatpush.bf16.msra.mxu0 0
        %1327 = vmatpush.bf16.msra.mxu0 0
        %1328 = vmatpush.bf16.msra.mxu0 %v1319
        %1329 = vmatmul.bf16.gmra.mxu0 %v1316
        %v1330 = vpop.f32.mrf.mxu0
        %v1331 = vadd.f32 0.0, %v1330
        %v1332 = vpop.f32.mrf.mxu0
        %1333 = vdwg.mxu0
        %1334 = vrot.lane.b32.xlu0 %v876, 104
        %v1335 = vpop.permute.xlu0 %1334
        %1336 = vrot.lane.b32.xlu0 %v646, 72
        %v1337 = vpop.permute.xlu0 %1336
        %v1339 = vsel %vm649, %v1335, 0
        %v1342 = vsel %vm649, %v1337, 0
        %1344 = vmatpush.bf16.xpose.msra.mxu0 0
        %1345 = vmatpush.bf16.xpose.msra.mxu0 0
        %1346 = vmatpush.bf16.xpose.msra.mxu0 0
        %1347 = vmatpush.bf16.xpose.msra.mxu0 0
        %1348 = vmatpush.bf16.xpose.msra.mxu0 0
        %1349 = vmatpush.bf16.xpose.msra.mxu0 0
        %1350 = vmatpush.bf16.xpose.msra.mxu0 0
        %1351 = vmatpush.bf16.xpose.msra.mxu0 %v1342
        %1352 = vmatmul.bf16.gmra.mxu0 %v1339
        %v1353 = vpop.f32.mrf.mxu0
        %v1354 = vadd.f32 0.0, %v1353
        %v1355 = vpop.f32.mrf.mxu0
        %1356 = vdwg.mxu0
        %1357 = vrot.lane.b32.xlu0 %v902, 104
        %v1358 = vpop.permute.xlu0 %1357
        %1359 = vrot.lane.b32.xlu0 %v671, 72
        %v1360 = vpop.permute.xlu0 %1359
        %v1362 = vsel %vm649, %v1358, 0
        %v1365 = vsel %vm649, %v1360, 0
        %1367 = vmatpush.bf16.xpose.msra.mxu0 0
        %1368 = vmatpush.bf16.xpose.msra.mxu0 0
        %1369 = vmatpush.bf16.xpose.msra.mxu0 0
        %1370 = vmatpush.bf16.xpose.msra.mxu0 0
        %1371 = vmatpush.bf16.xpose.msra.mxu0 0
        %1372 = vmatpush.bf16.xpose.msra.mxu0 0
        %1373 = vmatpush.bf16.xpose.msra.mxu0 0
        %1374 = vmatpush.bf16.xpose.msra.mxu0 %v1365
        %1375 = vmatmul.bf16.gmra.mxu0 %v1362
        %v1376 = vpop.f32.mrf.mxu0
        %v1377 = vadd.f32 0.0, %v1376
        %v1378 = vpop.f32.mrf.mxu0
        %1379 = vdwg.mxu0
        %1380 = vrot.lane.b32.xlu0 %v928, 104
        %v1381 = vpop.permute.xlu0 %1380
        %1382 = vrot.lane.b32.xlu0 %v695, 72
        %v1383 = vpop.permute.xlu0 %1382
        %v1385 = vsel %vm649, %v1381, 0
        %v1388 = vsel %vm649, %v1383, 0
        %1390 = vmatpush.bf16.xpose.msra.mxu0 0
        %1391 = vmatpush.bf16.xpose.msra.mxu0 0
        %1392 = vmatpush.bf16.xpose.msra.mxu0 0
        %1393 = vmatpush.bf16.xpose.msra.mxu0 0
        %1394 = vmatpush.bf16.xpose.msra.mxu0 0
        %1395 = vmatpush.bf16.xpose.msra.mxu0 0
        %1396 = vmatpush.bf16.xpose.msra.mxu0 0
        %1397 = vmatpush.bf16.xpose.msra.mxu0 %v1388
        %1398 = vmatmul.bf16.gmra.mxu0 %v1385
        %v1399 = vpop.f32.mrf.mxu0
        %v1400 = vadd.f32 0.0, %v1399
        %v1401 = vpop.f32.mrf.mxu0
        %1402 = vdwg.mxu0
        %1403 = vrot.lane.b32.xlu0 %v954, 104
        %v1404 = vpop.permute.xlu0 %1403
        %1405 = vrot.lane.b32.xlu0 %v719, 72
        %v1406 = vpop.permute.xlu0 %1405
        %v1408 = vsel %vm649, %v1404, 0
        %v1411 = vsel %vm649, %v1406, 0
        %1413 = vmatpush.bf16.xpose.msra.mxu0 0
        %1414 = vmatpush.bf16.xpose.msra.mxu0 0
        %1415 = vmatpush.bf16.xpose.msra.mxu0 0
        %1416 = vmatpush.bf16.xpose.msra.mxu0 0
        %1417 = vmatpush.bf16.xpose.msra.mxu0 0
        %1418 = vmatpush.bf16.xpose.msra.mxu0 0
        %1419 = vmatpush.bf16.xpose.msra.mxu0 0
        %1420 = vmatpush.bf16.xpose.msra.mxu0 %v1411
        %1421 = vmatmul.bf16.gmra.mxu0 %v1408
        %v1422 = vpop.f32.mrf.mxu0
        %v1423 = vadd.f32 0.0, %v1422
        %v1424 = vpop.f32.mrf.mxu0
        %1425 = vdwg.mxu0
        %v1426 = vsel %vm649, %v1354, -inf
        %1427 = vmax.xlane.f32.xlu0 %v1426
        %v1428 = vpop.xlane.xlu0 %1427
        %v1429 = vsel %vm649, %v1377, -inf
        %1430 = vmax.xlane.f32.xlu0 %v1429
        %v1431 = vpop.xlane.xlu0 %1430
        %v1432 = vsel %vm649, %v1400, -inf
        %1433 = vmax.xlane.f32.xlu0 %v1432
        %v1434 = vpop.xlane.xlu0 %1433
        %v1435 = vsel %vm649, %v1423, -inf
        %1436 = vmax.xlane.f32.xlu0 %v1435
        %v1437 = vpop.xlane.xlu0 %1436
        %v1438 = vsub.f32 %v1354, %v1428
        %v1439 = vsub.f32 %v1377, %v1431
        %v1440 = vsub.f32 %v1400, %v1434
        %v1441 = vsub.f32 %v1423, %v1437
        %v1442 = vmul.f32 %v1438, 1.442695
        %v1443 = vpow.pop %v1442
        %v1444 = vmul.f32 %v1439, 1.442695
        %v1445 = vpow.pop %v1444
        %v1446 = vmul.f32 %v1440, 1.442695
        %v1447 = vpow.pop %v1446
        %v1448 = vmul.f32 %v1441, 1.442695
        %v1449 = vpow.pop %v1448
        %v1450 = vsel %vm649, %v1443, 0.0
        %1451 = vadd.xlane.f32.xlu0 %v1450
        %v1452 = vpop.xlane.xlu0 %1451
        %v1453 = vsel %vm649, %v1445, 0.0
        %1454 = vadd.xlane.f32.xlu0 %v1453
        %v1455 = vpop.xlane.xlu0 %1454
        %v1456 = vsel %vm649, %v1447, 0.0
        %1457 = vadd.xlane.f32.xlu0 %v1456
        %v1458 = vpop.xlane.xlu0 %1457
        %v1459 = vsel %vm649, %v1449, 0.0
        %1460 = vadd.xlane.f32.xlu0 %v1459
        %v1461 = vpop.xlane.xlu0 %1460
        %v1462 = vrcp.pop %v1452
        %v1463 = vrcp.pop %v1455
        %v1464 = vrcp.pop %v1458
        %v1465 = vrcp.pop %v1461
        %v1466 = vmul.f32 %v1443, %v1462
        %v1467 = vmul.f32 %v1445, %v1463
        %v1468 = vmul.f32 %v1447, %v1464
        %v1469 = vmul.f32 %v1449, %v1465
        %v1470 = vpack.c.bf16 %v1466, %v1466
        %v1471 = vpack.c.bf16 %v1467, %v1467
        %v1472 = vpack.c.bf16 %v1468, %v1468
        %v1473 = vpack.c.bf16 %v1469, %v1469
        %1474 = vrot.lane.b32.xlu0 %v646, 40
        %v1475 = vpop.permute.xlu0 %1474
        %v1477 = vsel %vm649, %v1470, 0
        %v1480 = vsel %vm794, %v1475, 0
        %1482 = vmatpush.bf16.msra.mxu0 0
        %1483 = vmatpush.bf16.msra.mxu0 0
        %1484 = vmatpush.bf16.msra.mxu0 0
        %1485 = vmatpush.bf16.msra.mxu0 0
        %1486 = vmatpush.bf16.msra.mxu0 0
        %1487 = vmatpush.bf16.msra.mxu0 0
        %1488 = vmatpush.bf16.msra.mxu0 0
        %1489 = vmatpush.bf16.msra.mxu0 %v1480
        %1490 = vmatmul.bf16.gmra.mxu0 %v1477
        %v1491 = vpop.f32.mrf.mxu0
        %v1492 = vadd.f32 0.0, %v1491
        %v1493 = vpop.f32.mrf.mxu0
        %1494 = vdwg.mxu0
        %1495 = vrot.lane.b32.xlu0 %v671, 40
        %v1496 = vpop.permute.xlu0 %1495
        %v1498 = vsel %vm649, %v1471, 0
        %v1501 = vsel %vm794, %v1496, 0
        %1503 = vmatpush.bf16.msra.mxu0 0
        %1504 = vmatpush.bf16.msra.mxu0 0
        %1505 = vmatpush.bf16.msra.mxu0 0
        %1506 = vmatpush.bf16.msra.mxu0 0
        %1507 = vmatpush.bf16.msra.mxu0 0
        %1508 = vmatpush.bf16.msra.mxu0 0
        %1509 = vmatpush.bf16.msra.mxu0 0
        %1510 = vmatpush.bf16.msra.mxu0 %v1501
        %1511 = vmatmul.bf16.gmra.mxu0 %v1498
        %v1512 = vpop.f32.mrf.mxu0
        %v1513 = vadd.f32 0.0, %v1512
        %v1514 = vpop.f32.mrf.mxu0
        %1515 = vdwg.mxu0
        %1516 = vrot.lane.b32.xlu0 %v695, 40
        %v1517 = vpop.permute.xlu0 %1516
        %v1519 = vsel %vm649, %v1472, 0
        %v1522 = vsel %vm794, %v1517, 0
        %1524 = vmatpush.bf16.msra.mxu0 0
        %1525 = vmatpush.bf16.msra.mxu0 0
        %1526 = vmatpush.bf16.msra.mxu0 0
        %1527 = vmatpush.bf16.msra.mxu0 0
        %1528 = vmatpush.bf16.msra.mxu0 0
        %1529 = vmatpush.bf16.msra.mxu0 0
        %1530 = vmatpush.bf16.msra.mxu0 0
        %1531 = vmatpush.bf16.msra.mxu0 %v1522
        %1532 = vmatmul.bf16.gmra.mxu0 %v1519
        %v1533 = vpop.f32.mrf.mxu0
        %v1534 = vadd.f32 0.0, %v1533
        %v1535 = vpop.f32.mrf.mxu0
        %1536 = vdwg.mxu0
        %1537 = vrot.lane.b32.xlu0 %v719, 40
        %v1538 = vpop.permute.xlu0 %1537
        %v1540 = vsel %vm649, %v1473, 0
        %v1543 = vsel %vm794, %v1538, 0
        %1545 = vmatpush.bf16.msra.mxu0 0
        %1546 = vmatpush.bf16.msra.mxu0 0
        %1547 = vmatpush.bf16.msra.mxu0 0
        %1548 = vmatpush.bf16.msra.mxu0 0
        %1549 = vmatpush.bf16.msra.mxu0 0
        %1550 = vmatpush.bf16.msra.mxu0 0
        %1551 = vmatpush.bf16.msra.mxu0 0
        %1552 = vmatpush.bf16.msra.mxu0 %v1543
        %1553 = vmatmul.bf16.gmra.mxu0 %v1540
        %v1554 = vpop.f32.mrf.mxu0
        %v1555 = vadd.f32 0.0, %v1554
        %v1556 = vpop.f32.mrf.mxu0
        %1557 = vdwg.mxu0
        %1562 = vrot.lane.b32.xlu0 %v1044, 8
        %v1563 = vpop.permute.xlu0 %1562
        %1564 = vrot.lane.b32.xlu0 %v1065, 8
        %v1565 = vpop.permute.xlu0 %1564
        %1566 = vrot.lane.b32.xlu0 %v1086, 8
        %v1567 = vpop.permute.xlu0 %1566
        %1568 = vrot.lane.b32.xlu0 %v1107, 8
        %v1569 = vpop.permute.xlu0 %1568
        %1578 = vrot.lane.b32.xlu0 %v1268, 16
        %v1579 = vpop.permute.xlu0 %1578
        %1580 = vrot.lane.b32.xlu0 %v1289, 16
        %v1581 = vpop.permute.xlu0 %1580
        %1582 = vrot.lane.b32.xlu0 %v1310, 16
        %v1583 = vpop.permute.xlu0 %1582
        %1584 = vrot.lane.b32.xlu0 %v1331, 16
        %v1585 = vpop.permute.xlu0 %1584
        %1594 = vrot.lane.b32.xlu0 %v1492, 24
        %v1595 = vpop.permute.xlu0 %1594
        %1596 = vrot.lane.b32.xlu0 %v1513, 24
        %v1597 = vpop.permute.xlu0 %1596
        %1598 = vrot.lane.b32.xlu0 %v1534, 24
        %v1599 = vpop.permute.xlu0 %1598
        %1600 = vrot.lane.b32.xlu0 %v1555, 24
        %v1601 = vpop.permute.xlu0 %1600
        %v1606 = vsel %vm649, %v808, %v1563
        %v1607 = vsel %vm649, %v829, %v1565
        %v1608 = vsel %vm649, %v850, %v1567
        %v1609 = vsel %vm649, %v871, %v1569
        %vm1610 = vcmask 130048
        %v1611 = vsel %vm1610, %v1606, %v1579
        %v1612 = vsel %vm1610, %v1607, %v1581
        %v1613 = vsel %vm1610, %v1608, %v1583
        %v1614 = vsel %vm1610, %v1609, %v1585
        %vm1615 = vcmask 195584
        %v1616 = vsel %vm1615, %v1611, %v1595
        %v1617 = vsel %vm1615, %v1612, %v1597
        %v1618 = vsel %vm1615, %v1613, %v1599
        %v1619 = vsel %vm1615, %v1614, %v1601
        %v1620 = vpack.c.bf16 %v1617, %v1616
        %v1621 = vpack.c.bf16 %v1619, %v1618
        %v1622 = vld [vmem:[%s3] sm:$0xf]
        %v1623 = vld [vmem:[%s3 + $0x4] sm:$0xf]
        %v1624 = vld [vmem:[%s3 + $0x8] sm:$0xf]
        %v1625 = vld [vmem:[%s3 + $0xc] sm:$0xf]
        %v1626 = vld [vmem:[#allocation2] sm:$0x1]
        %v1628 = vperm.slane %v1626, 0
        %v1634 = vunpack.c.l.b16 %v1622
        %v1635 = vunpack.c.l.b16 %v1623
        %v1636 = vunpack.c.l.b16 %v1624
        %v1637 = vunpack.c.l.b16 %v1625
        %v1638 = vpack.c.b16 %v1635, %v1634
        %v1639 = vpack.c.b16 %v1637, %v1636
        %v1643 = vsel %vm606, %v1620, 0
        %v1646 = vsel %vm606, %v1621, 0
        %1648 = vmatpush.bf16.msra.mxu0 0
        %1649 = vmatpush.bf16.msra.mxu0 0
        %1650 = vmatpush.bf16.msra.mxu0 0
        %1651 = vmatpush.bf16.msra.mxu0 0
        %1652 = vmatpush.bf16.msra.mxu0 0
        %1653 = vmatpush.bf16.msra.mxu0 0
        %1654 = vmatpush.bf16.msra.mxu0 %v1639
        %1655 = vmatpush.bf16.msra.mxu0 %v1638
        %1656 = vmatmul.bf16.gmra.mxu0 %v1643
        %v1657 = vpop.f32.mrf.mxu0
        %v1658 = vadd.f32 %v1628, %v1657
        %v1659 = vpop.f32.mrf.mxu0
        %v1660 = vadd.f32 %v1628, %v1659
        %1661 = vmatmul.bf16.gmra.mxu0 %v1646
        %v1662 = vpop.f32.mrf.mxu0
        %v1663 = vadd.f32 %v1628, %v1662
        %v1664 = vpop.f32.mrf.mxu0
        %v1665 = vadd.f32 %v1628, %v1664
        %1666 = vdwg.mxu0
        %v1667 = vadd.f32 %v580, %v1658
        %v1668 = vadd.f32 %v581, %v1660
        %v1669 = vadd.f32 %v582, %v1663
        %v1670 = vadd.f32 %v583, %v1665
        %v1671 = vld [vmem:[%s9] sm:$0x1]
        %v1672 = vld [vmem:[#allocation8] sm:$0x1]
        %v1673 = vsel %vm606, %v1667, 0.0
        %1674 = vadd.xlane.f32.xlu0 %v1673
        %v1675 = vpop.xlane.xlu0 %1674
        %v1676 = vsel %vm606, %v1668, 0.0
        %1677 = vadd.xlane.f32.xlu0 %v1676
        %v1678 = vpop.xlane.xlu0 %1677
        %v1679 = vsel %vm606, %v1669, 0.0
        %1680 = vadd.xlane.f32.xlu0 %v1679
        %v1681 = vpop.xlane.xlu0 %1680
        %v1682 = vsel %vm606, %v1670, 0.0
        %1683 = vadd.xlane.f32.xlu0 %v1682
        %v1684 = vpop.xlane.xlu0 %1683
        %v1685 = vrcp.pop 32.0
        %v1686 = vmul.f32 32.0, %v1685
        %v1687 = vsub.f32 1.0, %v1686
        %v1688 = vmul.f32 %v1685, %v1687
        %v1689 = vadd.f32 %v1685, %v1688
        %vm1690 = vweird.f32 %v1685
        %v1691 = vsel %vm1690, %v1685, %v1689
        %v1692 = vmul.f32 %v1675, %v1691
        %v1693 = vmul.f32 %v1678, %v1691
        %v1694 = vmul.f32 %v1681, %v1691
        %v1695 = vmul.f32 %v1684, %v1691
        %v1696 = vsub.f32 %v1667, %v1692
        %v1697 = vsub.f32 %v1668, %v1693
        %v1698 = vsub.f32 %v1669, %v1694
        %v1699 = vsub.f32 %v1670, %v1695
        %v1700 = vmul.f32 %v1696, %v1696
        %v1701 = vmul.f32 %v1697, %v1697
        %v1702 = vmul.f32 %v1698, %v1698
        %v1703 = vmul.f32 %v1699, %v1699
        %v1704 = vsel %vm606, %v1700, 0.0
        %1705 = vadd.xlane.f32.xlu0 %v1704
        %v1706 = vpop.xlane.xlu0 %1705
        %v1707 = vsel %vm606, %v1701, 0.0
        %1708 = vadd.xlane.f32.xlu0 %v1707
        %v1709 = vpop.xlane.xlu0 %1708
        %v1710 = vsel %vm606, %v1702, 0.0
        %1711 = vadd.xlane.f32.xlu0 %v1710
        %v1712 = vpop.xlane.xlu0 %1711
        %v1713 = vsel %vm606, %v1703, 0.0
        %1714 = vadd.xlane.f32.xlu0 %v1713
        %v1715 = vpop.xlane.xlu0 %1714
        %v1716 = vmul.f32 %v1706, %v1691
        %v1717 = vmul.f32 %v1709, %v1691
        %v1718 = vmul.f32 %v1712, %v1691
        %v1719 = vmul.f32 %v1715, %v1691
        %v1720 = vadd.f32 %v1716, 1e-05
        %v1721 = vadd.f32 %v1717, 1e-05
        %v1722 = vadd.f32 %v1718, 1e-05
        %v1723 = vadd.f32 %v1719, 1e-05
        %v1724 = vrsqrt.pop %v1720
        %v1725 = vmul.f32 %v1724, %v1720
        %v1726 = vmul.f32 %v1725, %v1724
        %v1727 = vmul.f32 0.5, %v1726
        %v1728 = vsub.f32 1.5, %v1727
        %v1729 = vmul.f32 %v1724, %v1728
        %vm1730 = vweird.f32 %v1720
        %vm1731 = vweird.f32 %v1724
        %vm1732 = vmor %vm1730, %vm1731
        %v1733 = vsel %vm1732, %v1724, %v1729
        %v1734 = vrsqrt.pop %v1721
        %v1735 = vmul.f32 %v1734, %v1721
        %v1736 = vmul.f32 %v1735, %v1734
        %v1737 = vmul.f32 0.5, %v1736
        %v1738 = vsub.f32 1.5, %v1737
        %v1739 = vmul.f32 %v1734, %v1738
        %vm1740 = vweird.f32 %v1721
        %vm1741 = vweird.f32 %v1734
        %vm1742 = vmor %vm1740, %vm1741
        %v1743 = vsel %vm1742, %v1734, %v1739
        %v1744 = vrsqrt.pop %v1722
        %v1745 = vmul.f32 %v1744, %v1722
        %v1746 = vmul.f32 %v1745, %v1744
        %v1747 = vmul.f32 0.5, %v1746
        %v1748 = vsub.f32 1.5, %v1747
        %v1749 = vmul.f32 %v1744, %v1748
        %vm1750 = vweird.f32 %v1722
        %vm1751 = vweird.f32 %v1744
        %vm1752 = vmor %vm1750, %vm1751
        %v1753 = vsel %vm1752, %v1744, %v1749
        %v1754 = vrsqrt.pop %v1723
        %v1755 = vmul.f32 %v1754, %v1723
        %v1756 = vmul.f32 %v1755, %v1754
        %v1757 = vmul.f32 0.5, %v1756
        %v1758 = vsub.f32 1.5, %v1757
        %v1759 = vmul.f32 %v1754, %v1758
        %vm1760 = vweird.f32 %v1723
        %vm1761 = vweird.f32 %v1754
        %vm1762 = vmor %vm1760, %vm1761
        %v1763 = vsel %vm1762, %v1754, %v1759
        %v1764 = vmul.f32 %v1696, %v1733
        %v1765 = vmul.f32 %v1697, %v1743
        %v1766 = vmul.f32 %v1698, %v1753
        %v1767 = vmul.f32 %v1699, %v1763
        %v1769 = vperm.slane %v1671, 0
        %v1771 = vmul.f32 %v1764, %v1769
        %v1772 = vmul.f32 %v1765, %v1769
        %v1773 = vmul.f32 %v1766, %v1769
        %v1774 = vmul.f32 %v1767, %v1769
        %v1776 = vperm.slane %v1672, 0
        %v1778 = vadd.f32 %v1771, %v1776
        %v1779 = vadd.f32 %v1772, %v1776
        %v1780 = vadd.f32 %v1773, %v1776
        %v1781 = vadd.f32 %v1774, %v1776
        %v1782 = vpack.c.bf16 %v1779, %v1778
        %v1783 = vpack.c.bf16 %v1781, %v1780
        %v1784 = vld [vmem:[%s5] sm:$0xf]
        %v1785 = vld [vmem:[%s5 + $0x4] sm:$0xf]
        %v1786 = vld [vmem:[%s5 + $0x8] sm:$0xf]
        %v1787 = vld [vmem:[%s5 + $0xc] sm:$0xf]
        %v1788 = vld [vmem:[#allocation5] sm:$0x1]
        %v1790 = vperm.slane %v1788, 0
        %v1796 = vunpack.c.l.b16 %v1784
        %v1797 = vunpack.c.l.b16 %v1785
        %v1798 = vunpack.c.l.b16 %v1786
        %v1799 = vunpack.c.l.b16 %v1787
        %v1800 = vpack.c.b16 %v1797, %v1796
        %v1801 = vpack.c.b16 %v1799, %v1798
        %v1805 = vsel %vm606, %v1782, 0
        %v1808 = vsel %vm606, %v1783, 0
        %1810 = vmatpush.bf16.msra.mxu0 0
        %1811 = vmatpush.bf16.msra.mxu0 0
        %1812 = vmatpush.bf16.msra.mxu0 0
        %1813 = vmatpush.bf16.msra.mxu0 0
        %1814 = vmatpush.bf16.msra.mxu0 0
        %1815 = vmatpush.bf16.msra.mxu0 0
        %1816 = vmatpush.bf16.msra.mxu0 %v1801
        %1817 = vmatpush.bf16.msra.mxu0 %v1800
        %1818 = vmatmul.bf16.gmra.mxu0 %v1805
        %v1819 = vpop.f32.mrf.mxu0
        %v1820 = vadd.f32 %v1790, %v1819
        %v1821 = vpop.f32.mrf.mxu0
        %v1822 = vadd.f32 %v1790, %v1821
        %1823 = vmatmul.bf16.gmra.mxu0 %v1808
        %v1824 = vpop.f32.mrf.mxu0
        %v1825 = vadd.f32 %v1790, %v1824
        %v1826 = vpop.f32.mrf.mxu0
        %v1827 = vadd.f32 %v1790, %v1826
        %1828 = vdwg.mxu0
        %v1829 = vmax.f32 %v1820, 0.0
        %v1830 = vmax.f32 %v1822, 0.0
        %v1831 = vmax.f32 %v1825, 0.0
        %v1832 = vmax.f32 %v1827, 0.0
        %v1833 = vpack.c.bf16 %v1830, %v1829
        %v1834 = vpack.c.bf16 %v1832, %v1831
        %v1835 = vld [vmem:[%s7] sm:$0xf]
        %v1836 = vld [vmem:[%s7 + $0x4] sm:$0xf]
        %v1837 = vld [vmem:[%s7 + $0x8] sm:$0xf]
        %v1838 = vld [vmem:[%s7 + $0xc] sm:$0xf]
        %v1839 = vld [vmem:[%s7 + $0x10] sm:$0xf]
        %v1840 = vld [vmem:[%s7 + $0x14] sm:$0xf]
        %v1841 = vld [vmem:[%s7 + $0x18] sm:$0xf]
        %v1842 = vld [vmem:[%s7 + $0x1c] sm:$0xf]
        %v1843 = vld [vmem:[%s7 + $0x20] sm:$0xf]
        %v1844 = vld [vmem:[%s7 + $0x24] sm:$0xf]
        %v1845 = vld [vmem:[%s7 + $0x28] sm:$0xf]
        %v1846 = vld [vmem:[%s7 + $0x2c] sm:$0xf]
        %v1847 = vld [vmem:[%s7 + $0x30] sm:$0xf]
        %v1848 = vld [vmem:[%s7 + $0x34] sm:$0xf]
        %v1849 = vld [vmem:[%s7 + $0x38] sm:$0xf]
        %v1850 = vld [vmem:[%s7 + $0x3c] sm:$0xf]
        %v1851 = vld [vmem:[#allocation7] sm:$0x1]
        %v1853 = vperm.slane %v1851, 0
        %v1871 = vunpack.c.l.b16 %v1835
        %v1872 = vunpack.c.l.b16 %v1836
        %v1873 = vunpack.c.l.b16 %v1837
        %v1874 = vunpack.c.l.b16 %v1838
        %v1875 = vunpack.c.l.b16 %v1839
        %v1876 = vunpack.c.l.b16 %v1840
        %v1877 = vunpack.c.l.b16 %v1841
        %v1878 = vunpack.c.l.b16 %v1842
        %v1879 = vunpack.c.l.b16 %v1843
        %v1880 = vunpack.c.l.b16 %v1844
        %v1881 = vunpack.c.l.b16 %v1845
        %v1882 = vunpack.c.l.b16 %v1846
        %v1883 = vunpack.c.l.b16 %v1847
        %v1884 = vunpack.c.l.b16 %v1848
        %v1885 = vunpack.c.l.b16 %v1849
        %v1886 = vunpack.c.l.b16 %v1850
        %v1887 = vpack.c.b16 %v1872, %v1871
        %v1888 = vpack.c.b16 %v1874, %v1873
        %v1889 = vpack.c.b16 %v1876, %v1875
        %v1890 = vpack.c.b16 %v1878, %v1877
        %v1891 = vpack.c.b16 %v1880, %v1879
        %v1892 = vpack.c.b16 %v1882, %v1881
        %v1893 = vpack.c.b16 %v1884, %v1883
        %v1894 = vpack.c.b16 %v1886, %v1885
        %1903 = vmatpush.bf16.msra.mxu0 %v1894
        %1904 = vmatpush.bf16.msra.mxu0 %v1893
        %1905 = vmatpush.bf16.msra.mxu0 %v1892
        %1906 = vmatpush.bf16.msra.mxu0 %v1891
        %1907 = vmatpush.bf16.msra.mxu0 %v1890
        %1908 = vmatpush.bf16.msra.mxu0 %v1889
        %1909 = vmatpush.bf16.msra.mxu0 %v1888
        %1910 = vmatpush.bf16.msra.mxu0 %v1887
        %1911 = vmatmul.bf16.gmra.mxu0 %v1833
        %v1912 = vpop.f32.mrf.mxu0
        %v1913 = vadd.f32 %v1853, %v1912
        %v1914 = vpop.f32.mrf.mxu0
        %v1915 = vadd.f32 %v1853, %v1914
        %1916 = vmatmul.bf16.gmra.mxu0 %v1834
        %v1917 = vpop.f32.mrf.mxu0
        %v1918 = vadd.f32 %v1853, %v1917
        %v1919 = vpop.f32.mrf.mxu0
        %v1920 = vadd.f32 %v1853, %v1919
        %1921 = vdwg.mxu0
        %v1922 = vadd.f32 %v1778, %v1913
        %v1923 = vadd.f32 %v1779, %v1915
        %v1924 = vadd.f32 %v1780, %v1918
        %v1925 = vadd.f32 %v1781, %v1920
        %v1926 = vld [vmem:[%s11] sm:$0x1]
        %v1927 = vld [vmem:[#allocation10] sm:$0x1]
        %v1928 = vsel %vm606, %v1922, 0.0
        %1929 = vadd.xlane.f32.xlu0 %v1928
        %v1930 = vpop.xlane.xlu0 %1929
        %v1931 = vsel %vm606, %v1923, 0.0
        %1932 = vadd.xlane.f32.xlu0 %v1931
        %v1933 = vpop.xlane.xlu0 %1932
        %v1934 = vsel %vm606, %v1924, 0.0
        %1935 = vadd.xlane.f32.xlu0 %v1934
        %v1936 = vpop.xlane.xlu0 %1935
        %v1937 = vsel %vm606, %v1925, 0.0
        %1938 = vadd.xlane.f32.xlu0 %v1937
        %v1939 = vpop.xlane.xlu0 %1938
        %v1940 = vmul.f32 %v1930, %v1691
        %v1941 = vmul.f32 %v1933, %v1691
        %v1942 = vmul.f32 %v1936, %v1691
        %v1943 = vmul.f32 %v1939, %v1691
        %v1944 = vsub.f32 %v1922, %v1940
        %v1945 = vsub.f32 %v1923, %v1941
        %v1946 = vsub.f32 %v1924, %v1942
        %v1947 = vsub.f32 %v1925, %v1943
        %v1948 = vmul.f32 %v1944, %v1944
        %v1949 = vmul.f32 %v1945, %v1945
        %v1950 = vmul.f32 %v1946, %v1946
        %v1951 = vmul.f32 %v1947, %v1947
        %v1952 = vsel %vm606, %v1948, 0.0
        %1953 = vadd.xlane.f32.xlu0 %v1952
        %v1954 = vpop.xlane.xlu0 %1953
        %v1955 = vsel %vm606, %v1949, 0.0
        %1956 = vadd.xlane.f32.xlu0 %v1955
        %v1957 = vpop.xlane.xlu0 %1956
        %v1958 = vsel %vm606, %v1950, 0.0
        %1959 = vadd.xlane.f32.xlu0 %v1958
        %v1960 = vpop.xlane.xlu0 %1959
        %v1961 = vsel %vm606, %v1951, 0.0
        %1962 = vadd.xlane.f32.xlu0 %v1961
        %v1963 = vpop.xlane.xlu0 %1962
        %v1964 = vmul.f32 %v1954, %v1691
        %v1965 = vmul.f32 %v1957, %v1691
        %v1966 = vmul.f32 %v1960, %v1691
        %v1967 = vmul.f32 %v1963, %v1691
        %v1968 = vadd.f32 %v1964, 1e-05
        %v1969 = vadd.f32 %v1965, 1e-05
        %v1970 = vadd.f32 %v1966, 1e-05
        %v1971 = vadd.f32 %v1967, 1e-05
        %v1972 = vrsqrt.pop %v1968
        %v1973 = vmul.f32 %v1972, %v1968
        %v1974 = vmul.f32 %v1973, %v1972
        %v1975 = vmul.f32 0.5, %v1974
        %v1976 = vsub.f32 1.5, %v1975
        %v1977 = vmul.f32 %v1972, %v1976
        %vm1978 = vweird.f32 %v1968
        %vm1979 = vweird.f32 %v1972
        %vm1980 = vmor %vm1978, %vm1979
        %v1981 = vsel %vm1980, %v1972, %v1977
        %v1982 = vrsqrt.pop %v1969
        %v1983 = vmul.f32 %v1982, %v1969
        %v1984 = vmul.f32 %v1983, %v1982
        %v1985 = vmul.f32 0.5, %v1984
        %v1986 = vsub.f32 1.5, %v1985
        %v1987 = vmul.f32 %v1982, %v1986
        %vm1988 = vweird.f32 %v1969
        %vm1989 = vweird.f32 %v1982
        %vm1990 = vmor %vm1988, %vm1989
        %v1991 = vsel %vm1990, %v1982, %v1987
        %v1992 = vrsqrt.pop %v1970
        %v1993 = vmul.f32 %v1992, %v1970
        %v1994 = vmul.f32 %v1993, %v1992
        %v1995 = vmul.f32 0.5, %v1994
        %v1996 = vsub.f32 1.5, %v1995
        %v1997 = vmul.f32 %v1992, %v1996
        %vm1998 = vweird.f32 %v1970
        %vm1999 = vweird.f32 %v1992
        %vm2000 = vmor %vm1998, %vm1999
        %v2001 = vsel %vm2000, %v1992, %v1997
        %v2002 = vrsqrt.pop %v1971
        %v2003 = vmul.f32 %v2002, %v1971
        %v2004 = vmul.f32 %v2003, %v2002
        %v2005 = vmul.f32 0.5, %v2004
        %v2006 = vsub.f32 1.5, %v2005
        %v2007 = vmul.f32 %v2002, %v2006
        %vm2008 = vweird.f32 %v1971
        %vm2009 = vweird.f32 %v2002
        %vm2010 = vmor %vm2008, %vm2009
        %v2011 = vsel %vm2010, %v2002, %v2007
        %v2012 = vmul.f32 %v1944, %v1981
        %v2013 = vmul.f32 %v1945, %v1991
        %v2014 = vmul.f32 %v1946, %v2001
        %v2015 = vmul.f32 %v1947, %v2011
        %v2017 = vperm.slane %v1926, 0
        %v2019 = vmul.f32 %v2012, %v2017
        %v2020 = vmul.f32 %v2013, %v2017
        %v2021 = vmul.f32 %v2014, %v2017
        %v2022 = vmul.f32 %v2015, %v2017
        %v2024 = vperm.slane %v1927, 0
        %v2026 = vadd.f32 %v2019, %v2024
        %v2027 = vadd.f32 %v2020, %v2024
        %v2028 = vadd.f32 %v2021, %v2024
        %v2029 = vadd.f32 %v2022, %v2024
        %v2030 = vpack.c.bf16 %v2027, %v2026
        %v2031 = vpack.c.bf16 %v2029, %v2028
        %s2032 = scalar_lea.vmem %s1, 16
        %v2033 = vld [vmem:[%s2032] sm:$0xf]
        %v2034 = vld [vmem:[%s2032 + $0x4] sm:$0xf]
        %v2035 = vld [vmem:[%s2032 + $0x8] sm:$0xf]
        %v2036 = vld [vmem:[%s2032 + $0xc] sm:$0xf]
        %s2037 = scalar_lea.vmem %s2, 1
        %v2038 = vld [vmem:[%s2037] sm:$0x1]
        %v2040 = vperm.slane %v2038, 0
        %v2046 = vunpack.c.l.b16 %v2033
        %v2047 = vunpack.c.l.b16 %v2034
        %v2048 = vunpack.c.l.b16 %v2035
        %v2049 = vunpack.c.l.b16 %v2036
        %v2050 = vpack.c.b16 %v2047, %v2046
        %v2051 = vpack.c.b16 %v2049, %v2048
        %v2055 = vsel %vm606, %v2030, 0
        %v2058 = vsel %vm606, %v2031, 0
        %2060 = vmatpush.bf16.msra.mxu0 0
        %2061 = vmatpush.bf16.msra.mxu0 0
        %2062 = vmatpush.bf16.msra.mxu0 0
        %2063 = vmatpush.bf16.msra.mxu0 0
        %2064 = vmatpush.bf16.msra.mxu0 0
        %2065 = vmatpush.bf16.msra.mxu0 0
        %2066 = vmatpush.bf16.msra.mxu0 %v2051
        %2067 = vmatpush.bf16.msra.mxu0 %v2050
        %2068 = vmatmul.bf16.gmra.mxu0 %v2055
        %v2069 = vpop.f32.mrf.mxu0
        %v2070 = vadd.f32 %v2040, %v2069
        %v2071 = vpop.f32.mrf.mxu0
        %v2072 = vadd.f32 %v2040, %v2071
        %2073 = vmatmul.bf16.gmra.mxu0 %v2058
        %v2074 = vpop.f32.mrf.mxu0
        %v2075 = vadd.f32 %v2040, %v2074
        %v2076 = vpop.f32.mrf.mxu0
        %v2077 = vadd.f32 %v2040, %v2076
        %2078 = vdwg.mxu0
        %v2079 = vmul.f32 %v2070, 0.35355338
        %v2080 = vmul.f32 %v2072, 0.35355338
        %v2081 = vmul.f32 %v2075, 0.35355338
        %v2082 = vmul.f32 %v2077, 0.35355338
        %v2083 = vpack.c.bf16 %v2079, %v2079
        %v2084 = vpack.c.bf16 %v2080, %v2080
        %v2085 = vpack.c.bf16 %v2081, %v2081
        %v2086 = vpack.c.bf16 %v2082, %v2082
        %v2087 = vpack.c.bf16 %v2070, %v2070
        %v2088 = vpack.c.bf16 %v2072, %v2072
        %v2089 = vpack.c.bf16 %v2075, %v2075
        %v2090 = vpack.c.bf16 %v2077, %v2077
        %v2092 = vunpack.c.l.b16 %v2087
        %v2093 = vpack.c.b16 %v2092, %v2092
        %2094 = vrot.lane.b32.xlu0 %v2093, 96
        %v2095 = vpop.permute.xlu0 %2094
        %v2097 = vsel %vm649, %v2083, 0
        %v2100 = vsel %vm649, %v2095, 0
        %2102 = vmatpush.bf16.xpose.msra.mxu0 0
        %2103 = vmatpush.bf16.xpose.msra.mxu0 0
        %2104 = vmatpush.bf16.xpose.msra.mxu0 0
        %2105 = vmatpush.bf16.xpose.msra.mxu0 0
        %2106 = vmatpush.bf16.xpose.msra.mxu0 0
        %2107 = vmatpush.bf16.xpose.msra.mxu0 0
        %2108 = vmatpush.bf16.xpose.msra.mxu0 0
        %2109 = vmatpush.bf16.xpose.msra.mxu0 %v2100
        %2110 = vmatmul.bf16.gmra.mxu0 %v2097
        %v2111 = vpop.f32.mrf.mxu0
        %v2112 = vadd.f32 0.0, %v2111
        %v2113 = vpop.f32.mrf.mxu0
        %2114 = vdwg.mxu0
        %v2116 = vunpack.c.l.b16 %v2088
        %v2117 = vpack.c.b16 %v2116, %v2116
        %2118 = vrot.lane.b32.xlu0 %v2117, 96
        %v2119 = vpop.permute.xlu0 %2118
        %v2121 = vsel %vm649, %v2084, 0
        %v2124 = vsel %vm649, %v2119, 0
        %2126 = vmatpush.bf16.xpose.msra.mxu0 0
        %2127 = vmatpush.bf16.xpose.msra.mxu0 0
        %2128 = vmatpush.bf16.xpose.msra.mxu0 0
        %2129 = vmatpush.bf16.xpose.msra.mxu0 0
        %2130 = vmatpush.bf16.xpose.msra.mxu0 0
        %2131 = vmatpush.bf16.xpose.msra.mxu0 0
        %2132 = vmatpush.bf16.xpose.msra.mxu0 0
        %2133 = vmatpush.bf16.xpose.msra.mxu0 %v2124
        %2134 = vmatmul.bf16.gmra.mxu0 %v2121
        %v2135 = vpop.f32.mrf.mxu0
        %v2136 = vadd.f32 0.0, %v2135
        %v2137 = vpop.f32.mrf.mxu0
        %2138 = vdwg.mxu0
        %v2140 = vunpack.c.l.b16 %v2089
        %v2141 = vpack.c.b16 %v2140, %v2140
        %2142 = vrot.lane.b32.xlu0 %v2141, 96
        %v2143 = vpop.permute.xlu0 %2142
        %v2145 = vsel %vm649, %v2085, 0
        %v2148 = vsel %vm649, %v2143, 0
        %2150 = vmatpush.bf16.xpose.msra.mxu0 0
        %2151 = vmatpush.bf16.xpose.msra.mxu0 0
        %2152 = vmatpush.bf16.xpose.msra.mxu0 0
        %2153 = vmatpush.bf16.xpose.msra.mxu0 0
        %2154 = vmatpush.bf16.xpose.msra.mxu0 0
        %2155 = vmatpush.bf16.xpose.msra.mxu0 0
        %2156 = vmatpush.bf16.xpose.msra.mxu0 0
        %2157 = vmatpush.bf16.xpose.msra.mxu0 %v2148
        %2158 = vmatmul.bf16.gmra.mxu0 %v2145
        %v2159 = vpop.f32.mrf.mxu0
        %v2160 = vadd.f32 0.0, %v2159
        %v2161 = vpop.f32.mrf.mxu0
        %2162 = vdwg.mxu0
        %v2164 = vunpack.c.l.b16 %v2090
        %v2165 = vpack.c.b16 %v2164, %v2164
        %2166 = vrot.lane.b32.xlu0 %v2165, 96
        %v2167 = vpop.permute.xlu0 %2166
        %v2169 = vsel %vm649, %v2086, 0
        %v2172 = vsel %vm649, %v2167, 0
        %2174 = vmatpush.bf16.xpose.msra.mxu0 0
        %2175 = vmatpush.bf16.xpose.msra.mxu0 0
        %2176 = vmatpush.bf16.xpose.msra.mxu0 0
        %2177 = vmatpush.bf16.xpose.msra.mxu0 0
        %2178 = vmatpush.bf16.xpose.msra.mxu0 0
        %2179 = vmatpush.bf16.xpose.msra.mxu0 0
        %2180 = vmatpush.bf16.xpose.msra.mxu0 0
        %2181 = vmatpush.bf16.xpose.msra.mxu0 %v2172
        %2182 = vmatmul.bf16.gmra.mxu0 %v2169
        %v2183 = vpop.f32.mrf.mxu0
        %v2184 = vadd.f32 0.0, %v2183
        %v2185 = vpop.f32.mrf.mxu0
        %2186 = vdwg.mxu0
        %v2187 = vsel %vm649, %v2112, -inf
        %2188 = vmax.xlane.f32.xlu0 %v2187
        %v2189 = vpop.xlane.xlu0 %2188
        %v2190 = vsel %vm649, %v2136, -inf
        %2191 = vmax.xlane.f32.xlu0 %v2190
        %v2192 = vpop.xlane.xlu0 %2191
        %v2193 = vsel %vm649, %v2160, -inf
        %2194 = vmax.xlane.f32.xlu0 %v2193
        %v2195 = vpop.xlane.xlu0 %2194
        %v2196 = vsel %vm649, %v2184, -inf
        %2197 = vmax.xlane.f32.xlu0 %v2196
        %v2198 = vpop.xlane.xlu0 %2197
        %v2199 = vsub.f32 %v2112, %v2189
        %v2200 = vsub.f32 %v2136, %v2192
        %v2201 = vsub.f32 %v2160, %v2195
        %v2202 = vsub.f32 %v2184, %v2198
        %v2203 = vmul.f32 %v2199, 1.442695
        %v2204 = vpow.pop %v2203
        %v2205 = vmul.f32 %v2200, 1.442695
        %v2206 = vpow.pop %v2205
        %v2207 = vmul.f32 %v2201, 1.442695
        %v2208 = vpow.pop %v2207
        %v2209 = vmul.f32 %v2202, 1.442695
        %v2210 = vpow.pop %v2209
        %v2211 = vsel %vm649, %v2204, 0.0
        %2212 = vadd.xlane.f32.xlu0 %v2211
        %v2213 = vpop.xlane.xlu0 %2212
        %v2214 = vsel %vm649, %v2206, 0.0
        %2215 = vadd.xlane.f32.xlu0 %v2214
        %v2216 = vpop.xlane.xlu0 %2215
        %v2217 = vsel %vm649, %v2208, 0.0
        %2218 = vadd.xlane.f32.xlu0 %v2217
        %v2219 = vpop.xlane.xlu0 %2218
        %v2220 = vsel %vm649, %v2210, 0.0
        %2221 = vadd.xlane.f32.xlu0 %v2220
        %v2222 = vpop.xlane.xlu0 %2221
        %v2223 = vrcp.pop %v2213
        %v2224 = vrcp.pop %v2216
        %v2225 = vrcp.pop %v2219
        %v2226 = vrcp.pop %v2222
        %v2227 = vmul.f32 %v2204, %v2223
        %v2228 = vmul.f32 %v2206, %v2224
        %v2229 = vmul.f32 %v2208, %v2225
        %v2230 = vmul.f32 %v2210, %v2226
        %v2231 = vpack.c.bf16 %v2227, %v2227
        %v2232 = vpack.c.bf16 %v2228, %v2228
        %v2233 = vpack.c.bf16 %v2229, %v2229
        %v2234 = vpack.c.bf16 %v2230, %v2230
        %2235 = vrot.lane.b32.xlu0 %v2093, 64
        %v2236 = vpop.permute.xlu0 %2235
        %v2238 = vsel %vm649, %v2231, 0
        %v2241 = vsel %vm794, %v2236, 0
        %2243 = vmatpush.bf16.msra.mxu0 0
        %2244 = vmatpush.bf16.msra.mxu0 0
        %2245 = vmatpush.bf16.msra.mxu0 0
        %2246 = vmatpush.bf16.msra.mxu0 0
        %2247 = vmatpush.bf16.msra.mxu0 0
        %2248 = vmatpush.bf16.msra.mxu0 0
        %2249 = vmatpush.bf16.msra.mxu0 0
        %2250 = vmatpush.bf16.msra.mxu0 %v2241
        %2251 = vmatmul.bf16.gmra.mxu0 %v2238
        %v2252 = vpop.f32.mrf.mxu0
        %v2253 = vadd.f32 0.0, %v2252
        %v2254 = vpop.f32.mrf.mxu0
        %2255 = vdwg.mxu0
        %2256 = vrot.lane.b32.xlu0 %v2117, 64
        %v2257 = vpop.permute.xlu0 %2256
        %v2259 = vsel %vm649, %v2232, 0
        %v2262 = vsel %vm794, %v2257, 0
        %2264 = vmatpush.bf16.msra.mxu0 0
        %2265 = vmatpush.bf16.msra.mxu0 0
        %2266 = vmatpush.bf16.msra.mxu0 0
        %2267 = vmatpush.bf16.msra.mxu0 0
        %2268 = vmatpush.bf16.msra.mxu0 0
        %2269 = vmatpush.bf16.msra.mxu0 0
        %2270 = vmatpush.bf16.msra.mxu0 0
        %2271 = vmatpush.bf16.msra.mxu0 %v2262
        %2272 = vmatmul.bf16.gmra.mxu0 %v2259
        %v2273 = vpop.f32.mrf.mxu0
        %v2274 = vadd.f32 0.0, %v2273
        %v2275 = vpop.f32.mrf.mxu0
        %2276 = vdwg.mxu0
        %2277 = vrot.lane.b32.xlu0 %v2141, 64
        %v2278 = vpop.permute.xlu0 %2277
        %v2280 = vsel %vm649, %v2233, 0
        %v2283 = vsel %vm794, %v2278, 0
        %2285 = vmatpush.bf16.msra.mxu0 0
        %2286 = vmatpush.bf16.msra.mxu0 0
        %2287 = vmatpush.bf16.msra.mxu0 0
        %2288 = vmatpush.bf16.msra.mxu0 0
        %2289 = vmatpush.bf16.msra.mxu0 0
        %2290 = vmatpush.bf16.msra.mxu0 0
        %2291 = vmatpush.bf16.msra.mxu0 0
        %2292 = vmatpush.bf16.msra.mxu0 %v2283
        %2293 = vmatmul.bf16.gmra.mxu0 %v2280
        %v2294 = vpop.f32.mrf.mxu0
        %v2295 = vadd.f32 0.0, %v2294
        %v2296 = vpop.f32.mrf.mxu0
        %2297 = vdwg.mxu0
        %2298 = vrot.lane.b32.xlu0 %v2165, 64
        %v2299 = vpop.permute.xlu0 %2298
        %v2301 = vsel %vm649, %v2234, 0
        %v2304 = vsel %vm794, %v2299, 0
        %2306 = vmatpush.bf16.msra.mxu0 0
        %2307 = vmatpush.bf16.msra.mxu0 0
        %2308 = vmatpush.bf16.msra.mxu0 0
        %2309 = vmatpush.bf16.msra.mxu0 0
        %2310 = vmatpush.bf16.msra.mxu0 0
        %2311 = vmatpush.bf16.msra.mxu0 0
        %2312 = vmatpush.bf16.msra.mxu0 0
        %2313 = vmatpush.bf16.msra.mxu0 %v2304
        %2314 = vmatmul.bf16.gmra.mxu0 %v2301
        %v2315 = vpop.f32.mrf.mxu0
        %v2316 = vadd.f32 0.0, %v2315
        %v2317 = vpop.f32.mrf.mxu0
        %2318 = vdwg.mxu0
        %v2320 = vunpack.c.l.b16 %v2083
        %v2321 = vpack.c.b16 %v2320, %v2320
        %2322 = vrot.lane.b32.xlu0 %v2321, 120
        %v2323 = vpop.permute.xlu0 %2322
        %2324 = vrot.lane.b32.xlu0 %v2093, 88
        %v2325 = vpop.permute.xlu0 %2324
        %v2327 = vsel %vm649, %v2323, 0
        %v2330 = vsel %vm649, %v2325, 0
        %2332 = vmatpush.bf16.xpose.msra.mxu0 0
        %2333 = vmatpush.bf16.xpose.msra.mxu0 0
        %2334 = vmatpush.bf16.xpose.msra.mxu0 0
        %2335 = vmatpush.bf16.xpose.msra.mxu0 0
        %2336 = vmatpush.bf16.xpose.msra.mxu0 0
        %2337 = vmatpush.bf16.xpose.msra.mxu0 0
        %2338 = vmatpush.bf16.xpose.msra.mxu0 0
        %2339 = vmatpush.bf16.xpose.msra.mxu0 %v2330
        %2340 = vmatmul.bf16.gmra.mxu0 %v2327
        %v2341 = vpop.f32.mrf.mxu0
        %v2342 = vadd.f32 0.0, %v2341
        %v2343 = vpop.f32.mrf.mxu0
        %2344 = vdwg.mxu0
        %v2346 = vunpack.c.l.b16 %v2084
        %v2347 = vpack.c.b16 %v2346, %v2346
        %2348 = vrot.lane.b32.xlu0 %v2347, 120
        %v2349 = vpop.permute.xlu0 %2348
        %2350 = vrot.lane.b32.xlu0 %v2117, 88
        %v2351 = vpop.permute.xlu0 %2350
        %v2353 = vsel %vm649, %v2349, 0
        %v2356 = vsel %vm649, %v2351, 0
        %2358 = vmatpush.bf16.xpose.msra.mxu0 0
        %2359 = vmatpush.bf16.xpose.msra.mxu0 0
        %2360 = vmatpush.bf16.xpose.msra.mxu0 0
        %2361 = vmatpush.bf16.xpose.msra.mxu0 0
        %2362 = vmatpush.bf16.xpose.msra.mxu0 0
        %2363 = vmatpush.bf16.xpose.msra.mxu0 0
        %2364 = vmatpush.bf16.xpose.msra.mxu0 0
        %2365 = vmatpush.bf16.xpose.msra.mxu0 %v2356
        %2366 = vmatmul.bf16.gmra.mxu0 %v2353
        %v2367 = vpop.f32.mrf.mxu0
        %v2368 = vadd.f32 0.0, %v2367
        %v2369 = vpop.f32.mrf.mxu0
        %2370 = vdwg.mxu0
        %v2372 = vunpack.c.l.b16 %v2085
        %v2373 = vpack.c.b16 %v2372, %v2372
        %2374 = vrot.lane.b32.xlu0 %v2373, 120
        %v2375 = vpop.permute.xlu0 %2374
        %2376 = vrot.lane.b32.xlu0 %v2141, 88
        %v2377 = vpop.permute.xlu0 %2376
        %v2379 = vsel %vm649, %v2375, 0
        %v2382 = vsel %vm649, %v2377, 0
        %2384 = vmatpush.bf16.xpose.msra.mxu0 0
        %2385 = vmatpush.bf16.xpose.msra.mxu0 0
        %2386 = vmatpush.bf16.xpose.msra.mxu0 0
        %2387 = vmatpush.bf16.xpose.msra.mxu0 0
        %2388 = vmatpush.bf16.xpose.msra.mxu0 0
        %2389 = vmatpush.bf16.xpose.msra.mxu0 0
        %2390 = vmatpush.bf16.xpose.msra.mxu0 0
        %2391 = vmatpush.bf16.xpose.msra.mxu0 %v2382
        %2392 = vmatmul.bf16.gmra.mxu0 %v2379
        %v2393 = vpop.f32.mrf.mxu0
        %v2394 = vadd.f32 0.0, %v2393
        %v2395 = vpop.f32.mrf.mxu0
        %2396 = vdwg.mxu0
        %v2398 = vunpack.c.l.b16 %v2086
        %v2399 = vpack.c.b16 %v2398, %v2398
        %2400 = vrot.lane.b32.xlu0 %v2399, 120
        %v2401 = vpop.permute.xlu0 %2400
        %2402 = vrot.lane.b32.xlu0 %v2165, 88
        %v2403 = vpop.permute.xlu0 %2402
        %v2405 = vsel %vm649, %v2401, 0
        %v2408 = vsel %vm649, %v2403, 0
        %2410 = vmatpush.bf16.xpose.msra.mxu0 0
        %2411 = vmatpush.bf16.xpose.msra.mxu0 0
        %2412 = vmatpush.bf16.xpose.msra.mxu0 0
        %2413 = vmatpush.bf16.xpose.msra.mxu0 0
        %2414 = vmatpush.bf16.xpose.msra.mxu0 0
        %2415 = vmatpush.bf16.xpose.msra.mxu0 0
        %2416 = vmatpush.bf16.xpose.msra.mxu0 0
        %2417 = vmatpush.bf16.xpose.msra.mxu0 %v2408
        %2418 = vmatmul.bf16.gmra.mxu0 %v2405
        %v2419 = vpop.f32.mrf.mxu0
        %v2420 = vadd.f32 0.0, %v2419
        %v2421 = vpop.f32.mrf.mxu0
        %2422 = vdwg.mxu0
        %v2423 = vsel %vm649, %v2342, -inf
        %2424 = vmax.xlane.f32.xlu0 %v2423
        %v2425 = vpop.xlane.xlu0 %2424
        %v2426 = vsel %vm649, %v2368, -inf
        %2427 = vmax.xlane.f32.xlu0 %v2426
        %v2428 = vpop.xlane.xlu0 %2427
        %v2429 = vsel %vm649, %v2394, -inf
        %2430 = vmax.xlane.f32.xlu0 %v2429
        %v2431 = vpop.xlane.xlu0 %2430
        %v2432 = vsel %vm649, %v2420, -inf
        %2433 = vmax.xlane.f32.xlu0 %v2432
        %v2434 = vpop.xlane.xlu0 %2433
        %v2435 = vsub.f32 %v2342, %v2425
        %v2436 = vsub.f32 %v2368, %v2428
        %v2437 = vsub.f32 %v2394, %v2431
        %v2438 = vsub.f32 %v2420, %v2434
        %v2439 = vmul.f32 %v2435, 1.442695
        %v2440 = vpow.pop %v2439
        %v2441 = vmul.f32 %v2436, 1.442695
        %v2442 = vpow.pop %v2441
        %v2443 = vmul.f32 %v2437, 1.442695
        %v2444 = vpow.pop %v2443
        %v2445 = vmul.f32 %v2438, 1.442695
        %v2446 = vpow.pop %v2445
        %v2447 = vsel %vm649, %v2440, 0.0
        %2448 = vadd.xlane.f32.xlu0 %v2447
        %v2449 = vpop.xlane.xlu0 %2448
        %v2450 = vsel %vm649, %v2442, 0.0
        %2451 = vadd.xlane.f32.xlu0 %v2450
        %v2452 = vpop.xlane.xlu0 %2451
        %v2453 = vsel %vm649, %v2444, 0.0
        %2454 = vadd.xlane.f32.xlu0 %v2453
        %v2455 = vpop.xlane.xlu0 %2454
        %v2456 = vsel %vm649, %v2446, 0.0
        %2457 = vadd.xlane.f32.xlu0 %v2456
        %v2458 = vpop.xlane.xlu0 %2457
        %v2459 = vrcp.pop %v2449
        %v2460 = vrcp.pop %v2452
        %v2461 = vrcp.pop %v2455
        %v2462 = vrcp.pop %v2458
        %v2463 = vmul.f32 %v2440, %v2459
        %v2464 = vmul.f32 %v2442, %v2460
        %v2465 = vmul.f32 %v2444, %v2461
        %v2466 = vmul.f32 %v2446, %v2462
        %v2467 = vpack.c.bf16 %v2463, %v2463
        %v2468 = vpack.c.bf16 %v2464, %v2464
        %v2469 = vpack.c.bf16 %v2465, %v2465
        %v2470 = vpack.c.bf16 %v2466, %v2466
        %2471 = vrot.lane.b32.xlu0 %v2093, 56
        %v2472 = vpop.permute.xlu0 %2471
        %v2474 = vsel %vm649, %v2467, 0
        %v2477 = vsel %vm794, %v2472, 0
        %2479 = vmatpush.bf16.msra.mxu0 0
        %2480 = vmatpush.bf16.msra.mxu0 0
        %2481 = vmatpush.bf16.msra.mxu0 0
        %2482 = vmatpush.bf16.msra.mxu0 0
        %2483 = vmatpush.bf16.msra.mxu0 0
        %2484 = vmatpush.bf16.msra.mxu0 0
        %2485 = vmatpush.bf16.msra.mxu0 0
        %2486 = vmatpush.bf16.msra.mxu0 %v2477
        %2487 = vmatmul.bf16.gmra.mxu0 %v2474
        %v2488 = vpop.f32.mrf.mxu0
        %v2489 = vadd.f32 0.0, %v2488
        %v2490 = vpop.f32.mrf.mxu0
        %2491 = vdwg.mxu0
        %2492 = vrot.lane.b32.xlu0 %v2117, 56
        %v2493 = vpop.permute.xlu0 %2492
        %v2495 = vsel %vm649, %v2468, 0
        %v2498 = vsel %vm794, %v2493, 0
        %2500 = vmatpush.bf16.msra.mxu0 0
        %2501 = vmatpush.bf16.msra.mxu0 0
        %2502 = vmatpush.bf16.msra.mxu0 0
        %2503 = vmatpush.bf16.msra.mxu0 0
        %2504 = vmatpush.bf16.msra.mxu0 0
        %2505 = vmatpush.bf16.msra.mxu0 0
        %2506 = vmatpush.bf16.msra.mxu0 0
        %2507 = vmatpush.bf16.msra.mxu0 %v2498
        %2508 = vmatmul.bf16.gmra.mxu0 %v2495
        %v2509 = vpop.f32.mrf.mxu0
        %v2510 = vadd.f32 0.0, %v2509
        %v2511 = vpop.f32.mrf.mxu0
        %2512 = vdwg.mxu0
        %2513 = vrot.lane.b32.xlu0 %v2141, 56
        %v2514 = vpop.permute.xlu0 %2513
        %v2516 = vsel %vm649, %v2469, 0
        %v2519 = vsel %vm794, %v2514, 0
        %2521 = vmatpush.bf16.msra.mxu0 0
        %2522 = vmatpush.bf16.msra.mxu0 0
        %2523 = vmatpush.bf16.msra.mxu0 0
        %2524 = vmatpush.bf16.msra.mxu0 0
        %2525 = vmatpush.bf16.msra.mxu0 0
        %2526 = vmatpush.bf16.msra.mxu0 0
        %2527 = vmatpush.bf16.msra.mxu0 0
        %2528 = vmatpush.bf16.msra.mxu0 %v2519
        %2529 = vmatmul.bf16.gmra.mxu0 %v2516
        %v2530 = vpop.f32.mrf.mxu0
        %v2531 = vadd.f32 0.0, %v2530
        %v2532 = vpop.f32.mrf.mxu0
        %2533 = vdwg.mxu0
        %2534 = vrot.lane.b32.xlu0 %v2165, 56
        %v2535 = vpop.permute.xlu0 %2534
        %v2537 = vsel %vm649, %v2470, 0
        %v2540 = vsel %vm794, %v2535, 0
        %2542 = vmatpush.bf16.msra.mxu0 0
        %2543 = vmatpush.bf16.msra.mxu0 0
        %2544 = vmatpush.bf16.msra.mxu0 0
        %2545 = vmatpush.bf16.msra.mxu0 0
        %2546 = vmatpush.bf16.msra.mxu0 0
        %2547 = vmatpush.bf16.msra.mxu0 0
        %2548 = vmatpush.bf16.msra.mxu0 0
        %2549 = vmatpush.bf16.msra.mxu0 %v2540
        %2550 = vmatmul.bf16.gmra.mxu0 %v2537
        %v2551 = vpop.f32.mrf.mxu0
        %v2552 = vadd.f32 0.0, %v2551
        %v2553 = vpop.f32.mrf.mxu0
        %2554 = vdwg.mxu0
        %2555 = vrot.lane.b32.xlu0 %v2321, 112
        %v2556 = vpop.permute.xlu0 %2555
        %2557 = vrot.lane.b32.xlu0 %v2093, 80
        %v2558 = vpop.permute.xlu0 %2557
        %v2560 = vsel %vm649, %v2556, 0
        %v2563 = vsel %vm649, %v2558, 0
        %2565 = vmatpush.bf16.xpose.msra.mxu0 0
        %2566 = vmatpush.bf16.xpose.msra.mxu0 0
        %2567 = vmatpush.bf16.xpose.msra.mxu0 0
        %2568 = vmatpush.bf16.xpose.msra.mxu0 0
        %2569 = vmatpush.bf16.xpose.msra.mxu0 0
        %2570 = vmatpush.bf16.xpose.msra.mxu0 0
        %2571 = vmatpush.bf16.xpose.msra.mxu0 0
        %2572 = vmatpush.bf16.xpose.msra.mxu0 %v2563
        %2573 = vmatmul.bf16.gmra.mxu0 %v2560
        %v2574 = vpop.f32.mrf.mxu0
        %v2575 = vadd.f32 0.0, %v2574
        %v2576 = vpop.f32.mrf.mxu0
        %2577 = vdwg.mxu0
        %2578 = vrot.lane.b32.xlu0 %v2347, 112
        %v2579 = vpop.permute.xlu0 %2578
        %2580 = vrot.lane.b32.xlu0 %v2117, 80
        %v2581 = vpop.permute.xlu0 %2580
        %v2583 = vsel %vm649, %v2579, 0
        %v2586 = vsel %vm649, %v2581, 0
        %2588 = vmatpush.bf16.xpose.msra.mxu0 0
        %2589 = vmatpush.bf16.xpose.msra.mxu0 0
        %2590 = vmatpush.bf16.xpose.msra.mxu0 0
        %2591 = vmatpush.bf16.xpose.msra.mxu0 0
        %2592 = vmatpush.bf16.xpose.msra.mxu0 0
        %2593 = vmatpush.bf16.xpose.msra.mxu0 0
        %2594 = vmatpush.bf16.xpose.msra.mxu0 0
        %2595 = vmatpush.bf16.xpose.msra.mxu0 %v2586
        %2596 = vmatmul.bf16.gmra.mxu0 %v2583
        %v2597 = vpop.f32.mrf.mxu0
        %v2598 = vadd.f32 0.0, %v2597
        %v2599 = vpop.f32.mrf.mxu0
        %2600 = vdwg.mxu0
        %2601 = vrot.lane.b32.xlu0 %v2373, 112
        %v2602 = vpop.permute.xlu0 %2601
        %2603 = vrot.lane.b32.xlu0 %v2141, 80
        %v2604 = vpop.permute.xlu0 %2603
        %v2606 = vsel %vm649, %v2602, 0
        %v2609 = vsel %vm649, %v2604, 0
        %2611 = vmatpush.bf16.xpose.msra.mxu0 0
        %2612 = vmatpush.bf16.xpose.msra.mxu0 0
        %2613 = vmatpush.bf16.xpose.msra.mxu0 0
        %2614 = vmatpush.bf16.xpose.msra.mxu0 0
        %2615 = vmatpush.bf16.xpose.msra.mxu0 0
        %2616 = vmatpush.bf16.xpose.msra.mxu0 0
        %2617 = vmatpush.bf16.xpose.msra.mxu0 0
        %2618 = vmatpush.bf16.xpose.msra.mxu0 %v2609
        %2619 = vmatmul.bf16.gmra.mxu0 %v2606
        %v2620 = vpop.f32.mrf.mxu0
        %v2621 = vadd.f32 0.0, %v2620
        %v2622 = vpop.f32.mrf.mxu0
        %2623 = vdwg.mxu0
        %2624 = vrot.lane.b32.xlu0 %v2399, 112
        %v2625 = vpop.permute.xlu0 %2624
        %2626 = vrot.lane.b32.xlu0 %v2165, 80
        %v2627 = vpop.permute.xlu0 %2626
        %v2629 = vsel %vm649, %v2625, 0
        %v2632 = vsel %vm649, %v2627, 0
        %2634 = vmatpush.bf16.xpose.msra.mxu0 0
        %2635 = vmatpush.bf16.xpose.msra.mxu0 0
        %2636 = vmatpush.bf16.xpose.msra.mxu0 0
        %2637 = vmatpush.bf16.xpose.msra.mxu0 0
        %2638 = vmatpush.bf16.xpose.msra.mxu0 0
        %2639 = vmatpush.bf16.xpose.msra.mxu0 0
        %2640 = vmatpush.bf16.xpose.msra.mxu0 0
        %2641 = vmatpush.bf16.xpose.msra.mxu0 %v2632
        %2642 = vmatmul.bf16.gmra.mxu0 %v2629
        %v2643 = vpop.f32.mrf.mxu0
        %v2644 = vadd.f32 0.0, %v2643
        %v2645 = vpop.f32.mrf.mxu0
        %2646 = vdwg.mxu0
        %v2647 = vsel %vm649, %v2575, -inf
        %2648 = vmax.xlane.f32.xlu0 %v2647
        %v2649 = vpop.xlane.xlu0 %2648
        %v2650 = vsel %vm649, %v2598, -inf
        %2651 = vmax.xlane.f32.xlu0 %v2650
        %v2652 = vpop.xlane.xlu0 %2651
        %v2653 = vsel %vm649, %v2621, -inf
        %2654 = vmax.xlane.f32.xlu0 %v2653
        %v2655 = vpop.xlane.xlu0 %2654
        %v2656 = vsel %vm649, %v2644, -inf
        %2657 = vmax.xlane.f32.xlu0 %v2656
        %v2658 = vpop.xlane.xlu0 %2657
        %v2659 = vsub.f32 %v2575, %v2649
        %v2660 = vsub.f32 %v2598, %v2652
        %v2661 = vsub.f32 %v2621, %v2655
        %v2662 = vsub.f32 %v2644, %v2658
        %v2663 = vmul.f32 %v2659, 1.442695
        %v2664 = vpow.pop %v2663
        %v2665 = vmul.f32 %v2660, 1.442695
        %v2666 = vpow.pop %v2665
        %v2667 = vmul.f32 %v2661, 1.442695
        %v2668 = vpow.pop %v2667
        %v2669 = vmul.f32 %v2662, 1.442695
        %v2670 = vpow.pop %v2669
        %v2671 = vsel %vm649, %v2664, 0.0
        %2672 = vadd.xlane.f32.xlu0 %v2671
        %v2673 = vpop.xlane.xlu0 %2672
        %v2674 = vsel %vm649, %v2666, 0.0
        %2675 = vadd.xlane.f32.xlu0 %v2674
        %v2676 = vpop.xlane.xlu0 %2675
        %v2677 = vsel %vm649, %v2668, 0.0
        %2678 = vadd.xlane.f32.xlu0 %v2677
        %v2679 = vpop.xlane.xlu0 %2678
        %v2680 = vsel %vm649, %v2670, 0.0
        %2681 = vadd.xlane.f32.xlu0 %v2680
        %v2682 = vpop.xlane.xlu0 %2681
        %v2683 = vrcp.pop %v2673
        %v2684 = vrcp.pop %v2676
        %v2685 = vrcp.pop %v2679
        %v2686 = vrcp.pop %v2682
        %v2687 = vmul.f32 %v2664, %v2683
        %v2688 = vmul.f32 %v2666, %v2684
        %v2689 = vmul.f32 %v2668, %v2685
        %v2690 = vmul.f32 %v2670, %v2686
        %v2691 = vpack.c.bf16 %v2687, %v2687
        %v2692 = vpack.c.bf16 %v2688, %v2688
        %v2693 = vpack.c.bf16 %v2689, %v2689
        %v2694 = vpack.c.bf16 %v2690, %v2690
        %2695 = vrot.lane.b32.xlu0 %v2093, 48
        %v2696 = vpop.permute.xlu0 %2695
        %v2698 = vsel %vm649, %v2691, 0
        %v2701 = vsel %vm794, %v2696, 0
        %2703 = vmatpush.bf16.msra.mxu0 0
        %2704 = vmatpush.bf16.msra.mxu0 0
        %2705 = vmatpush.bf16.msra.mxu0 0
        %2706 = vmatpush.bf16.msra.mxu0 0
        %2707 = vmatpush.bf16.msra.mxu0 0
        %2708 = vmatpush.bf16.msra.mxu0 0
        %2709 = vmatpush.bf16.msra.mxu0 0
        %2710 = vmatpush.bf16.msra.mxu0 %v2701
        %2711 = vmatmul.bf16.gmra.mxu0 %v2698
        %v2712 = vpop.f32.mrf.mxu0
        %v2713 = vadd.f32 0.0, %v2712
        %v2714 = vpop.f32.mrf.mxu0
        %2715 = vdwg.mxu0
        %2716 = vrot.lane.b32.xlu0 %v2117, 48
        %v2717 = vpop.permute.xlu0 %2716
        %v2719 = vsel %vm649, %v2692, 0
        %v2722 = vsel %vm794, %v2717, 0
        %2724 = vmatpush.bf16.msra.mxu0 0
        %2725 = vmatpush.bf16.msra.mxu0 0
        %2726 = vmatpush.bf16.msra.mxu0 0
        %2727 = vmatpush.bf16.msra.mxu0 0
        %2728 = vmatpush.bf16.msra.mxu0 0
        %2729 = vmatpush.bf16.msra.mxu0 0
        %2730 = vmatpush.bf16.msra.mxu0 0
        %2731 = vmatpush.bf16.msra.mxu0 %v2722
        %2732 = vmatmul.bf16.gmra.mxu0 %v2719
        %v2733 = vpop.f32.mrf.mxu0
        %v2734 = vadd.f32 0.0, %v2733
        %v2735 = vpop.f32.mrf.mxu0
        %2736 = vdwg.mxu0
        %2737 = vrot.lane.b32.xlu0 %v2141, 48
        %v2738 = vpop.permute.xlu0 %2737
        %v2740 = vsel %vm649, %v2693, 0
        %v2743 = vsel %vm794, %v2738, 0
        %2745 = vmatpush.bf16.msra.mxu0 0
        %2746 = vmatpush.bf16.msra.mxu0 0
        %2747 = vmatpush.bf16.msra.mxu0 0
        %2748 = vmatpush.bf16.msra.mxu0 0
        %2749 = vmatpush.bf16.msra.mxu0 0
        %2750 = vmatpush.bf16.msra.mxu0 0
        %2751 = vmatpush.bf16.msra.mxu0 0
        %2752 = vmatpush.bf16.msra.mxu0 %v2743
        %2753 = vmatmul.bf16.gmra.mxu0 %v2740
        %v2754 = vpop.f32.mrf.mxu0
        %v2755 = vadd.f32 0.0, %v2754
        %v2756 = vpop.f32.mrf.mxu0
        %2757 = vdwg.mxu0
        %2758 = vrot.lane.b32.xlu0 %v2165, 48
        %v2759 = vpop.permute.xlu0 %2758
        %v2761 = vsel %vm649, %v2694, 0
        %v2764 = vsel %vm794, %v2759, 0
        %2766 = vmatpush.bf16.msra.mxu0 0
        %2767 = vmatpush.bf16.msra.mxu0 0
        %2768 = vmatpush.bf16.msra.mxu0 0
        %2769 = vmatpush.bf16.msra.mxu0 0
        %2770 = vmatpush.bf16.msra.mxu0 0
        %2771 = vmatpush.bf16.msra.mxu0 0
        %2772 = vmatpush.bf16.msra.mxu0 0
        %2773 = vmatpush.bf16.msra.mxu0 %v2764
        %2774 = vmatmul.bf16.gmra.mxu0 %v2761
        %v2775 = vpop.f32.mrf.mxu0
        %v2776 = vadd.f32 0.0, %v2775
        %v2777 = vpop.f32.mrf.mxu0
        %2778 = vdwg.mxu0
        %2779 = vrot.lane.b32.xlu0 %v2321, 104
        %v2780 = vpop.permute.xlu0 %2779
        %2781 = vrot.lane.b32.xlu0 %v2093, 72
        %v2782 = vpop.permute.xlu0 %2781
        %v2784 = vsel %vm649, %v2780, 0
        %v2787 = vsel %vm649, %v2782, 0
        %2789 = vmatpush.bf16.xpose.msra.mxu0 0
        %2790 = vmatpush.bf16.xpose.msra.mxu0 0
        %2791 = vmatpush.bf16.xpose.msra.mxu0 0
        %2792 = vmatpush.bf16.xpose.msra.mxu0 0
        %2793 = vmatpush.bf16.xpose.msra.mxu0 0
        %2794 = vmatpush.bf16.xpose.msra.mxu0 0
        %2795 = vmatpush.bf16.xpose.msra.mxu0 0
        %2796 = vmatpush.bf16.xpose.msra.mxu0 %v2787
        %2797 = vmatmul.bf16.gmra.mxu0 %v2784
        %v2798 = vpop.f32.mrf.mxu0
        %v2799 = vadd.f32 0.0, %v2798
        %v2800 = vpop.f32.mrf.mxu0
        %2801 = vdwg.mxu0
        %2802 = vrot.lane.b32.xlu0 %v2347, 104
        %v2803 = vpop.permute.xlu0 %2802
        %2804 = vrot.lane.b32.xlu0 %v2117, 72
        %v2805 = vpop.permute.xlu0 %2804
        %v2807 = vsel %vm649, %v2803, 0
        %v2810 = vsel %vm649, %v2805, 0
        %2812 = vmatpush.bf16.xpose.msra.mxu0 0
        %2813 = vmatpush.bf16.xpose.msra.mxu0 0
        %2814 = vmatpush.bf16.xpose.msra.mxu0 0
        %2815 = vmatpush.bf16.xpose.msra.mxu0 0
        %2816 = vmatpush.bf16.xpose.msra.mxu0 0
        %2817 = vmatpush.bf16.xpose.msra.mxu0 0
        %2818 = vmatpush.bf16.xpose.msra.mxu0 0
        %2819 = vmatpush.bf16.xpose.msra.mxu0 %v2810
        %2820 = vmatmul.bf16.gmra.mxu0 %v2807
        %v2821 = vpop.f32.mrf.mxu0
        %v2822 = vadd.f32 0.0, %v2821
        %v2823 = vpop.f32.mrf.mxu0
        %2824 = vdwg.mxu0
        %2825 = vrot.lane.b32.xlu0 %v2373, 104
        %v2826 = vpop.permute.xlu0 %2825
        %2827 = vrot.lane.b32.xlu0 %v2141, 72
        %v2828 = vpop.permute.xlu0 %2827
        %v2830 = vsel %vm649, %v2826, 0
        %v2833 = vsel %vm649, %v2828, 0
        %2835 = vmatpush.bf16.xpose.msra.mxu0 0
        %2836 = vmatpush.bf16.xpose.msra.mxu0 0
        %2837 = vmatpush.bf16.xpose.msra.mxu0 0
        %2838 = vmatpush.bf16.xpose.msra.mxu0 0
        %2839 = vmatpush.bf16.xpose.msra.mxu0 0
        %2840 = vmatpush.bf16.xpose.msra.mxu0 0
        %2841 = vmatpush.bf16.xpose.msra.mxu0 0
        %2842 = vmatpush.bf16.xpose.msra.mxu0 %v2833
        %2843 = vmatmul.bf16.gmra.mxu0 %v2830
        %v2844 = vpop.f32.mrf.mxu0
        %v2845 = vadd.f32 0.0, %v2844
        %v2846 = vpop.f32.mrf.mxu0
        %2847 = vdwg.mxu0
        %2848 = vrot.lane.b32.xlu0 %v2399, 104
        %v2849 = vpop.permute.xlu0 %2848
        %2850 = vrot.lane.b32.xlu0 %v2165, 72
        %v2851 = vpop.permute.xlu0 %2850
        %v2853 = vsel %vm649, %v2849, 0
        %v2856 = vsel %vm649, %v2851, 0
        %2858 = vmatpush.bf16.xpose.msra.mxu0 0
        %2859 = vmatpush.bf16.xpose.msra.mxu0 0
        %2860 = vmatpush.bf16.xpose.msra.mxu0 0
        %2861 = vmatpush.bf16.xpose.msra.mxu0 0
        %2862 = vmatpush.bf16.xpose.msra.mxu0 0
        %2863 = vmatpush.bf16.xpose.msra.mxu0 0
        %2864 = vmatpush.bf16.xpose.msra.mxu0 0
        %2865 = vmatpush.bf16.xpose.msra.mxu0 %v2856
        %2866 = vmatmul.bf16.gmra.mxu0 %v2853
        %v2867 = vpop.f32.mrf.mxu0
        %v2868 = vadd.f32 0.0, %v2867
        %v2869 = vpop.f32.mrf.mxu0
        %2870 = vdwg.mxu0
        %v2871 = vsel %vm649, %v2799, -inf
        %2872 = vmax.xlane.f32.xlu0 %v2871
        %v2873 = vpop.xlane.xlu0 %2872
        %v2874 = vsel %vm649, %v2822, -inf
        %2875 = vmax.xlane.f32.xlu0 %v2874
        %v2876 = vpop.xlane.xlu0 %2875
        %v2877 = vsel %vm649, %v2845, -inf
        %2878 = vmax.xlane.f32.xlu0 %v2877
        %v2879 = vpop.xlane.xlu0 %2878
        %v2880 = vsel %vm649, %v2868, -inf
        %2881 = vmax.xlane.f32.xlu0 %v2880
        %v2882 = vpop.xlane.xlu0 %2881
        %v2883 = vsub.f32 %v2799, %v2873
        %v2884 = vsub.f32 %v2822, %v2876
        %v2885 = vsub.f32 %v2845, %v2879
        %v2886 = vsub.f32 %v2868, %v2882
        %v2887 = vmul.f32 %v2883, 1.442695
        %v2888 = vpow.pop %v2887
        %v2889 = vmul.f32 %v2884, 1.442695
        %v2890 = vpow.pop %v2889
        %v2891 = vmul.f32 %v2885, 1.442695
        %v2892 = vpow.pop %v2891
        %v2893 = vmul.f32 %v2886, 1.442695
        %v2894 = vpow.pop %v2893
        %v2895 = vsel %vm649, %v2888, 0.0
        %2896 = vadd.xlane.f32.xlu0 %v2895
        %v2897 = vpop.xlane.xlu0 %2896
        %v2898 = vsel %vm649, %v2890, 0.0
        %2899 = vadd.xlane.f32.xlu0 %v2898
        %v2900 = vpop.xlane.xlu0 %2899
        %v2901 = vsel %vm649, %v2892, 0.0
        %2902 = vadd.xlane.f32.xlu0 %v2901
        %v2903 = vpop.xlane.xlu0 %2902
        %v2904 = vsel %vm649, %v2894, 0.0
        %2905 = vadd.xlane.f32.xlu0 %v2904
        %v2906 = vpop.xlane.xlu0 %2905
        %v2907 = vrcp.pop %v2897
        %v2908 = vrcp.pop %v2900
        %v2909 = vrcp.pop %v2903
        %v2910 = vrcp.pop %v2906
        %v2911 = vmul.f32 %v2888, %v2907
        %v2912 = vmul.f32 %v2890, %v2908
        %v2913 = vmul.f32 %v2892, %v2909
        %v2914 = vmul.f32 %v2894, %v2910
        %v2915 = vpack.c.bf16 %v2911, %v2911
        %v2916 = vpack.c.bf16 %v2912, %v2912
        %v2917 = vpack.c.bf16 %v2913, %v2913
        %v2918 = vpack.c.bf16 %v2914, %v2914
        %2919 = vrot.lane.b32.xlu0 %v2093, 40
        %v2920 = vpop.permute.xlu0 %2919
        %v2922 = vsel %vm649, %v2915, 0
        %v2925 = vsel %vm794, %v2920, 0
        %2927 = vmatpush.bf16.msra.mxu0 0
        %2928 = vmatpush.bf16.msra.mxu0 0
        %2929 = vmatpush.bf16.msra.mxu0 0
        %2930 = vmatpush.bf16.msra.mxu0 0
        %2931 = vmatpush.bf16.msra.mxu0 0
        %2932 = vmatpush.bf16.msra.mxu0 0
        %2933 = vmatpush.bf16.msra.mxu0 0
        %2934 = vmatpush.bf16.msra.mxu0 %v2925
        %2935 = vmatmul.bf16.gmra.mxu0 %v2922
        %v2936 = vpop.f32.mrf.mxu0
        %v2937 = vadd.f32 0.0, %v2936
        %v2938 = vpop.f32.mrf.mxu0
        %2939 = vdwg.mxu0
        %2940 = vrot.lane.b32.xlu0 %v2117, 40
        %v2941 = vpop.permute.xlu0 %2940
        %v2943 = vsel %vm649, %v2916, 0
        %v2946 = vsel %vm794, %v2941, 0
        %2948 = vmatpush.bf16.msra.mxu0 0
        %2949 = vmatpush.bf16.msra.mxu0 0
        %2950 = vmatpush.bf16.msra.mxu0 0
        %2951 = vmatpush.bf16.msra.mxu0 0
        %2952 = vmatpush.bf16.msra.mxu0 0
        %2953 = vmatpush.bf16.msra.mxu0 0
        %2954 = vmatpush.bf16.msra.mxu0 0
        %2955 = vmatpush.bf16.msra.mxu0 %v2946
        %2956 = vmatmul.bf16.gmra.mxu0 %v2943
        %v2957 = vpop.f32.mrf.mxu0
        %v2958 = vadd.f32 0.0, %v2957
        %v2959 = vpop.f32.mrf.mxu0
        %2960 = vdwg.mxu0
        %2961 = vrot.lane.b32.xlu0 %v2141, 40
        %v2962 = vpop.permute.xlu0 %2961
        %v2964 = vsel %vm649, %v2917, 0
        %v2967 = vsel %vm794, %v2962, 0
        %2969 = vmatpush.bf16.msra.mxu0 0
        %2970 = vmatpush.bf16.msra.mxu0 0
        %2971 = vmatpush.bf16.msra.mxu0 0
        %2972 = vmatpush.bf16.msra.mxu0 0
        %2973 = vmatpush.bf16.msra.mxu0 0
        %2974 = vmatpush.bf16.msra.mxu0 0
        %2975 = vmatpush.bf16.msra.mxu0 0
        %2976 = vmatpush.bf16.msra.mxu0 %v2967
        %2977 = vmatmul.bf16.gmra.mxu0 %v2964
        %v2978 = vpop.f32.mrf.mxu0
        %v2979 = vadd.f32 0.0, %v2978
        %v2980 = vpop.f32.mrf.mxu0
        %2981 = vdwg.mxu0
        %2982 = vrot.lane.b32.xlu0 %v2165, 40
        %v2983 = vpop.permute.xlu0 %2982
        %v2985 = vsel %vm649, %v2918, 0
        %v2988 = vsel %vm794, %v2983, 0
        %2990 = vmatpush.bf16.msra.mxu0 0
        %2991 = vmatpush.bf16.msra.mxu0 0
        %2992 = vmatpush.bf16.msra.mxu0 0
        %2993 = vmatpush.bf16.msra.mxu0 0
        %2994 = vmatpush.bf16.msra.mxu0 0
        %2995 = vmatpush.bf16.msra.mxu0 0
        %2996 = vmatpush.bf16.msra.mxu0 0
        %2997 = vmatpush.bf16.msra.mxu0 %v2988
        %2998 = vmatmul.bf16.gmra.mxu0 %v2985
        %v2999 = vpop.f32.mrf.mxu0
        %v3000 = vadd.f32 0.0, %v2999
        %v3001 = vpop.f32.mrf.mxu0
        %3002 = vdwg.mxu0
        %3007 = vrot.lane.b32.xlu0 %v2489, 8
        %v3008 = vpop.permute.xlu0 %3007
        %3009 = vrot.lane.b32.xlu0 %v2510, 8
        %v3010 = vpop.permute.xlu0 %3009
        %3011 = vrot.lane.b32.xlu0 %v2531, 8
        %v3012 = vpop.permute.xlu0 %3011
        %3013 = vrot.lane.b32.xlu0 %v2552, 8
        %v3014 = vpop.permute.xlu0 %3013
        %3023 = vrot.lane.b32.xlu0 %v2713, 16
        %v3024 = vpop.permute.xlu0 %3023
        %3025 = vrot.lane.b32.xlu0 %v2734, 16
        %v3026 = vpop.permute.xlu0 %3025
        %3027 = vrot.lane.b32.xlu0 %v2755, 16
        %v3028 = vpop.permute.xlu0 %3027
        %3029 = vrot.lane.b32.xlu0 %v2776, 16
        %v3030 = vpop.permute.xlu0 %3029
        %3039 = vrot.lane.b32.xlu0 %v2937, 24
        %v3040 = vpop.permute.xlu0 %3039
        %3041 = vrot.lane.b32.xlu0 %v2958, 24
        %v3042 = vpop.permute.xlu0 %3041
        %3043 = vrot.lane.b32.xlu0 %v2979, 24
        %v3044 = vpop.permute.xlu0 %3043
        %3045 = vrot.lane.b32.xlu0 %v3000, 24
        %v3046 = vpop.permute.xlu0 %3045
        %v3051 = vsel %vm649, %v2253, %v3008
        %v3052 = vsel %vm649, %v2274, %v3010
        %v3053 = vsel %vm649, %v2295, %v3012
        %v3054 = vsel %vm649, %v2316, %v3014
        %v3055 = vsel %vm1610, %v3051, %v3024
        %v3056 = vsel %vm1610, %v3052, %v3026
        %v3057 = vsel %vm1610, %v3053, %v3028
        %v3058 = vsel %vm1610, %v3054, %v3030
        %v3059 = vsel %vm1615, %v3055, %v3040
        %v3060 = vsel %vm1615, %v3056, %v3042
        %v3061 = vsel %vm1615, %v3057, %v3044
        %v3062 = vsel %vm1615, %v3058, %v3046
        %v3063 = vpack.c.bf16 %v3060, %v3059
        %v3064 = vpack.c.bf16 %v3062, %v3061
        %s3065 = scalar_lea.vmem %s3, 16
        %v3066 = vld [vmem:[%s3065] sm:$0xf]
        %v3067 = vld [vmem:[%s3065 + $0x4] sm:$0xf]
        %v3068 = vld [vmem:[%s3065 + $0x8] sm:$0xf]
        %v3069 = vld [vmem:[%s3065 + $0xc] sm:$0xf]
        %s3070 = scalar_lea.vmem [#allocation2], 1
        %v3071 = vld [vmem:[%s3070] sm:$0x1]
        %v3073 = vperm.slane %v3071, 0
        %v3079 = vunpack.c.l.b16 %v3066
        %v3080 = vunpack.c.l.b16 %v3067
        %v3081 = vunpack.c.l.b16 %v3068
        %v3082 = vunpack.c.l.b16 %v3069
        %v3083 = vpack.c.b16 %v3080, %v3079
        %v3084 = vpack.c.b16 %v3082, %v3081
        %v3088 = vsel %vm606, %v3063, 0
        %v3091 = vsel %vm606, %v3064, 0
        %3093 = vmatpush.bf16.msra.mxu0 0
        %3094 = vmatpush.bf16.msra.mxu0 0
        %3095 = vmatpush.bf16.msra.mxu0 0
        %3096 = vmatpush.bf16.msra.mxu0 0
        %3097 = vmatpush.bf16.msra.mxu0 0
        %3098 = vmatpush.bf16.msra.mxu0 0
        %3099 = vmatpush.bf16.msra.mxu0 %v3084
        %3100 = vmatpush.bf16.msra.mxu0 %v3083
        %3101 = vmatmul.bf16.gmra.mxu0 %v3088
        %v3102 = vpop.f32.mrf.mxu0
        %v3103 = vadd.f32 %v3073, %v3102
        %v3104 = vpop.f32.mrf.mxu0
        %v3105 = vadd.f32 %v3073, %v3104
        %3106 = vmatmul.bf16.gmra.mxu0 %v3091
        %v3107 = vpop.f32.mrf.mxu0
        %v3108 = vadd.f32 %v3073, %v3107
        %v3109 = vpop.f32.mrf.mxu0
        %v3110 = vadd.f32 %v3073, %v3109
        %3111 = vdwg.mxu0
        %v3112 = vadd.f32 %v2026, %v3103
        %v3113 = vadd.f32 %v2027, %v3105
        %v3114 = vadd.f32 %v2028, %v3108
        %v3115 = vadd.f32 %v2029, %v3110
        %s3116 = scalar_lea.vmem %s9, 1
        %v3117 = vld [vmem:[%s3116] sm:$0x1]
        %s3118 = scalar_lea.vmem [#allocation8], 1
        %v3119 = vld [vmem:[%s3118] sm:$0x1]
        %v3120 = vsel %vm606, %v3112, 0.0
        %3121 = vadd.xlane.f32.xlu0 %v3120
        %v3122 = vpop.xlane.xlu0 %3121
        %v3123 = vsel %vm606, %v3113, 0.0
        %3124 = vadd.xlane.f32.xlu0 %v3123
        %v3125 = vpop.xlane.xlu0 %3124
        %v3126 = vsel %vm606, %v3114, 0.0
        %3127 = vadd.xlane.f32.xlu0 %v3126
        %v3128 = vpop.xlane.xlu0 %3127
        %v3129 = vsel %vm606, %v3115, 0.0
        %3130 = vadd.xlane.f32.xlu0 %v3129
        %v3131 = vpop.xlane.xlu0 %3130
        %v3132 = vmul.f32 %v3122, %v1691
        %v3133 = vmul.f32 %v3125, %v1691
        %v3134 = vmul.f32 %v3128, %v1691
        %v3135 = vmul.f32 %v3131, %v1691
        %v3136 = vsub.f32 %v3112, %v3132
        %v3137 = vsub.f32 %v3113, %v3133
        %v3138 = vsub.f32 %v3114, %v3134
        %v3139 = vsub.f32 %v3115, %v3135
        %v3140 = vmul.f32 %v3136, %v3136
        %v3141 = vmul.f32 %v3137, %v3137
        %v3142 = vmul.f32 %v3138, %v3138
        %v3143 = vmul.f32 %v3139, %v3139
        %v3144 = vsel %vm606, %v3140, 0.0
        %3145 = vadd.xlane.f32.xlu0 %v3144
        %v3146 = vpop.xlane.xlu0 %3145
        %v3147 = vsel %vm606, %v3141, 0.0
        %3148 = vadd.xlane.f32.xlu0 %v3147
        %v3149 = vpop.xlane.xlu0 %3148
        %v3150 = vsel %vm606, %v3142, 0.0
        %3151 = vadd.xlane.f32.xlu0 %v3150
        %v3152 = vpop.xlane.xlu0 %3151
        %v3153 = vsel %vm606, %v3143, 0.0
        %3154 = vadd.xlane.f32.xlu0 %v3153
        %v3155 = vpop.xlane.xlu0 %3154
        %v3156 = vmul.f32 %v3146, %v1691
        %v3157 = vmul.f32 %v3149, %v1691
        %v3158 = vmul.f32 %v3152, %v1691
        %v3159 = vmul.f32 %v3155, %v1691
        %v3160 = vadd.f32 %v3156, 1e-05
        %v3161 = vadd.f32 %v3157, 1e-05
        %v3162 = vadd.f32 %v3158, 1e-05
        %v3163 = vadd.f32 %v3159, 1e-05
        %v3164 = vrsqrt.pop %v3160
        %v3165 = vmul.f32 %v3164, %v3160
        %v3166 = vmul.f32 %v3165, %v3164
        %v3167 = vmul.f32 0.5, %v3166
        %v3168 = vsub.f32 1.5, %v3167
        %v3169 = vmul.f32 %v3164, %v3168
        %vm3170 = vweird.f32 %v3160
        %vm3171 = vweird.f32 %v3164
        %vm3172 = vmor %vm3170, %vm3171
        %v3173 = vsel %vm3172, %v3164, %v3169
        %v3174 = vrsqrt.pop %v3161
        %v3175 = vmul.f32 %v3174, %v3161
        %v3176 = vmul.f32 %v3175, %v3174
        %v3177 = vmul.f32 0.5, %v3176
        %v3178 = vsub.f32 1.5, %v3177
        %v3179 = vmul.f32 %v3174, %v3178
        %vm3180 = vweird.f32 %v3161
        %vm3181 = vweird.f32 %v3174
        %vm3182 = vmor %vm3180, %vm3181
        %v3183 = vsel %vm3182, %v3174, %v3179
        %v3184 = vrsqrt.pop %v3162
        %v3185 = vmul.f32 %v3184, %v3162
        %v3186 = vmul.f32 %v3185, %v3184
        %v3187 = vmul.f32 0.5, %v3186
        %v3188 = vsub.f32 1.5, %v3187
        %v3189 = vmul.f32 %v3184, %v3188
        %vm3190 = vweird.f32 %v3162
        %vm3191 = vweird.f32 %v3184
        %vm3192 = vmor %vm3190, %vm3191
        %v3193 = vsel %vm3192, %v3184, %v3189
        %v3194 = vrsqrt.pop %v3163
        %v3195 = vmul.f32 %v3194, %v3163
        %v3196 = vmul.f32 %v3195, %v3194
        %v3197 = vmul.f32 0.5, %v3196
        %v3198 = vsub.f32 1.5, %v3197
        %v3199 = vmul.f32 %v3194, %v3198
        %vm3200 = vweird.f32 %v3163
        %vm3201 = vweird.f32 %v3194
        %vm3202 = vmor %vm3200, %vm3201
        %v3203 = vsel %vm3202, %v3194, %v3199
        %v3204 = vmul.f32 %v3136, %v3173
        %v3205 = vmul.f32 %v3137, %v3183
        %v3206 = vmul.f32 %v3138, %v3193
        %v3207 = vmul.f32 %v3139, %v3203
        %v3209 = vperm.slane %v3117, 0
        %v3211 = vmul.f32 %v3204, %v3209
        %v3212 = vmul.f32 %v3205, %v3209
        %v3213 = vmul.f32 %v3206, %v3209
        %v3214 = vmul.f32 %v3207, %v3209
        %v3216 = vperm.slane %v3119, 0
        %v3218 = vadd.f32 %v3211, %v3216
        %v3219 = vadd.f32 %v3212, %v3216
        %v3220 = vadd.f32 %v3213, %v3216
        %v3221 = vadd.f32 %v3214, %v3216
        %v3222 = vpack.c.bf16 %v3219, %v3218
        %v3223 = vpack.c.bf16 %v3221, %v3220
        %s3224 = scalar_lea.vmem %s5, 16
        %v3225 = vld [vmem:[%s3224] sm:$0xf]
        %v3226 = vld [vmem:[%s3224 + $0x4] sm:$0xf]
        %v3227 = vld [vmem:[%s3224 + $0x8] sm:$0xf]
        %v3228 = vld [vmem:[%s3224 + $0xc] sm:$0xf]
        %s3229 = scalar_lea.vmem [#allocation5], 1
        %v3230 = vld [vmem:[%s3229] sm:$0x1]
        %v3232 = vperm.slane %v3230, 0
        %v3238 = vunpack.c.l.b16 %v3225
        %v3239 = vunpack.c.l.b16 %v3226
        %v3240 = vunpack.c.l.b16 %v3227
        %v3241 = vunpack.c.l.b16 %v3228
        %v3242 = vpack.c.b16 %v3239, %v3238
        %v3243 = vpack.c.b16 %v3241, %v3240
        %v3247 = vsel %vm606, %v3222, 0
        %v3250 = vsel %vm606, %v3223, 0
        %3252 = vmatpush.bf16.msra.mxu0 0
        %3253 = vmatpush.bf16.msra.mxu0 0
        %3254 = vmatpush.bf16.msra.mxu0 0
        %3255 = vmatpush.bf16.msra.mxu0 0
        %3256 = vmatpush.bf16.msra.mxu0 0
        %3257 = vmatpush.bf16.msra.mxu0 0
        %3258 = vmatpush.bf16.msra.mxu0 %v3243
        %3259 = vmatpush.bf16.msra.mxu0 %v3242
        %3260 = vmatmul.bf16.gmra.mxu0 %v3247
        %v3261 = vpop.f32.mrf.mxu0
        %v3262 = vadd.f32 %v3232, %v3261
        %v3263 = vpop.f32.mrf.mxu0
        %v3264 = vadd.f32 %v3232, %v3263
        %3265 = vmatmul.bf16.gmra.mxu0 %v3250
        %v3266 = vpop.f32.mrf.mxu0
        %v3267 = vadd.f32 %v3232, %v3266
        %v3268 = vpop.f32.mrf.mxu0
        %v3269 = vadd.f32 %v3232, %v3268
        %3270 = vdwg.mxu0
        %v3271 = vmax.f32 %v3262, 0.0
        %v3272 = vmax.f32 %v3264, 0.0
        %v3273 = vmax.f32 %v3267, 0.0
        %v3274 = vmax.f32 %v3269, 0.0
        %v3275 = vpack.c.bf16 %v3272, %v3271
        %v3276 = vpack.c.bf16 %v3274, %v3273
        %s3277 = scalar_lea.vmem %s7, 64
        %v3278 = vld [vmem:[%s3277] sm:$0xf]
        %v3279 = vld [vmem:[%s3277 + $0x4] sm:$0xf]
        %v3280 = vld [vmem:[%s3277 + $0x8] sm:$0xf]
        %v3281 = vld [vmem:[%s3277 + $0xc] sm:$0xf]
        %v3282 = vld [vmem:[%s3277 + $0x10] sm:$0xf]
        %v3283 = vld [vmem:[%s3277 + $0x14] sm:$0xf]
        %v3284 = vld [vmem:[%s3277 + $0x18] sm:$0xf]
        %v3285 = vld [vmem:[%s3277 + $0x1c] sm:$0xf]
        %v3286 = vld [vmem:[%s3277 + $0x20] sm:$0xf]
        %v3287 = vld [vmem:[%s3277 + $0x24] sm:$0xf]
        %v3288 = vld [vmem:[%s3277 + $0x28] sm:$0xf]
        %v3289 = vld [vmem:[%s3277 + $0x2c] sm:$0xf]
        %v3290 = vld [vmem:[%s3277 + $0x30] sm:$0xf]
        %v3291 = vld [vmem:[%s3277 + $0x34] sm:$0xf]
        %v3292 = vld [vmem:[%s3277 + $0x38] sm:$0xf]
        %v3293 = vld [vmem:[%s3277 + $0x3c] sm:$0xf]
        %s3294 = scalar_lea.vmem [#allocation7], 1
        %v3295 = vld [vmem:[%s3294] sm:$0x1]
        %v3297 = vperm.slane %v3295, 0
        %v3315 = vunpack.c.l.b16 %v3278
        %v3316 = vunpack.c.l.b16 %v3279
        %v3317 = vunpack.c.l.b16 %v3280
        %v3318 = vunpack.c.l.b16 %v3281
        %v3319 = vunpack.c.l.b16 %v3282
        %v3320 = vunpack.c.l.b16 %v3283
        %v3321 = vunpack.c.l.b16 %v3284
        %v3322 = vunpack.c.l.b16 %v3285
        %v3323 = vunpack.c.l.b16 %v3286
        %v3324 = vunpack.c.l.b16 %v3287
        %v3325 = vunpack.c.l.b16 %v3288
        %v3326 = vunpack.c.l.b16 %v3289
        %v3327 = vunpack.c.l.b16 %v3290
        %v3328 = vunpack.c.l.b16 %v3291
        %v3329 = vunpack.c.l.b16 %v3292
        %v3330 = vunpack.c.l.b16 %v3293
        %v3331 = vpack.c.b16 %v3316, %v3315
        %v3332 = vpack.c.b16 %v3318, %v3317
        %v3333 = vpack.c.b16 %v3320, %v3319
        %v3334 = vpack.c.b16 %v3322, %v3321
        %v3335 = vpack.c.b16 %v3324, %v3323
        %v3336 = vpack.c.b16 %v3326, %v3325
        %v3337 = vpack.c.b16 %v3328, %v3327
        %v3338 = vpack.c.b16 %v3330, %v3329
        %3347 = vmatpush.bf16.msra.mxu0 %v3338
        %3348 = vmatpush.bf16.msra.mxu0 %v3337
        %3349 = vmatpush.bf16.msra.mxu0 %v3336
        %3350 = vmatpush.bf16.msra.mxu0 %v3335
        %3351 = vmatpush.bf16.msra.mxu0 %v3334
        %3352 = vmatpush.bf16.msra.mxu0 %v3333
        %3353 = vmatpush.bf16.msra.mxu0 %v3332
        %3354 = vmatpush.bf16.msra.mxu0 %v3331
        %3355 = vmatmul.bf16.gmra.mxu0 %v3275
        %v3356 = vpop.f32.mrf.mxu0
        %v3357 = vadd.f32 %v3297, %v3356
        %v3358 = vpop.f32.mrf.mxu0
        %v3359 = vadd.f32 %v3297, %v3358
        %3360 = vmatmul.bf16.gmra.mxu0 %v3276
        %v3361 = vpop.f32.mrf.mxu0
        %v3362 = vadd.f32 %v3297, %v3361
        %v3363 = vpop.f32.mrf.mxu0
        %v3364 = vadd.f32 %v3297, %v3363
        %3365 = vdwg.mxu0
        %v3366 = vadd.f32 %v3218, %v3357
        %v3367 = vadd.f32 %v3219, %v3359
        %v3368 = vadd.f32 %v3220, %v3362
        %v3369 = vadd.f32 %v3221, %v3364
        %s3370 = scalar_lea.vmem %s11, 1
        %v3371 = vld [vmem:[%s3370] sm:$0x1]
        %s3372 = scalar_lea.vmem [#allocation10], 1
        %v3373 = vld [vmem:[%s3372] sm:$0x1]
        %v3374 = vsel %vm606, %v3366, 0.0
        %3375 = vadd.xlane.f32.xlu0 %v3374
        %v3376 = vpop.xlane.xlu0 %3375
        %v3377 = vsel %vm606, %v3367, 0.0
        %3378 = vadd.xlane.f32.xlu0 %v3377
        %v3379 = vpop.xlane.xlu0 %3378
        %v3380 = vsel %vm606, %v3368, 0.0
        %3381 = vadd.xlane.f32.xlu0 %v3380
        %v3382 = vpop.xlane.xlu0 %3381
        %v3383 = vsel %vm606, %v3369, 0.0
        %3384 = vadd.xlane.f32.xlu0 %v3383
        %v3385 = vpop.xlane.xlu0 %3384
        %v3386 = vmul.f32 %v3376, %v1691
        %v3387 = vmul.f32 %v3379, %v1691
        %v3388 = vmul.f32 %v3382, %v1691
        %v3389 = vmul.f32 %v3385, %v1691
        %v3390 = vsub.f32 %v3366, %v3386
        %v3391 = vsub.f32 %v3367, %v3387
        %v3392 = vsub.f32 %v3368, %v3388
        %v3393 = vsub.f32 %v3369, %v3389
        %v3394 = vmul.f32 %v3390, %v3390
        %v3395 = vmul.f32 %v3391, %v3391
        %v3396 = vmul.f32 %v3392, %v3392
        %v3397 = vmul.f32 %v3393, %v3393
        %v3398 = vsel %vm606, %v3394, 0.0
        %3399 = vadd.xlane.f32.xlu0 %v3398
        %v3400 = vpop.xlane.xlu0 %3399
        %v3401 = vsel %vm606, %v3395, 0.0
        %3402 = vadd.xlane.f32.xlu0 %v3401
        %v3403 = vpop.xlane.xlu0 %3402
        %v3404 = vsel %vm606, %v3396, 0.0
        %3405 = vadd.xlane.f32.xlu0 %v3404
        %v3406 = vpop.xlane.xlu0 %3405
        %v3407 = vsel %vm606, %v3397, 0.0
        %3408 = vadd.xlane.f32.xlu0 %v3407
        %v3409 = vpop.xlane.xlu0 %3408
        %v3410 = vmul.f32 %v3400, %v1691
        %v3411 = vmul.f32 %v3403, %v1691
        %v3412 = vmul.f32 %v3406, %v1691
        %v3413 = vmul.f32 %v3409, %v1691
        %v3414 = vadd.f32 %v3410, 1e-05
        %v3415 = vadd.f32 %v3411, 1e-05
        %v3416 = vadd.f32 %v3412, 1e-05
        %v3417 = vadd.f32 %v3413, 1e-05
        %v3418 = vrsqrt.pop %v3414
        %v3419 = vmul.f32 %v3418, %v3414
        %v3420 = vmul.f32 %v3419, %v3418
        %v3421 = vmul.f32 0.5, %v3420
        %v3422 = vsub.f32 1.5, %v3421
        %v3423 = vmul.f32 %v3418, %v3422
        %vm3424 = vweird.f32 %v3414
        %vm3425 = vweird.f32 %v3418
        %vm3426 = vmor %vm3424, %vm3425
        %v3427 = vsel %vm3426, %v3418, %v3423
        %v3428 = vrsqrt.pop %v3415
        %v3429 = vmul.f32 %v3428, %v3415
        %v3430 = vmul.f32 %v3429, %v3428
        %v3431 = vmul.f32 0.5, %v3430
        %v3432 = vsub.f32 1.5, %v3431
        %v3433 = vmul.f32 %v3428, %v3432
        %vm3434 = vweird.f32 %v3415
        %vm3435 = vweird.f32 %v3428
        %vm3436 = vmor %vm3434, %vm3435
        %v3437 = vsel %vm3436, %v3428, %v3433
        %v3438 = vrsqrt.pop %v3416
        %v3439 = vmul.f32 %v3438, %v3416
        %v3440 = vmul.f32 %v3439, %v3438
        %v3441 = vmul.f32 0.5, %v3440
        %v3442 = vsub.f32 1.5, %v3441
        %v3443 = vmul.f32 %v3438, %v3442
        %vm3444 = vweird.f32 %v3416
        %vm3445 = vweird.f32 %v3438
        %vm3446 = vmor %vm3444, %vm3445
        %v3447 = vsel %vm3446, %v3438, %v3443
        %v3448 = vrsqrt.pop %v3417
        %v3449 = vmul.f32 %v3448, %v3417
        %v3450 = vmul.f32 %v3449, %v3448
        %v3451 = vmul.f32 0.5, %v3450
        %v3452 = vsub.f32 1.5, %v3451
        %v3453 = vmul.f32 %v3448, %v3452
        %vm3454 = vweird.f32 %v3417
        %vm3455 = vweird.f32 %v3448
        %vm3456 = vmor %vm3454, %vm3455
        %v3457 = vsel %vm3456, %v3448, %v3453
        %v3458 = vmul.f32 %v3390, %v3427
        %v3459 = vmul.f32 %v3391, %v3437
        %v3460 = vmul.f32 %v3392, %v3447
        %v3461 = vmul.f32 %v3393, %v3457
        %v3463 = vperm.slane %v3371, 0
        %v3465 = vmul.f32 %v3458, %v3463
        %v3466 = vmul.f32 %v3459, %v3463
        %v3467 = vmul.f32 %v3460, %v3463
        %v3468 = vmul.f32 %v3461, %v3463
        %v3470 = vperm.slane %v3373, 0
        %v3472 = vadd.f32 %v3465, %v3470
        %v3473 = vadd.f32 %v3466, %v3470
        %v3474 = vadd.f32 %v3467, %v3470
        %v3475 = vadd.f32 %v3468, %v3470
        %v3476 = vld [vmem:[%s13] sm:$0x1]
        %v3477 = vld [vmem:[%s14] sm:$0x1]
        %v3478 = vsel %vm606, %v3472, 0.0
        %3479 = vadd.xlane.f32.xlu0 %v3478
        %v3480 = vpop.xlane.xlu0 %3479
        %v3481 = vsel %vm606, %v3473, 0.0
        %3482 = vadd.xlane.f32.xlu0 %v3481
        %v3483 = vpop.xlane.xlu0 %3482
        %v3484 = vsel %vm606, %v3474, 0.0
        %3485 = vadd.xlane.f32.xlu0 %v3484
        %v3486 = vpop.xlane.xlu0 %3485
        %v3487 = vsel %vm606, %v3475, 0.0
        %3488 = vadd.xlane.f32.xlu0 %v3487
        %v3489 = vpop.xlane.xlu0 %3488
        %v3490 = vmul.f32 %v3480, %v1691
        %v3491 = vmul.f32 %v3483, %v1691
        %v3492 = vmul.f32 %v3486, %v1691
        %v3493 = vmul.f32 %v3489, %v1691
        %v3494 = vsub.f32 %v3472, %v3490
        %v3495 = vsub.f32 %v3473, %v3491
        %v3496 = vsub.f32 %v3474, %v3492
        %v3497 = vsub.f32 %v3475, %v3493
        %v3498 = vmul.f32 %v3494, %v3494
        %v3499 = vmul.f32 %v3495, %v3495
        %v3500 = vmul.f32 %v3496, %v3496
        %v3501 = vmul.f32 %v3497, %v3497
        %v3502 = vsel %vm606, %v3498, 0.0
        %3503 = vadd.xlane.f32.xlu0 %v3502
        %v3504 = vpop.xlane.xlu0 %3503
        %v3505 = vsel %vm606, %v3499, 0.0
        %3506 = vadd.xlane.f32.xlu0 %v3505
        %v3507 = vpop.xlane.xlu0 %3506
        %v3508 = vsel %vm606, %v3500, 0.0
        %3509 = vadd.xlane.f32.xlu0 %v3508
        %v3510 = vpop.xlane.xlu0 %3509
        %v3511 = vsel %vm606, %v3501, 0.0
        %3512 = vadd.xlane.f32.xlu0 %v3511
        %v3513 = vpop.xlane.xlu0 %3512
        %v3514 = vmul.f32 %v3504, %v1691
        %v3515 = vmul.f32 %v3507, %v1691
        %v3516 = vmul.f32 %v3510, %v1691
        %v3517 = vmul.f32 %v3513, %v1691
        %v3518 = vadd.f32 %v3514, 1e-05
        %v3519 = vadd.f32 %v3515, 1e-05
        %v3520 = vadd.f32 %v3516, 1e-05
        %v3521 = vadd.f32 %v3517, 1e-05
        %v3522 = vrsqrt.pop %v3518
        %v3523 = vmul.f32 %v3522, %v3518
        %v3524 = vmul.f32 %v3523, %v3522
        %v3525 = vmul.f32 0.5, %v3524
        %v3526 = vsub.f32 1.5, %v3525
        %v3527 = vmul.f32 %v3522, %v3526
        %vm3528 = vweird.f32 %v3518
        %vm3529 = vweird.f32 %v3522
        %vm3530 = vmor %vm3528, %vm3529
        %v3531 = vsel %vm3530, %v3522, %v3527
        %v3532 = vrsqrt.pop %v3519
        %v3533 = vmul.f32 %v3532, %v3519
        %v3534 = vmul.f32 %v3533, %v3532
        %v3535 = vmul.f32 0.5, %v3534
        %v3536 = vsub.f32 1.5, %v3535
        %v3537 = vmul.f32 %v3532, %v3536
        %vm3538 = vweird.f32 %v3519
        %vm3539 = vweird.f32 %v3532
        %vm3540 = vmor %vm3538, %vm3539
        %v3541 = vsel %vm3540, %v3532, %v3537
        %v3542 = vrsqrt.pop %v3520
        %v3543 = vmul.f32 %v3542, %v3520
        %v3544 = vmul.f32 %v3543, %v3542
        %v3545 = vmul.f32 0.5, %v3544
        %v3546 = vsub.f32 1.5, %v3545
        %v3547 = vmul.f32 %v3542, %v3546
        %vm3548 = vweird.f32 %v3520
        %vm3549 = vweird.f32 %v3542
        %vm3550 = vmor %vm3548, %vm3549
        %v3551 = vsel %vm3550, %v3542, %v3547
        %v3552 = vrsqrt.pop %v3521
        %v3553 = vmul.f32 %v3552, %v3521
        %v3554 = vmul.f32 %v3553, %v3552
        %v3555 = vmul.f32 0.5, %v3554
        %v3556 = vsub.f32 1.5, %v3555
        %v3557 = vmul.f32 %v3552, %v3556
        %vm3558 = vweird.f32 %v3521
        %vm3559 = vweird.f32 %v3552
        %vm3560 = vmor %vm3558, %vm3559
        %v3561 = vsel %vm3560, %v3552, %v3557
        %v3562 = vmul.f32 %v3494, %v3531
        %v3563 = vmul.f32 %v3495, %v3541
        %v3564 = vmul.f32 %v3496, %v3551
        %v3565 = vmul.f32 %v3497, %v3561
        %v3567 = vperm.slane %v3476, 0
        %v3569 = vmul.f32 %v3562, %v3567
        %v3570 = vmul.f32 %v3563, %v3567
        %v3571 = vmul.f32 %v3564, %v3567
        %v3572 = vmul.f32 %v3565, %v3567
        %v3574 = vperm.slane %v3477, 0
        %v3576 = vadd.f32 %v3569, %v3574
        %v3577 = vadd.f32 %v3570, %v3574
        %v3578 = vadd.f32 %v3571, %v3574
        %v3579 = vadd.f32 %v3572, %v3574
        %3580 = vst.msk [vmem:[%s571] sm:$0xff] %vm606, %v3576
        %3581 = vst.msk [vmem:[%s571 + $0x8] sm:$0xff] %vm606, %v3577
        %3582 = vst.msk [vmem:[%s571 + $0x10] sm:$0xff] %vm606, %v3578
        %3583 = vst.msk [vmem:[%s571 + $0x18] sm:$0xff] %vm606, %v3579
        %s3584 = sand.u32 %s360, 1
        %s3585 = scalar_lea.sflag [#allocation4], %s3584
        %s3586 = sand.u32 %s360, 1
        %s3587 = smul.addr %s3586, 32
        %s3588 = scalar_lea.vmem [#allocation11], %s3587
        // Predicated region
        $region101: #{transformer_layer_forward.1} parent=79 // pred_check
          %p3589 = pneg %p370
        $region102: #{transformer_layer_forward.1} parent=79 // pred_check_branch
          %3591 = sbr.rel (%p3589) target = $region104
        $region103: #{transformer_layer_forward.1} parent=79 // pred_region
          %s3592 = smul.u32 4, %s32
          %3594 = vsyncadd %s3585, 0
          %s3595 = smul.addr %s3592, 8
          %s3596 = scalar_lea.hbm %s15, %s3595
          %s3597 = sshll.u32 %s3588, 4
          %s3598 = int_to_ptr.vmem [resolvable:$true] %s3597
          %s3599 = sshll.u32 %s3596, 4
          %s3600 = int_to_ptr.hbm [resolvable:$true] %s3599
          %3605 = dma.vmem_to_hbm [thread:$0]  %s3598, 512, %s3600, %s3585, 128, 128, 8
        $region104: #{transformer_layer_forward.1} parent=79 // pred_fallthru
          _
      $region80: #{transformer_layer_forward.1} parent=5 // pred_fallthru
        _
      %p3606 = scmp.le.s32.totalorder 2, %s27
      // Predicated region
      $region105: #{transformer_layer_forward.1} parent=5 // pred_check
        %p3607 = pneg %p3606
      $region106: #{transformer_layer_forward.1} parent=5 // pred_check_branch
        %3609 = sbr.rel (%p3607) target = $region108
      $region107: #{transformer_layer_forward.1} parent=5 // pred_region
        %s3610 = ssub.s32 %s27, 2
        // Predicated region
        $region109: #{transformer_layer_forward.1} parent=107 // pred_check
          %p3611 = pneg %p376
        $region110: #{transformer_layer_forward.1} parent=107 // pred_check_branch
          %3613 = sbr.rel (%p3611) target = $region112
        $region111: #{transformer_layer_forward.1} parent=107 // pred_region
          %s3614 = sand.u32 %s361, 1
          %s3615 = scalar_lea.sflag [#allocation4], %s3614
          %s3616 = sand.u32 %s361, 1
          %s3617 = smul.addr %s3616, 32
          %s3618 = scalar_lea.vmem [#allocation11], %s3617
          %3620 = dma.done %s3615, 512
        $region112: #{transformer_layer_forward.1} parent=107 // pred_fallthru
          _
      $region108: #{transformer_layer_forward.1} parent=5 // pred_fallthru
        _
    $region6: #{transformer_layer_forward.1} parent=1 // loop_footer
      %s31 = sadd.s32 1, %s27
    $region7: #{transformer_layer_forward.1} parent=1 // loop_footer_branch
      %26 = sbr.rel target = $region3
    $region8: #{transformer_layer_forward.1} parent=1 // loop_exit
      _
    %3621 = vsyncpa [#allocation3], 1
    %s3622 = scalar_lea.sflag [#allocation3], 1
    %3623 = vsyncpa %s3622, 1
    %3624 = vsyncpa [#allocation6], 1
    %3625 = vsyncpa [#allocation9], 1
    %3626 = vsyncpa [#allocation4], 1
    %s3627 = scalar_lea.sflag [#allocation4], 1
    %3628 = vsyncpa %s3627, 1

</llo_original>
